<compile_context>
chip_gen: v5e
topology: v5e:2x2
jax: 0.10.0
libtpu: 0.0.40
codegen_flags: <defaults>
</compile_context>

<pallas_src>
from functools import partial

import jax
import jax.numpy as jnp
import numpy as np
from jax.experimental import pallas as pl
from jax.experimental.pallas import tpu as pltpu

C_PAD = 128   # channel dims padded to the TPU lane width (lane-dense)
STEM_K = 32   # 3*3*3 = 27 stem patch values, padded to 32 lanes

# indices into the packed weight / bias / depthwise-tap stacks
M_PW0, M_EX1, M_PW1, M_EX2, M_SE1, M_SE2, M_PW2 = range(7)
(B_STEM, B_DW0, B_PW0, B_EX1, B_DW1, B_PW1, B_EX2, B_DW2,
 B_SE1, B_SE2, B_PW2) = range(11)
DW0_OFF, DW1_OFF, DW2_OFF = 0, 9, 18


def _relu(x):
    return jnp.maximum(x, 0.0)


def _hardsigmoid(x):
    return jnp.clip(x / 6.0 + 0.5, 0.0, 1.0)


# ------------------------------ Pallas kernel --------------------------------
# One batch element per grid step.  All activations are (rows, 128) f32 slabs;
# matmul operands are cast to bf16, accumulation is f32.


def _mbv3_kernel(x_ref, wstem_ref, mats_ref, bias_ref, dwt_ref,
                 g0_ref, g1_ref, g2_ref,
                 f0_ref, f1_ref, f2_ref, f3_ref):
    bf16, f32 = jnp.bfloat16, jnp.float32

    def dw_conv(g_ref, act_bf, dwt_off, bias_idx, k):
        # Depthwise conv: per-tap constant 0/1 gather matmul (handles the
        # spatial shift, stride-2 and zero padding exactly -- each output row
        # selects at most one input row, so the gather is exact), followed by
        # an f32 VPU multiply-accumulate with the per-channel tap weight.
        nout = g_ref.shape[1]
        acc = jnp.zeros((nout, C_PAD), f32)
        for t in range(k * k):
            tap = jnp.dot(g_ref[t], act_bf, preferred_element_type=f32)
            acc = acc + tap * dwt_ref[dwt_off + t]          # f32 VPU accum
        return _relu(acc + bias_ref[bias_idx])

    def pw(act, mat_idx, bias_idx):
        # 1x1 conv (+ folded BN bias) as a full-slab bf16 matmul.
        return jnp.dot(act.astype(bf16), mats_ref[mat_idx],
                       preferred_element_type=f32) + bias_ref[bias_idx]

    # stem: 3x3/s2 conv (im2col'd by the wrapper, 32 lanes) + BN + ReLU
    f0 = _relu(jnp.dot(x_ref[0], wstem_ref[...], preferred_element_type=f32)
               + bias_ref[B_STEM])                          # (n1, 128) f32
    f0_ref[0] = f0                                          # stage-0 feature

    # block0: dw3x3/s1 + ReLU -> pw 1x1 -> + residual        stage-1 feature
    h = dw_conv(g0_ref, f0.astype(bf16), DW0_OFF, B_DW0, 3)
    f1 = pw(h, M_PW0, B_PW0) + f0
    f1_ref[0] = f1

    # block1: expand 1x1 + ReLU -> dw3x3/s2 + ReLU -> pw 1x1  stage-2 feature
    e1 = _relu(pw(f1, M_EX1, B_EX1))
    h = dw_conv(g1_ref, e1.astype(bf16), DW1_OFF, B_DW1, 3)
    f2 = pw(h, M_PW1, B_PW1)
    f2_ref[0] = f2

    # block2: expand 1x1 + ReLU -> dw5x5/s2 + ReLU -> SE -> pw  stage-3 feat.
    e2 = _relu(pw(f2, M_EX2, B_EX2))
    h = dw_conv(g2_ref, e2.astype(bf16), DW2_OFF, B_DW2, 5)
    pooled = jnp.mean(h, axis=0, keepdims=True)             # SE squeeze (1,128)
    gate = _hardsigmoid(pw(_relu(pw(pooled, M_SE1, B_SE1)), M_SE2, B_SE2))
    f3 = pw(h * gate, M_PW2, B_PW2)
    f3_ref[0] = f3


# ------------------------------ call wrapper ----------------------------------


def _full_spec(shape):
    nd = len(shape)
    return pl.BlockSpec(shape, lambda i: (0,) * nd)          # resident weights


def _batch_spec(shape):
    nd = len(shape)
    return pl.BlockSpec((1,) + tuple(shape[1:]),
                        lambda i: (i,) + (0,) * (nd - 1))


def _mbv3_pallas(x_pat, wstem, mats, biases, dwt, g0, g1, g2):
    nb = x_pat.shape[0]
    n1, n2, n3 = x_pat.shape[1], g1.shape[1], g2.shape[1]

    def feat(n):
        return jax.ShapeDtypeStruct((nb, n, C_PAD), jnp.float32)

    def fspec(n):
        return pl.BlockSpec((1, n, C_PAD), lambda i: (i, 0, 0))

    # Per-step VMEM (all inputs double-buffered + outputs) is < 1 MiB, far
    # under the scoped limits of v5e/v6e/v7x, so no vmem_limit override.
    return pl.pallas_call(
        _mbv3_kernel,
        out_shape=(feat(n1), feat(n1), feat(n2), feat(n3)),
        grid=(nb,),
        in_specs=[_batch_spec(x_pat.shape)] + [
            _full_spec(a.shape) for a in (wstem, mats, biases, dwt, g0, g1, g2)],
        out_specs=(fspec(n1), fspec(n1), fspec(n2), fspec(n3)),
        compiler_params=pltpu.CompilerParams(
            dimension_semantics=("parallel",)),
    )(x_pat, wstem, mats, biases, dwt, g0, g1, g2)


# ------------------------------- JAX glue --------------------------------------
# Pure layout / parameter-prep ops (no FLOPs) stay in XLA / trace-time numpy.


def _fold_bn(w, bn, eps=1e-5):
    gamma, beta, mean, var = bn
    scale = gamma / jnp.sqrt(var + eps)
    return w * scale, beta - mean * scale


def _pad_vec(v):
    return jnp.pad(v, (0, C_PAD - v.shape[0]))


def _prep_stem(w, bn):
    wf, bf = _fold_bn(w, bn)                    # (3,3,3,16), (16,)
    wm = wf.reshape(-1, wf.shape[-1])           # (27,16): (i,j,cin) row order
    wm = jnp.pad(wm, ((0, STEM_K - wm.shape[0]), (0, C_PAD - wm.shape[1])))
    return wm.astype(jnp.bfloat16), _pad_vec(bf)


def _prep_pw(w, bn):
    wf, bf = _fold_bn(w, bn)                    # (1,1,cin,cout)
    m = wf.reshape(wf.shape[2], wf.shape[3])
    m = jnp.pad(m, ((0, C_PAD - m.shape[0]), (0, C_PAD - m.shape[1])))
    return m.astype(jnp.bfloat16), _pad_vec(bf)


def _prep_dw(w, bn):
    wf, bf = _fold_bn(w, bn)                    # (k,k,c)
    taps = wf.reshape(-1, wf.shape[-1])         # (k*k, c)
    taps = jnp.pad(taps, ((0, 0), (0, C_PAD - taps.shape[-1])))
    return taps.astype(jnp.float32), _pad_vec(bf)   # f32: VPU tap weights


def _prep_fc(w, b):
    m = jnp.pad(w, ((0, C_PAD - w.shape[0]), (0, C_PAD - w.shape[1])))
    return m.astype(jnp.bfloat16), _pad_vec(b)


def _stem_im2col(x_nhwc, h1, w1):
    # 3x3 / stride-2 / pad-1 patches packed (tap-major, cin-minor) into 32
    # lanes.  Pure XLA layout work: no FLOPs, no 128-lane inflation of the
    # 3-channel input.
    nb, _, _, cin = x_nhwc.shape
    xp = jnp.pad(x_nhwc, ((0, 0), (1, 1), (1, 1), (0, 0)))
    cols = [xp[:, i:i + 2 * h1:2, j:j + 2 * w1:2, :]
            for i in range(3) for j in range(3)]
    pat = jnp.concatenate(cols, axis=-1).reshape(nb, h1 * w1, 9 * cin)
    pat = jnp.pad(pat, ((0, 0), (0, 0), (0, STEM_K - 9 * cin)))
    return pat.astype(jnp.bfloat16)


def _dw_gather(hi, wi, ho, wo, k, stride, pad):
    # Constant 0/1 matrices: G[t] @ act_flat gathers tap t of a depthwise
    # conv (spatial shift, stride and zero padding) as one lane-dense matmul.
    # Built at trace time (static shapes) -> folded into the program.
    g = np.zeros((k * k, ho * wo, hi * wi), np.float32)
    for i in range(k):
        for j in range(k):
            for yo in range(ho):
                yi = stride * yo + i - pad
                if yi < 0 or yi >= hi:
                    continue
                for xo in range(wo):
                    xi = stride * xo + j - pad
                    if 0 <= xi < wi:
                        g[i * k + j, yo * wo + xo, yi * wi + xi] = 1.0
    return jnp.asarray(g, jnp.bfloat16)


# ------------------------- parameter initialization --------------------------


def init_bn(key, c):
    k1, k2, k3, k4 = jax.random.split(key, 4)
    gamma = 1.0 + 0.1 * jax.random.normal(k1, (c,), jnp.float32)
    beta = 0.1 * jax.random.normal(k2, (c,), jnp.float32)
    mean = 0.1 * jax.random.normal(k3, (c,), jnp.float32)
    var = 1.0 + 0.1 * jnp.abs(jax.random.normal(k4, (c,), jnp.float32))
    return (gamma, beta, mean, var)


def init_conv(key, kh, kw, cin, cout):
    fan_in = kh * kw * cin
    return jax.random.normal(key, (kh, kw, cin, cout), jnp.float32) * (2.0 / fan_in) ** 0.5


def init_dw(key, kh, kw, c):
    fan_in = kh * kw
    return jax.random.normal(key, (kh, kw, c), jnp.float32) * (2.0 / fan_in) ** 0.5


def init_params(key):
    keys = iter(jax.random.split(key, 64))
    p = {}
    # stem: conv 3x3 s2, 3 -> 16 (stem_size=16, act defaults to ReLU)
    p["stem_w"] = init_conv(next(keys), 3, 3, 3, 16)
    p["stem_bn"] = init_bn(next(keys), 16)
    # stage 1: depthwise-separable block, k3 s1, 16 -> 16, residual
    p["b0"] = {
        "dw_w": init_dw(next(keys), 3, 3, 16), "dw_bn": init_bn(next(keys), 16),
        "pw_w": init_conv(next(keys), 1, 1, 16, 16), "pw_bn": init_bn(next(keys), 16),
    }
    # stage 2: inverted residual, expand 4x, k3 s2, 16 -> 24
    p["b1"] = {
        "exp_w": init_conv(next(keys), 1, 1, 16, 64), "exp_bn": init_bn(next(keys), 64),
        "dw_w": init_dw(next(keys), 3, 3, 64), "dw_bn": init_bn(next(keys), 64),
        "pw_w": init_conv(next(keys), 1, 1, 64, 24), "pw_bn": init_bn(next(keys), 24),
    }
    # stage 3: inverted residual + SE(0.25 of expanded), expand 3x, k5 s2, 24 -> 40
    mid, rd = 72, 18
    p["b2"] = {
        "exp_w": init_conv(next(keys), 1, 1, 24, mid), "exp_bn": init_bn(next(keys), mid),
        "dw_w": init_dw(next(keys), 5, 5, mid), "dw_bn": init_bn(next(keys), mid),
        "se": {
            "w1": init_conv(next(keys), 1, 1, mid, rd).reshape(mid, rd),
            "b1": 0.01 * jax.random.normal(next(keys), (rd,), jnp.float32),
            "w2": init_conv(next(keys), 1, 1, rd, mid).reshape(rd, mid),
            "b2": 0.01 * jax.random.normal(next(keys), (mid,), jnp.float32),
        },
        "pw_w": init_conv(next(keys), 1, 1, mid, 40), "pw_bn": init_bn(next(keys), 40),
    }
    return p


# ------------------------------ model forward --------------------------------


def mobilenetv3_features(x_nchw, params, out_indices=(0, 1, 2, 3)):
    # Semantics of MobileNetV3Features (feature_location='bottleneck'):
    #   x = act1(bn1(conv_stem(x))); append if stage 0 requested; blocks run
    #   sequentially, appending after each requested stage.  act_layer
    #   defaults to ReLU; the SE gate is hard-sigmoid; BN is eval-mode and
    #   folded into the convs.
    # TODO(synk): grad_checkpointing / FeatureHooks ('expansion' location) /
    # drop_rate are training- or hook-only paths; no effect on this forward.
    x = jnp.transpose(x_nchw, (0, 2, 3, 1)).astype(jnp.float32)  # NCHW -> NHWC
    nb, h0, w0, _ = x.shape
    h1, w1 = (h0 - 1) // 2 + 1, (w0 - 1) // 2 + 1    # after stem (s2)
    h2, w2 = (h1 - 1) // 2 + 1, (w1 - 1) // 2 + 1    # after block1 dw (s2)
    h3, w3 = (h2 - 1) // 2 + 1, (w2 - 1) // 2 + 1    # after block2 dw (s2)

    # fold BN, pad channels to 128 lanes, bf16 matmul weights, pack stacks
    wstem, bstem = _prep_stem(params["stem_w"], params["stem_bn"])
    wdw0, bdw0 = _prep_dw(params["b0"]["dw_w"], params["b0"]["dw_bn"])
    wpw0, bpw0 = _prep_pw(params["b0"]["pw_w"], params["b0"]["pw_bn"])
    wex1, bex1 = _prep_pw(params["b1"]["exp_w"], params["b1"]["exp_bn"])
    wdw1, bdw1 = _prep_dw(params["b1"]["dw_w"], params["b1"]["dw_bn"])
    wpw1, bpw1 = _prep_pw(params["b1"]["pw_w"], params["b1"]["pw_bn"])
    wex2, bex2 = _prep_pw(params["b2"]["exp_w"], params["b2"]["exp_bn"])
    wdw2, bdw2 = _prep_dw(params["b2"]["dw_w"], params["b2"]["dw_bn"])
    wse1, bse1 = _prep_fc(params["b2"]["se"]["w1"], params["b2"]["se"]["b1"])
    wse2, bse2 = _prep_fc(params["b2"]["se"]["w2"], params["b2"]["se"]["b2"])
    wpw2, bpw2 = _prep_pw(params["b2"]["pw_w"], params["b2"]["pw_bn"])

    mats = jnp.stack([wpw0, wex1, wpw1, wex2, wse1, wse2, wpw2])   # (7,128,128) bf16
    biases = jnp.stack([bstem, bdw0, bpw0, bex1, bdw1, bpw1, bex2,
                        bdw2, bse1, bse2, bpw2])                   # (11,128) f32
    dwt = jnp.concatenate([wdw0, wdw1, wdw2], axis=0)              # (43,128) f32

    # layout-only prep: stem im2col + constant depthwise gather matrices
    x_pat = _stem_im2col(x, h1, w1)                                # (nb,n1,32) bf16
    g0 = _dw_gather(h1, w1, h1, w1, 3, 1, 1)                       # block0 dw s1
    g1 = _dw_gather(h1, w1, h2, w2, 3, 2, 1)                       # block1 dw s2
    g2 = _dw_gather(h2, w2, h3, w3, 5, 2, 2)                       # block2 dw s2

    f0, f1, f2, f3 = _mbv3_pallas(x_pat, wstem, mats, biases, dwt, g0, g1, g2)

    c0 = params["stem_w"].shape[-1]
    c1 = params["b0"]["pw_w"].shape[-1]
    c2 = params["b1"]["pw_w"].shape[-1]
    c3 = params["b2"]["pw_w"].shape[-1]
    staged = [(f0, h1, w1, c0), (f1, h1, w1, c1), (f2, h2, w2, c2), (f3, h3, w3, c3)]
    feats = []
    for idx in sorted(out_indices):
        f, fh, fw, fc = staged[idx]
        f = f.reshape(nb, fh, fw, C_PAD)[..., :fc]
        feats.append(jnp.transpose(f, (0, 3, 1, 2)))               # NHWC -> NCHW
    return feats


if __name__ == "__main__":
    key = jax.random.PRNGKey(0)
    kp, kx = jax.random.split(key)
    params = init_params(kp)
    x = jax.random.normal(kx, (2, 3, 16, 16), jnp.float32)  # NCHW, like PyTorch

    fwd = jax.jit(partial(mobilenetv3_features, out_indices=(0, 1, 2, 3)))
    feats = jax.block_until_ready(fwd(x, params))

    expected = [(2, 16, 8, 8), (2, 16, 8, 8), (2, 24, 4, 4), (2, 40, 2, 2)]
    assert [tuple(f.shape) for f in feats] == expected, [f.shape for f in feats]
    assert all(bool(jnp.all(jnp.isfinite(f))) for f in feats)
    print("KERNEL_OK")
</pallas_src>

<mosaic_0001>
module attributes {stable_mosaic.version = 11 : i64} {
  func.func @_mbv3_kernel(%arg0: i32, %arg1: memref<1x64x32xbf16, #tpu.memory_space<vmem>>, %arg2: memref<32x128xbf16, #tpu.memory_space<vmem>>, %arg3: memref<7x128x128xbf16, #tpu.memory_space<vmem>>, %arg4: memref<11x128xf32, #tpu.memory_space<vmem>>, %arg5: memref<43x128xf32, #tpu.memory_space<vmem>>, %arg6: memref<9x64x64xbf16, #tpu.memory_space<vmem>>, %arg7: memref<9x16x64xbf16, #tpu.memory_space<vmem>>, %arg8: memref<25x4x16xbf16, #tpu.memory_space<vmem>>, %arg9: memref<1x64x128xf32, #tpu.memory_space<vmem>>, %arg10: memref<1x64x128xf32, #tpu.memory_space<vmem>>, %arg11: memref<1x16x128xf32, #tpu.memory_space<vmem>>, %arg12: memref<1x4x128xf32, #tpu.memory_space<vmem>>) attributes {dimension_semantics = [#tpu.dimension_semantics<parallel>], iteration_bounds = array<i64: 2>, scalar_prefetch = 0 : i64, scratch_operands = 0 : i64, tpu.core_type = #tpu.core_type<tc>, window_params = [{transform_indices = @transform_0, window_bounds = array<i64: 1, 64, 32>}, {pipeline_mode = #tpu.pipeline_mode<synchronous>, transform_indices = @transform_1, window_bounds = array<i64: 32, 128>}, {pipeline_mode = #tpu.pipeline_mode<synchronous>, transform_indices = @transform_2, window_bounds = array<i64: 7, 128, 128>}, {pipeline_mode = #tpu.pipeline_mode<synchronous>, transform_indices = @transform_3, window_bounds = array<i64: 11, 128>}, {pipeline_mode = #tpu.pipeline_mode<synchronous>, transform_indices = @transform_4, window_bounds = array<i64: 43, 128>}, {pipeline_mode = #tpu.pipeline_mode<synchronous>, transform_indices = @transform_5, window_bounds = array<i64: 9, 64, 64>}, {pipeline_mode = #tpu.pipeline_mode<synchronous>, transform_indices = @transform_6, window_bounds = array<i64: 9, 16, 64>}, {pipeline_mode = #tpu.pipeline_mode<synchronous>, transform_indices = @transform_7, window_bounds = array<i64: 25, 4, 16>}, {transform_indices = @transform_8, window_bounds = array<i64: 1, 64, 128>}, {transform_indices = @transform_9, window_bounds = array<i64: 1, 64, 128>}, {transform_indices = @transform_10, window_bounds = array<i64: 1, 16, 128>}, {transform_indices = @transform_11, window_bounds = array<i64: 1, 4, 128>}]} {
    %c0 = arith.constant 0 : index
    %c0_0 = arith.constant 0 : index
    %c0_1 = arith.constant 0 : index
    %0 = vector.load %arg1[%c0, %c0_0, %c0_1] : memref<1x64x32xbf16, #tpu.memory_space<vmem>>, vector<1x64x32xbf16>
    %1 = vector.shape_cast %0 : vector<1x64x32xbf16> to vector<64x32xbf16>
    %c0_2 = arith.constant 0 : index
    %c0_3 = arith.constant 0 : index
    %2 = vector.load %arg2[%c0_2, %c0_3] : memref<32x128xbf16, #tpu.memory_space<vmem>>, vector<32x128xbf16>
    %cst = arith.constant dense<0.000000e+00> : vector<64x128xf32>
    %3 = tpu.matmul %1, %2, %cst {dimension_numbers = #tpu.dot_dimension_numbers<[1], [0], [0], [1], [0, 0, 1, 1], [], []>} : vector<64x32xbf16>, vector<32x128xbf16>, vector<64x128xf32> -> vector<64x128xf32>
    %c0_4 = arith.constant 0 : index
    %c0_5 = arith.constant 0 : index
    %4 = vector.load %arg4[%c0_4, %c0_5] : memref<11x128xf32, #tpu.memory_space<vmem>>, vector<1x128xf32>
    %5 = vector.shape_cast %4 : vector<1x128xf32> to vector<128xf32>
    %6 = vector.shape_cast %5 : vector<128xf32> to vector<1x128xf32>
    %7 = vector.broadcast %6 : vector<1x128xf32> to vector<64x128xf32>
    %8 = arith.addf %3, %7 : vector<64x128xf32>
    %cst_6 = arith.constant 0.000000e+00 : f32
    %9 = vector.broadcast %cst_6 : f32 to vector<64x128xf32>
    %10 = arith.maximumf %8, %9 : vector<64x128xf32>
    %c0_7 = arith.constant 0 : index
    %c0_8 = arith.constant 0 : index
    %c0_9 = arith.constant 0 : index
    %11 = vector.load %arg9[%c0_7, %c0_8, %c0_9] : memref<1x64x128xf32, #tpu.memory_space<vmem>>, vector<1x64x128xf32>
    %12 = vector.shape_cast %11 : vector<1x64x128xf32> to vector<64x128xf32>
    %13 = vector.shape_cast %10 : vector<64x128xf32> to vector<1x64x128xf32>
    tpu.vector_store %arg9[%c0_7, %c0_8, %c0_9], %13 {strides = array<i32>} : memref<1x64x128xf32, #tpu.memory_space<vmem>>, vector<1x64x128xf32>,
    %14 = arith.truncf %10 : vector<64x128xf32> to vector<64x128xbf16>
    %cst_10 = arith.constant 0.000000e+00 : f32
    %15 = vector.broadcast %cst_10 : f32 to vector<64x128xf32>
    %c0_11 = arith.constant 0 : index
    %c0_12 = arith.constant 0 : index
    %c0_13 = arith.constant 0 : index
    %16 = vector.load %arg6[%c0_11, %c0_12, %c0_13] : memref<9x64x64xbf16, #tpu.memory_space<vmem>>, vector<1x64x64xbf16>
    %17 = vector.shape_cast %16 : vector<1x64x64xbf16> to vector<64x64xbf16>
    %cst_14 = arith.constant dense<0.000000e+00> : vector<64x128xf32>
    %18 = tpu.matmul %17, %14, %cst_14 {dimension_numbers = #tpu.dot_dimension_numbers<[1], [0], [0], [1], [0, 0, 1, 1], [], []>} : vector<64x64xbf16>, vector<64x128xbf16>, vector<64x128xf32> -> vector<64x128xf32>
    %c0_15 = arith.constant 0 : index
    %c0_16 = arith.constant 0 : index
    %19 = vector.load %arg5[%c0_15, %c0_16] : memref<43x128xf32, #tpu.memory_space<vmem>>, vector<1x128xf32>
    %20 = vector.shape_cast %19 : vector<1x128xf32> to vector<128xf32>
    %21 = vector.shape_cast %20 : vector<128xf32> to vector<1x128xf32>
    %22 = vector.broadcast %21 : vector<1x128xf32> to vector<64x128xf32>
    %23 = arith.mulf %18, %22 : vector<64x128xf32>
    %24 = arith.addf %15, %23 : vector<64x128xf32>
    %c1 = arith.constant 1 : index
    %c0_17 = arith.constant 0 : index
    %c0_18 = arith.constant 0 : index
    %25 = vector.load %arg6[%c1, %c0_17, %c0_18] : memref<9x64x64xbf16, #tpu.memory_space<vmem>>, vector<1x64x64xbf16>
    %26 = vector.shape_cast %25 : vector<1x64x64xbf16> to vector<64x64xbf16>
    %cst_19 = arith.constant dense<0.000000e+00> : vector<64x128xf32>
    %27 = tpu.matmul %26, %14, %cst_19 {dimension_numbers = #tpu.dot_dimension_numbers<[1], [0], [0], [1], [0, 0, 1, 1], [], []>} : vector<64x64xbf16>, vector<64x128xbf16>, vector<64x128xf32> -> vector<64x128xf32>
    %c1_20 = arith.constant 1 : index
    %c0_21 = arith.constant 0 : index
    %28 = vector.load %arg5[%c1_20, %c0_21] : memref<43x128xf32, #tpu.memory_space<vmem>>, vector<1x128xf32>
    %29 = vector.shape_cast %28 : vector<1x128xf32> to vector<128xf32>
    %30 = vector.shape_cast %29 : vector<128xf32> to vector<1x128xf32>
    %31 = vector.broadcast %30 : vector<1x128xf32> to vector<64x128xf32>
    %32 = arith.mulf %27, %31 : vector<64x128xf32>
    %33 = arith.addf %24, %32 : vector<64x128xf32>
    %c2 = arith.constant 2 : index
    %c0_22 = arith.constant 0 : index
    %c0_23 = arith.constant 0 : index
    %34 = vector.load %arg6[%c2, %c0_22, %c0_23] : memref<9x64x64xbf16, #tpu.memory_space<vmem>>, vector<1x64x64xbf16>
    %35 = vector.shape_cast %34 : vector<1x64x64xbf16> to vector<64x64xbf16>
    %cst_24 = arith.constant dense<0.000000e+00> : vector<64x128xf32>
    %36 = tpu.matmul %35, %14, %cst_24 {dimension_numbers = #tpu.dot_dimension_numbers<[1], [0], [0], [1], [0, 0, 1, 1], [], []>} : vector<64x64xbf16>, vector<64x128xbf16>, vector<64x128xf32> -> vector<64x128xf32>
    %c2_25 = arith.constant 2 : index
    %c0_26 = arith.constant 0 : index
    %37 = vector.load %arg5[%c2_25, %c0_26] : memref<43x128xf32, #tpu.memory_space<vmem>>, vector<1x128xf32>
    %38 = vector.shape_cast %37 : vector<1x128xf32> to vector<128xf32>
    %39 = vector.shape_cast %38 : vector<128xf32> to vector<1x128xf32>
    %40 = vector.broadcast %39 : vector<1x128xf32> to vector<64x128xf32>
    %41 = arith.mulf %36, %40 : vector<64x128xf32>
    %42 = arith.addf %33, %41 : vector<64x128xf32>
    %c3 = arith.constant 3 : index
    %c0_27 = arith.constant 0 : index
    %c0_28 = arith.constant 0 : index
    %43 = vector.load %arg6[%c3, %c0_27, %c0_28] : memref<9x64x64xbf16, #tpu.memory_space<vmem>>, vector<1x64x64xbf16>
    %44 = vector.shape_cast %43 : vector<1x64x64xbf16> to vector<64x64xbf16>
    %cst_29 = arith.constant dense<0.000000e+00> : vector<64x128xf32>
    %45 = tpu.matmul %44, %14, %cst_29 {dimension_numbers = #tpu.dot_dimension_numbers<[1], [0], [0], [1], [0, 0, 1, 1], [], []>} : vector<64x64xbf16>, vector<64x128xbf16>, vector<64x128xf32> -> vector<64x128xf32>
    %c3_30 = arith.constant 3 : index
    %c0_31 = arith.constant 0 : index
    %46 = vector.load %arg5[%c3_30, %c0_31] : memref<43x128xf32, #tpu.memory_space<vmem>>, vector<1x128xf32>
    %47 = vector.shape_cast %46 : vector<1x128xf32> to vector<128xf32>
    %48 = vector.shape_cast %47 : vector<128xf32> to vector<1x128xf32>
    %49 = vector.broadcast %48 : vector<1x128xf32> to vector<64x128xf32>
    %50 = arith.mulf %45, %49 : vector<64x128xf32>
    %51 = arith.addf %42, %50 : vector<64x128xf32>
    %c4 = arith.constant 4 : index
    %c0_32 = arith.constant 0 : index
    %c0_33 = arith.constant 0 : index
    %52 = vector.load %arg6[%c4, %c0_32, %c0_33] : memref<9x64x64xbf16, #tpu.memory_space<vmem>>, vector<1x64x64xbf16>
    %53 = vector.shape_cast %52 : vector<1x64x64xbf16> to vector<64x64xbf16>
    %cst_34 = arith.constant dense<0.000000e+00> : vector<64x128xf32>
    %54 = tpu.matmul %53, %14, %cst_34 {dimension_numbers = #tpu.dot_dimension_numbers<[1], [0], [0], [1], [0, 0, 1, 1], [], []>} : vector<64x64xbf16>, vector<64x128xbf16>, vector<64x128xf32> -> vector<64x128xf32>
    %c4_35 = arith.constant 4 : index
    %c0_36 = arith.constant 0 : index
    %55 = vector.load %arg5[%c4_35, %c0_36] : memref<43x128xf32, #tpu.memory_space<vmem>>, vector<1x128xf32>
    %56 = vector.shape_cast %55 : vector<1x128xf32> to vector<128xf32>
    %57 = vector.shape_cast %56 : vector<128xf32> to vector<1x128xf32>
    %58 = vector.broadcast %57 : vector<1x128xf32> to vector<64x128xf32>
    %59 = arith.mulf %54, %58 : vector<64x128xf32>
    %60 = arith.addf %51, %59 : vector<64x128xf32>
    %c5 = arith.constant 5 : index
    %c0_37 = arith.constant 0 : index
    %c0_38 = arith.constant 0 : index
    %61 = vector.load %arg6[%c5, %c0_37, %c0_38] : memref<9x64x64xbf16, #tpu.memory_space<vmem>>, vector<1x64x64xbf16>
    %62 = vector.shape_cast %61 : vector<1x64x64xbf16> to vector<64x64xbf16>
    %cst_39 = arith.constant dense<0.000000e+00> : vector<64x128xf32>
    %63 = tpu.matmul %62, %14, %cst_39 {dimension_numbers = #tpu.dot_dimension_numbers<[1], [0], [0], [1], [0, 0, 1, 1], [], []>} : vector<64x64xbf16>, vector<64x128xbf16>, vector<64x128xf32> -> vector<64x128xf32>
    %c5_40 = arith.constant 5 : index
    %c0_41 = arith.constant 0 : index
    %64 = vector.load %arg5[%c5_40, %c0_41] : memref<43x128xf32, #tpu.memory_space<vmem>>, vector<1x128xf32>
    %65 = vector.shape_cast %64 : vector<1x128xf32> to vector<128xf32>
    %66 = vector.shape_cast %65 : vector<128xf32> to vector<1x128xf32>
    %67 = vector.broadcast %66 : vector<1x128xf32> to vector<64x128xf32>
    %68 = arith.mulf %63, %67 : vector<64x128xf32>
    %69 = arith.addf %60, %68 : vector<64x128xf32>
    %c6 = arith.constant 6 : index
    %c0_42 = arith.constant 0 : index
    %c0_43 = arith.constant 0 : index
    %70 = vector.load %arg6[%c6, %c0_42, %c0_43] : memref<9x64x64xbf16, #tpu.memory_space<vmem>>, vector<1x64x64xbf16>
    %71 = vector.shape_cast %70 : vector<1x64x64xbf16> to vector<64x64xbf16>
    %cst_44 = arith.constant dense<0.000000e+00> : vector<64x128xf32>
    %72 = tpu.matmul %71, %14, %cst_44 {dimension_numbers = #tpu.dot_dimension_numbers<[1], [0], [0], [1], [0, 0, 1, 1], [], []>} : vector<64x64xbf16>, vector<64x128xbf16>, vector<64x128xf32> -> vector<64x128xf32>
    %c6_45 = arith.constant 6 : index
    %c0_46 = arith.constant 0 : index
    %73 = vector.load %arg5[%c6_45, %c0_46] : memref<43x128xf32, #tpu.memory_space<vmem>>, vector<1x128xf32>
    %74 = vector.shape_cast %73 : vector<1x128xf32> to vector<128xf32>
    %75 = vector.shape_cast %74 : vector<128xf32> to vector<1x128xf32>
    %76 = vector.broadcast %75 : vector<1x128xf32> to vector<64x128xf32>
    %77 = arith.mulf %72, %76 : vector<64x128xf32>
    %78 = arith.addf %69, %77 : vector<64x128xf32>
    %c7 = arith.constant 7 : index
    %c0_47 = arith.constant 0 : index
    %c0_48 = arith.constant 0 : index
    %79 = vector.load %arg6[%c7, %c0_47, %c0_48] : memref<9x64x64xbf16, #tpu.memory_space<vmem>>, vector<1x64x64xbf16>
    %80 = vector.shape_cast %79 : vector<1x64x64xbf16> to vector<64x64xbf16>
    %cst_49 = arith.constant dense<0.000000e+00> : vector<64x128xf32>
    %81 = tpu.matmul %80, %14, %cst_49 {dimension_numbers = #tpu.dot_dimension_numbers<[1], [0], [0], [1], [0, 0, 1, 1], [], []>} : vector<64x64xbf16>, vector<64x128xbf16>, vector<64x128xf32> -> vector<64x128xf32>
    %c7_50 = arith.constant 7 : index
    %c0_51 = arith.constant 0 : index
    %82 = vector.load %arg5[%c7_50, %c0_51] : memref<43x128xf32, #tpu.memory_space<vmem>>, vector<1x128xf32>
    %83 = vector.shape_cast %82 : vector<1x128xf32> to vector<128xf32>
    %84 = vector.shape_cast %83 : vector<128xf32> to vector<1x128xf32>
    %85 = vector.broadcast %84 : vector<1x128xf32> to vector<64x128xf32>
    %86 = arith.mulf %81, %85 : vector<64x128xf32>
    %87 = arith.addf %78, %86 : vector<64x128xf32>
    %c8 = arith.constant 8 : index
    %c0_52 = arith.constant 0 : index
    %c0_53 = arith.constant 0 : index
    %88 = vector.load %arg6[%c8, %c0_52, %c0_53] : memref<9x64x64xbf16, #tpu.memory_space<vmem>>, vector<1x64x64xbf16>
    %89 = vector.shape_cast %88 : vector<1x64x64xbf16> to vector<64x64xbf16>
    %cst_54 = arith.constant dense<0.000000e+00> : vector<64x128xf32>
    %90 = tpu.matmul %89, %14, %cst_54 {dimension_numbers = #tpu.dot_dimension_numbers<[1], [0], [0], [1], [0, 0, 1, 1], [], []>} : vector<64x64xbf16>, vector<64x128xbf16>, vector<64x128xf32> -> vector<64x128xf32>
    %c8_55 = arith.constant 8 : index
    %c0_56 = arith.constant 0 : index
    %91 = vector.load %arg5[%c8_55, %c0_56] : memref<43x128xf32, #tpu.memory_space<vmem>>, vector<1x128xf32>
    %92 = vector.shape_cast %91 : vector<1x128xf32> to vector<128xf32>
    %93 = vector.shape_cast %92 : vector<128xf32> to vector<1x128xf32>
    %94 = vector.broadcast %93 : vector<1x128xf32> to vector<64x128xf32>
    %95 = arith.mulf %90, %94 : vector<64x128xf32>
    %96 = arith.addf %87, %95 : vector<64x128xf32>
    %c1_57 = arith.constant 1 : index
    %c0_58 = arith.constant 0 : index
    %97 = vector.load %arg4[%c1_57, %c0_58] : memref<11x128xf32, #tpu.memory_space<vmem>>, vector<1x128xf32>
    %98 = vector.shape_cast %97 : vector<1x128xf32> to vector<128xf32>
    %99 = vector.shape_cast %98 : vector<128xf32> to vector<1x128xf32>
    %100 = vector.broadcast %99 : vector<1x128xf32> to vector<64x128xf32>
    %101 = arith.addf %96, %100 : vector<64x128xf32>
    %cst_59 = arith.constant 0.000000e+00 : f32
    %102 = vector.broadcast %cst_59 : f32 to vector<64x128xf32>
    %103 = arith.maximumf %101, %102 : vector<64x128xf32>
    %104 = arith.truncf %103 : vector<64x128xf32> to vector<64x128xbf16>
    %c0_60 = arith.constant 0 : index
    %c0_61 = arith.constant 0 : index
    %c0_62 = arith.constant 0 : index
    %105 = vector.load %arg3[%c0_60, %c0_61, %c0_62] : memref<7x128x128xbf16, #tpu.memory_space<vmem>>, vector<1x128x128xbf16>
    %106 = vector.shape_cast %105 : vector<1x128x128xbf16> to vector<128x128xbf16>
    %cst_63 = arith.constant dense<0.000000e+00> : vector<64x128xf32>
    %107 = tpu.matmul %104, %106, %cst_63 {dimension_numbers = #tpu.dot_dimension_numbers<[1], [0], [0], [1], [0, 0, 1, 1], [], []>} : vector<64x128xbf16>, vector<128x128xbf16>, vector<64x128xf32> -> vector<64x128xf32>
    %c2_64 = arith.constant 2 : index
    %c0_65 = arith.constant 0 : index
    %108 = vector.load %arg4[%c2_64, %c0_65] : memref<11x128xf32, #tpu.memory_space<vmem>>, vector<1x128xf32>
    %109 = vector.shape_cast %108 : vector<1x128xf32> to vector<128xf32>
    %110 = vector.shape_cast %109 : vector<128xf32> to vector<1x128xf32>
    %111 = vector.broadcast %110 : vector<1x128xf32> to vector<64x128xf32>
    %112 = arith.addf %107, %111 : vector<64x128xf32>
    %113 = arith.addf %112, %10 : vector<64x128xf32>
    %c0_66 = arith.constant 0 : index
    %c0_67 = arith.constant 0 : index
    %c0_68 = arith.constant 0 : index
    %114 = vector.load %arg10[%c0_66, %c0_67, %c0_68] : memref<1x64x128xf32, #tpu.memory_space<vmem>>, vector<1x64x128xf32>
    %115 = vector.shape_cast %114 : vector<1x64x128xf32> to vector<64x128xf32>
    %116 = vector.shape_cast %113 : vector<64x128xf32> to vector<1x64x128xf32>
    tpu.vector_store %arg10[%c0_66, %c0_67, %c0_68], %116 {strides = array<i32>} : memref<1x64x128xf32, #tpu.memory_space<vmem>>, vector<1x64x128xf32>,
    %117 = arith.truncf %113 : vector<64x128xf32> to vector<64x128xbf16>
    %c1_69 = arith.constant 1 : index
    %c0_70 = arith.constant 0 : index
    %c0_71 = arith.constant 0 : index
    %118 = vector.load %arg3[%c1_69, %c0_70, %c0_71] : memref<7x128x128xbf16, #tpu.memory_space<vmem>>, vector<1x128x128xbf16>
    %119 = vector.shape_cast %118 : vector<1x128x128xbf16> to vector<128x128xbf16>
    %cst_72 = arith.constant dense<0.000000e+00> : vector<64x128xf32>
    %120 = tpu.matmul %117, %119, %cst_72 {dimension_numbers = #tpu.dot_dimension_numbers<[1], [0], [0], [1], [0, 0, 1, 1], [], []>} : vector<64x128xbf16>, vector<128x128xbf16>, vector<64x128xf32> -> vector<64x128xf32>
    %c3_73 = arith.constant 3 : index
    %c0_74 = arith.constant 0 : index
    %121 = vector.load %arg4[%c3_73, %c0_74] : memref<11x128xf32, #tpu.memory_space<vmem>>, vector<1x128xf32>
    %122 = vector.shape_cast %121 : vector<1x128xf32> to vector<128xf32>
    %123 = vector.shape_cast %122 : vector<128xf32> to vector<1x128xf32>
    %124 = vector.broadcast %123 : vector<1x128xf32> to vector<64x128xf32>
    %125 = arith.addf %120, %124 : vector<64x128xf32>
    %cst_75 = arith.constant 0.000000e+00 : f32
    %126 = vector.broadcast %cst_75 : f32 to vector<64x128xf32>
    %127 = arith.maximumf %125, %126 : vector<64x128xf32>
    %128 = arith.truncf %127 : vector<64x128xf32> to vector<64x128xbf16>
    %cst_76 = arith.constant 0.000000e+00 : f32
    %129 = vector.broadcast %cst_76 : f32 to vector<16x128xf32>
    %c0_77 = arith.constant 0 : index
    %c0_78 = arith.constant 0 : index
    %c0_79 = arith.constant 0 : index
    %130 = vector.load %arg7[%c0_77, %c0_78, %c0_79] : memref<9x16x64xbf16, #tpu.memory_space<vmem>>, vector<1x16x64xbf16>
    %131 = vector.shape_cast %130 : vector<1x16x64xbf16> to vector<16x64xbf16>
    %cst_80 = arith.constant dense<0.000000e+00> : vector<16x128xf32>
    %132 = tpu.matmul %131, %128, %cst_80 {dimension_numbers = #tpu.dot_dimension_numbers<[1], [0], [0], [1], [0, 0, 1, 1], [], []>} : vector<16x64xbf16>, vector<64x128xbf16>, vector<16x128xf32> -> vector<16x128xf32>
    %c9 = arith.constant 9 : index
    %c0_81 = arith.constant 0 : index
    %133 = vector.load %arg5[%c9, %c0_81] : memref<43x128xf32, #tpu.memory_space<vmem>>, vector<1x128xf32>
    %134 = vector.shape_cast %133 : vector<1x128xf32> to vector<128xf32>
    %135 = vector.shape_cast %134 : vector<128xf32> to vector<1x128xf32>
    %136 = vector.broadcast %135 : vector<1x128xf32> to vector<16x128xf32>
    %137 = arith.mulf %132, %136 : vector<16x128xf32>
    %138 = arith.addf %129, %137 : vector<16x128xf32>
    %c1_82 = arith.constant 1 : index
    %c0_83 = arith.constant 0 : index
    %c0_84 = arith.constant 0 : index
    %139 = vector.load %arg7[%c1_82, %c0_83, %c0_84] : memref<9x16x64xbf16, #tpu.memory_space<vmem>>, vector<1x16x64xbf16>
    %140 = vector.shape_cast %139 : vector<1x16x64xbf16> to vector<16x64xbf16>
    %cst_85 = arith.constant dense<0.000000e+00> : vector<16x128xf32>
    %141 = tpu.matmul %140, %128, %cst_85 {dimension_numbers = #tpu.dot_dimension_numbers<[1], [0], [0], [1], [0, 0, 1, 1], [], []>} : vector<16x64xbf16>, vector<64x128xbf16>, vector<16x128xf32> -> vector<16x128xf32>
    %c10 = arith.constant 10 : index
    %c0_86 = arith.constant 0 : index
    %142 = vector.load %arg5[%c10, %c0_86] : memref<43x128xf32, #tpu.memory_space<vmem>>, vector<1x128xf32>
    %143 = vector.shape_cast %142 : vector<1x128xf32> to vector<128xf32>
    %144 = vector.shape_cast %143 : vector<128xf32> to vector<1x128xf32>
    %145 = vector.broadcast %144 : vector<1x128xf32> to vector<16x128xf32>
    %146 = arith.mulf %141, %145 : vector<16x128xf32>
    %147 = arith.addf %138, %146 : vector<16x128xf32>
    %c2_87 = arith.constant 2 : index
    %c0_88 = arith.constant 0 : index
    %c0_89 = arith.constant 0 : index
    %148 = vector.load %arg7[%c2_87, %c0_88, %c0_89] : memref<9x16x64xbf16, #tpu.memory_space<vmem>>, vector<1x16x64xbf16>
    %149 = vector.shape_cast %148 : vector<1x16x64xbf16> to vector<16x64xbf16>
    %cst_90 = arith.constant dense<0.000000e+00> : vector<16x128xf32>
    %150 = tpu.matmul %149, %128, %cst_90 {dimension_numbers = #tpu.dot_dimension_numbers<[1], [0], [0], [1], [0, 0, 1, 1], [], []>} : vector<16x64xbf16>, vector<64x128xbf16>, vector<16x128xf32> -> vector<16x128xf32>
    %c11 = arith.constant 11 : index
    %c0_91 = arith.constant 0 : index
    %151 = vector.load %arg5[%c11, %c0_91] : memref<43x128xf32, #tpu.memory_space<vmem>>, vector<1x128xf32>
    %152 = vector.shape_cast %151 : vector<1x128xf32> to vector<128xf32>
    %153 = vector.shape_cast %152 : vector<128xf32> to vector<1x128xf32>
    %154 = vector.broadcast %153 : vector<1x128xf32> to vector<16x128xf32>
    %155 = arith.mulf %150, %154 : vector<16x128xf32>
    %156 = arith.addf %147, %155 : vector<16x128xf32>
    %c3_92 = arith.constant 3 : index
    %c0_93 = arith.constant 0 : index
    %c0_94 = arith.constant 0 : index
    %157 = vector.load %arg7[%c3_92, %c0_93, %c0_94] : memref<9x16x64xbf16, #tpu.memory_space<vmem>>, vector<1x16x64xbf16>
    %158 = vector.shape_cast %157 : vector<1x16x64xbf16> to vector<16x64xbf16>
    %cst_95 = arith.constant dense<0.000000e+00> : vector<16x128xf32>
    %159 = tpu.matmul %158, %128, %cst_95 {dimension_numbers = #tpu.dot_dimension_numbers<[1], [0], [0], [1], [0, 0, 1, 1], [], []>} : vector<16x64xbf16>, vector<64x128xbf16>, vector<16x128xf32> -> vector<16x128xf32>
    %c12 = arith.constant 12 : index
    %c0_96 = arith.constant 0 : index
    %160 = vector.load %arg5[%c12, %c0_96] : memref<43x128xf32, #tpu.memory_space<vmem>>, vector<1x128xf32>
    %161 = vector.shape_cast %160 : vector<1x128xf32> to vector<128xf32>
    %162 = vector.shape_cast %161 : vector<128xf32> to vector<1x128xf32>
    %163 = vector.broadcast %162 : vector<1x128xf32> to vector<16x128xf32>
    %164 = arith.mulf %159, %163 : vector<16x128xf32>
    %165 = arith.addf %156, %164 : vector<16x128xf32>
    %c4_97 = arith.constant 4 : index
    %c0_98 = arith.constant 0 : index
    %c0_99 = arith.constant 0 : index
    %166 = vector.load %arg7[%c4_97, %c0_98, %c0_99] : memref<9x16x64xbf16, #tpu.memory_space<vmem>>, vector<1x16x64xbf16>
    %167 = vector.shape_cast %166 : vector<1x16x64xbf16> to vector<16x64xbf16>
    %cst_100 = arith.constant dense<0.000000e+00> : vector<16x128xf32>
    %168 = tpu.matmul %167, %128, %cst_100 {dimension_numbers = #tpu.dot_dimension_numbers<[1], [0], [0], [1], [0, 0, 1, 1], [], []>} : vector<16x64xbf16>, vector<64x128xbf16>, vector<16x128xf32> -> vector<16x128xf32>
    %c13 = arith.constant 13 : index
    %c0_101 = arith.constant 0 : index
    %169 = vector.load %arg5[%c13, %c0_101] : memref<43x128xf32, #tpu.memory_space<vmem>>, vector<1x128xf32>
    %170 = vector.shape_cast %169 : vector<1x128xf32> to vector<128xf32>
    %171 = vector.shape_cast %170 : vector<128xf32> to vector<1x128xf32>
    %172 = vector.broadcast %171 : vector<1x128xf32> to vector<16x128xf32>
    %173 = arith.mulf %168, %172 : vector<16x128xf32>
    %174 = arith.addf %165, %173 : vector<16x128xf32>
    %c5_102 = arith.constant 5 : index
    %c0_103 = arith.constant 0 : index
    %c0_104 = arith.constant 0 : index
    %175 = vector.load %arg7[%c5_102, %c0_103, %c0_104] : memref<9x16x64xbf16, #tpu.memory_space<vmem>>, vector<1x16x64xbf16>
    %176 = vector.shape_cast %175 : vector<1x16x64xbf16> to vector<16x64xbf16>
    %cst_105 = arith.constant dense<0.000000e+00> : vector<16x128xf32>
    %177 = tpu.matmul %176, %128, %cst_105 {dimension_numbers = #tpu.dot_dimension_numbers<[1], [0], [0], [1], [0, 0, 1, 1], [], []>} : vector<16x64xbf16>, vector<64x128xbf16>, vector<16x128xf32> -> vector<16x128xf32>
    %c14 = arith.constant 14 : index
    %c0_106 = arith.constant 0 : index
    %178 = vector.load %arg5[%c14, %c0_106] : memref<43x128xf32, #tpu.memory_space<vmem>>, vector<1x128xf32>
    %179 = vector.shape_cast %178 : vector<1x128xf32> to vector<128xf32>
    %180 = vector.shape_cast %179 : vector<128xf32> to vector<1x128xf32>
    %181 = vector.broadcast %180 : vector<1x128xf32> to vector<16x128xf32>
    %182 = arith.mulf %177, %181 : vector<16x128xf32>
    %183 = arith.addf %174, %182 : vector<16x128xf32>
    %c6_107 = arith.constant 6 : index
    %c0_108 = arith.constant 0 : index
    %c0_109 = arith.constant 0 : index
    %184 = vector.load %arg7[%c6_107, %c0_108, %c0_109] : memref<9x16x64xbf16, #tpu.memory_space<vmem>>, vector<1x16x64xbf16>
    %185 = vector.shape_cast %184 : vector<1x16x64xbf16> to vector<16x64xbf16>
    %cst_110 = arith.constant dense<0.000000e+00> : vector<16x128xf32>
    %186 = tpu.matmul %185, %128, %cst_110 {dimension_numbers = #tpu.dot_dimension_numbers<[1], [0], [0], [1], [0, 0, 1, 1], [], []>} : vector<16x64xbf16>, vector<64x128xbf16>, vector<16x128xf32> -> vector<16x128xf32>
    %c15 = arith.constant 15 : index
    %c0_111 = arith.constant 0 : index
    %187 = vector.load %arg5[%c15, %c0_111] : memref<43x128xf32, #tpu.memory_space<vmem>>, vector<1x128xf32>
    %188 = vector.shape_cast %187 : vector<1x128xf32> to vector<128xf32>
    %189 = vector.shape_cast %188 : vector<128xf32> to vector<1x128xf32>
    %190 = vector.broadcast %189 : vector<1x128xf32> to vector<16x128xf32>
    %191 = arith.mulf %186, %190 : vector<16x128xf32>
    %192 = arith.addf %183, %191 : vector<16x128xf32>
    %c7_112 = arith.constant 7 : index
    %c0_113 = arith.constant 0 : index
    %c0_114 = arith.constant 0 : index
    %193 = vector.load %arg7[%c7_112, %c0_113, %c0_114] : memref<9x16x64xbf16, #tpu.memory_space<vmem>>, vector<1x16x64xbf16>
    %194 = vector.shape_cast %193 : vector<1x16x64xbf16> to vector<16x64xbf16>
    %cst_115 = arith.constant dense<0.000000e+00> : vector<16x128xf32>
    %195 = tpu.matmul %194, %128, %cst_115 {dimension_numbers = #tpu.dot_dimension_numbers<[1], [0], [0], [1], [0, 0, 1, 1], [], []>} : vector<16x64xbf16>, vector<64x128xbf16>, vector<16x128xf32> -> vector<16x128xf32>
    %c16 = arith.constant 16 : index
    %c0_116 = arith.constant 0 : index
    %196 = vector.load %arg5[%c16, %c0_116] : memref<43x128xf32, #tpu.memory_space<vmem>>, vector<1x128xf32>
    %197 = vector.shape_cast %196 : vector<1x128xf32> to vector<128xf32>
    %198 = vector.shape_cast %197 : vector<128xf32> to vector<1x128xf32>
    %199 = vector.broadcast %198 : vector<1x128xf32> to vector<16x128xf32>
    %200 = arith.mulf %195, %199 : vector<16x128xf32>
    %201 = arith.addf %192, %200 : vector<16x128xf32>
    %c8_117 = arith.constant 8 : index
    %c0_118 = arith.constant 0 : index
    %c0_119 = arith.constant 0 : index
    %202 = vector.load %arg7[%c8_117, %c0_118, %c0_119] : memref<9x16x64xbf16, #tpu.memory_space<vmem>>, vector<1x16x64xbf16>
    %203 = vector.shape_cast %202 : vector<1x16x64xbf16> to vector<16x64xbf16>
    %cst_120 = arith.constant dense<0.000000e+00> : vector<16x128xf32>
    %204 = tpu.matmul %203, %128, %cst_120 {dimension_numbers = #tpu.dot_dimension_numbers<[1], [0], [0], [1], [0, 0, 1, 1], [], []>} : vector<16x64xbf16>, vector<64x128xbf16>, vector<16x128xf32> -> vector<16x128xf32>
    %c17 = arith.constant 17 : index
    %c0_121 = arith.constant 0 : index
    %205 = vector.load %arg5[%c17, %c0_121] : memref<43x128xf32, #tpu.memory_space<vmem>>, vector<1x128xf32>
    %206 = vector.shape_cast %205 : vector<1x128xf32> to vector<128xf32>
    %207 = vector.shape_cast %206 : vector<128xf32> to vector<1x128xf32>
    %208 = vector.broadcast %207 : vector<1x128xf32> to vector<16x128xf32>
    %209 = arith.mulf %204, %208 : vector<16x128xf32>
    %210 = arith.addf %201, %209 : vector<16x128xf32>
    %c4_122 = arith.constant 4 : index
    %c0_123 = arith.constant 0 : index
    %211 = vector.load %arg4[%c4_122, %c0_123] : memref<11x128xf32, #tpu.memory_space<vmem>>, vector<1x128xf32>
    %212 = vector.shape_cast %211 : vector<1x128xf32> to vector<128xf32>
    %213 = vector.shape_cast %212 : vector<128xf32> to vector<1x128xf32>
    %214 = vector.broadcast %213 : vector<1x128xf32> to vector<16x128xf32>
    %215 = arith.addf %210, %214 : vector<16x128xf32>
    %cst_124 = arith.constant 0.000000e+00 : f32
    %216 = vector.broadcast %cst_124 : f32 to vector<16x128xf32>
    %217 = arith.maximumf %215, %216 : vector<16x128xf32>
    %218 = arith.truncf %217 : vector<16x128xf32> to vector<16x128xbf16>
    %c2_125 = arith.constant 2 : index
    %c0_126 = arith.constant 0 : index
    %c0_127 = arith.constant 0 : index
    %219 = vector.load %arg3[%c2_125, %c0_126, %c0_127] : memref<7x128x128xbf16, #tpu.memory_space<vmem>>, vector<1x128x128xbf16>
    %220 = vector.shape_cast %219 : vector<1x128x128xbf16> to vector<128x128xbf16>
    %cst_128 = arith.constant dense<0.000000e+00> : vector<16x128xf32>
    %221 = tpu.matmul %218, %220, %cst_128 {dimension_numbers = #tpu.dot_dimension_numbers<[1], [0], [0], [1], [0, 0, 1, 1], [], []>} : vector<16x128xbf16>, vector<128x128xbf16>, vector<16x128xf32> -> vector<16x128xf32>
    %c5_129 = arith.constant 5 : index
    %c0_130 = arith.constant 0 : index
    %222 = vector.load %arg4[%c5_129, %c0_130] : memref<11x128xf32, #tpu.memory_space<vmem>>, vector<1x128xf32>
    %223 = vector.shape_cast %222 : vector<1x128xf32> to vector<128xf32>
    %224 = vector.shape_cast %223 : vector<128xf32> to vector<1x128xf32>
    %225 = vector.broadcast %224 : vector<1x128xf32> to vector<16x128xf32>
    %226 = arith.addf %221, %225 : vector<16x128xf32>
    %c0_131 = arith.constant 0 : index
    %c0_132 = arith.constant 0 : index
    %c0_133 = arith.constant 0 : index
    %227 = vector.load %arg11[%c0_131, %c0_132, %c0_133] : memref<1x16x128xf32, #tpu.memory_space<vmem>>, vector<1x16x128xf32>
    %228 = vector.shape_cast %227 : vector<1x16x128xf32> to vector<16x128xf32>
    %229 = vector.shape_cast %226 : vector<16x128xf32> to vector<1x16x128xf32>
    tpu.vector_store %arg11[%c0_131, %c0_132, %c0_133], %229 {strides = array<i32>} : memref<1x16x128xf32, #tpu.memory_space<vmem>>, vector<1x16x128xf32>,
    %230 = arith.truncf %226 : vector<16x128xf32> to vector<16x128xbf16>
    %c3_134 = arith.constant 3 : index
    %c0_135 = arith.constant 0 : index
    %c0_136 = arith.constant 0 : index
    %231 = vector.load %arg3[%c3_134, %c0_135, %c0_136] : memref<7x128x128xbf16, #tpu.memory_space<vmem>>, vector<1x128x128xbf16>
    %232 = vector.shape_cast %231 : vector<1x128x128xbf16> to vector<128x128xbf16>
    %cst_137 = arith.constant dense<0.000000e+00> : vector<16x128xf32>
    %233 = tpu.matmul %230, %232, %cst_137 {dimension_numbers = #tpu.dot_dimension_numbers<[1], [0], [0], [1], [0, 0, 1, 1], [], []>} : vector<16x128xbf16>, vector<128x128xbf16>, vector<16x128xf32> -> vector<16x128xf32>
    %c6_138 = arith.constant 6 : index
    %c0_139 = arith.constant 0 : index
    %234 = vector.load %arg4[%c6_138, %c0_139] : memref<11x128xf32, #tpu.memory_space<vmem>>, vector<1x128xf32>
    %235 = vector.shape_cast %234 : vector<1x128xf32> to vector<128xf32>
    %236 = vector.shape_cast %235 : vector<128xf32> to vector<1x128xf32>
    %237 = vector.broadcast %236 : vector<1x128xf32> to vector<16x128xf32>
    %238 = arith.addf %233, %237 : vector<16x128xf32>
    %cst_140 = arith.constant 0.000000e+00 : f32
    %239 = vector.broadcast %cst_140 : f32 to vector<16x128xf32>
    %240 = arith.maximumf %238, %239 : vector<16x128xf32>
    %241 = arith.truncf %240 : vector<16x128xf32> to vector<16x128xbf16>
    %cst_141 = arith.constant 0.000000e+00 : f32
    %242 = vector.broadcast %cst_141 : f32 to vector<4x128xf32>
    %c0_142 = arith.constant 0 : index
    %c0_143 = arith.constant 0 : index
    %c0_144 = arith.constant 0 : index
    %243 = vector.load %arg8[%c0_142, %c0_143, %c0_144] : memref<25x4x16xbf16, #tpu.memory_space<vmem>>, vector<1x4x16xbf16>
    %244 = vector.shape_cast %243 : vector<1x4x16xbf16> to vector<4x16xbf16>
    %cst_145 = arith.constant dense<0.000000e+00> : vector<4x128xf32>
    %245 = tpu.matmul %244, %241, %cst_145 {dimension_numbers = #tpu.dot_dimension_numbers<[1], [0], [0], [1], [0, 0, 1, 1], [], []>} : vector<4x16xbf16>, vector<16x128xbf16>, vector<4x128xf32> -> vector<4x128xf32>
    %c18 = arith.constant 18 : index
    %c0_146 = arith.constant 0 : index
    %246 = vector.load %arg5[%c18, %c0_146] : memref<43x128xf32, #tpu.memory_space<vmem>>, vector<1x128xf32>
    %247 = vector.shape_cast %246 : vector<1x128xf32> to vector<128xf32>
    %248 = vector.shape_cast %247 : vector<128xf32> to vector<1x128xf32>
    %249 = vector.broadcast %248 : vector<1x128xf32> to vector<4x128xf32>
    %250 = arith.mulf %245, %249 : vector<4x128xf32>
    %251 = arith.addf %242, %250 : vector<4x128xf32>
    %c1_147 = arith.constant 1 : index
    %c0_148 = arith.constant 0 : index
    %c0_149 = arith.constant 0 : index
    %252 = vector.load %arg8[%c1_147, %c0_148, %c0_149] : memref<25x4x16xbf16, #tpu.memory_space<vmem>>, vector<1x4x16xbf16>
    %253 = vector.shape_cast %252 : vector<1x4x16xbf16> to vector<4x16xbf16>
    %cst_150 = arith.constant dense<0.000000e+00> : vector<4x128xf32>
    %254 = tpu.matmul %253, %241, %cst_150 {dimension_numbers = #tpu.dot_dimension_numbers<[1], [0], [0], [1], [0, 0, 1, 1], [], []>} : vector<4x16xbf16>, vector<16x128xbf16>, vector<4x128xf32> -> vector<4x128xf32>
    %c19 = arith.constant 19 : index
    %c0_151 = arith.constant 0 : index
    %255 = vector.load %arg5[%c19, %c0_151] : memref<43x128xf32, #tpu.memory_space<vmem>>, vector<1x128xf32>
    %256 = vector.shape_cast %255 : vector<1x128xf32> to vector<128xf32>
    %257 = vector.shape_cast %256 : vector<128xf32> to vector<1x128xf32>
    %258 = vector.broadcast %257 : vector<1x128xf32> to vector<4x128xf32>
    %259 = arith.mulf %254, %258 : vector<4x128xf32>
    %260 = arith.addf %251, %259 : vector<4x128xf32>
    %c2_152 = arith.constant 2 : index
    %c0_153 = arith.constant 0 : index
    %c0_154 = arith.constant 0 : index
    %261 = vector.load %arg8[%c2_152, %c0_153, %c0_154] : memref<25x4x16xbf16, #tpu.memory_space<vmem>>, vector<1x4x16xbf16>
    %262 = vector.shape_cast %261 : vector<1x4x16xbf16> to vector<4x16xbf16>
    %cst_155 = arith.constant dense<0.000000e+00> : vector<4x128xf32>
    %263 = tpu.matmul %262, %241, %cst_155 {dimension_numbers = #tpu.dot_dimension_numbers<[1], [0], [0], [1], [0, 0, 1, 1], [], []>} : vector<4x16xbf16>, vector<16x128xbf16>, vector<4x128xf32> -> vector<4x128xf32>
    %c20 = arith.constant 20 : index
    %c0_156 = arith.constant 0 : index
    %264 = vector.load %arg5[%c20, %c0_156] : memref<43x128xf32, #tpu.memory_space<vmem>>, vector<1x128xf32>
    %265 = vector.shape_cast %264 : vector<1x128xf32> to vector<128xf32>
    %266 = vector.shape_cast %265 : vector<128xf32> to vector<1x128xf32>
    %267 = vector.broadcast %266 : vector<1x128xf32> to vector<4x128xf32>
    %268 = arith.mulf %263, %267 : vector<4x128xf32>
    %269 = arith.addf %260, %268 : vector<4x128xf32>
    %c3_157 = arith.constant 3 : index
    %c0_158 = arith.constant 0 : index
    %c0_159 = arith.constant 0 : index
    %270 = vector.load %arg8[%c3_157, %c0_158, %c0_159] : memref<25x4x16xbf16, #tpu.memory_space<vmem>>, vector<1x4x16xbf16>
    %271 = vector.shape_cast %270 : vector<1x4x16xbf16> to vector<4x16xbf16>
    %cst_160 = arith.constant dense<0.000000e+00> : vector<4x128xf32>
    %272 = tpu.matmul %271, %241, %cst_160 {dimension_numbers = #tpu.dot_dimension_numbers<[1], [0], [0], [1], [0, 0, 1, 1], [], []>} : vector<4x16xbf16>, vector<16x128xbf16>, vector<4x128xf32> -> vector<4x128xf32>
    %c21 = arith.constant 21 : index
    %c0_161 = arith.constant 0 : index
    %273 = vector.load %arg5[%c21, %c0_161] : memref<43x128xf32, #tpu.memory_space<vmem>>, vector<1x128xf32>
    %274 = vector.shape_cast %273 : vector<1x128xf32> to vector<128xf32>
    %275 = vector.shape_cast %274 : vector<128xf32> to vector<1x128xf32>
    %276 = vector.broadcast %275 : vector<1x128xf32> to vector<4x128xf32>
    %277 = arith.mulf %272, %276 : vector<4x128xf32>
    %278 = arith.addf %269, %277 : vector<4x128xf32>
    %c4_162 = arith.constant 4 : index
    %c0_163 = arith.constant 0 : index
    %c0_164 = arith.constant 0 : index
    %279 = vector.load %arg8[%c4_162, %c0_163, %c0_164] : memref<25x4x16xbf16, #tpu.memory_space<vmem>>, vector<1x4x16xbf16>
    %280 = vector.shape_cast %279 : vector<1x4x16xbf16> to vector<4x16xbf16>
    %cst_165 = arith.constant dense<0.000000e+00> : vector<4x128xf32>
    %281 = tpu.matmul %280, %241, %cst_165 {dimension_numbers = #tpu.dot_dimension_numbers<[1], [0], [0], [1], [0, 0, 1, 1], [], []>} : vector<4x16xbf16>, vector<16x128xbf16>, vector<4x128xf32> -> vector<4x128xf32>
    %c22 = arith.constant 22 : index
    %c0_166 = arith.constant 0 : index
    %282 = vector.load %arg5[%c22, %c0_166] : memref<43x128xf32, #tpu.memory_space<vmem>>, vector<1x128xf32>
    %283 = vector.shape_cast %282 : vector<1x128xf32> to vector<128xf32>
    %284 = vector.shape_cast %283 : vector<128xf32> to vector<1x128xf32>
    %285 = vector.broadcast %284 : vector<1x128xf32> to vector<4x128xf32>
    %286 = arith.mulf %281, %285 : vector<4x128xf32>
    %287 = arith.addf %278, %286 : vector<4x128xf32>
    %c5_167 = arith.constant 5 : index
    %c0_168 = arith.constant 0 : index
    %c0_169 = arith.constant 0 : index
    %288 = vector.load %arg8[%c5_167, %c0_168, %c0_169] : memref<25x4x16xbf16, #tpu.memory_space<vmem>>, vector<1x4x16xbf16>
    %289 = vector.shape_cast %288 : vector<1x4x16xbf16> to vector<4x16xbf16>
    %cst_170 = arith.constant dense<0.000000e+00> : vector<4x128xf32>
    %290 = tpu.matmul %289, %241, %cst_170 {dimension_numbers = #tpu.dot_dimension_numbers<[1], [0], [0], [1], [0, 0, 1, 1], [], []>} : vector<4x16xbf16>, vector<16x128xbf16>, vector<4x128xf32> -> vector<4x128xf32>
    %c23 = arith.constant 23 : index
    %c0_171 = arith.constant 0 : index
    %291 = vector.load %arg5[%c23, %c0_171] : memref<43x128xf32, #tpu.memory_space<vmem>>, vector<1x128xf32>
    %292 = vector.shape_cast %291 : vector<1x128xf32> to vector<128xf32>
    %293 = vector.shape_cast %292 : vector<128xf32> to vector<1x128xf32>
    %294 = vector.broadcast %293 : vector<1x128xf32> to vector<4x128xf32>
    %295 = arith.mulf %290, %294 : vector<4x128xf32>
    %296 = arith.addf %287, %295 : vector<4x128xf32>
    %c6_172 = arith.constant 6 : index
    %c0_173 = arith.constant 0 : index
    %c0_174 = arith.constant 0 : index
    %297 = vector.load %arg8[%c6_172, %c0_173, %c0_174] : memref<25x4x16xbf16, #tpu.memory_space<vmem>>, vector<1x4x16xbf16>
    %298 = vector.shape_cast %297 : vector<1x4x16xbf16> to vector<4x16xbf16>
    %cst_175 = arith.constant dense<0.000000e+00> : vector<4x128xf32>
    %299 = tpu.matmul %298, %241, %cst_175 {dimension_numbers = #tpu.dot_dimension_numbers<[1], [0], [0], [1], [0, 0, 1, 1], [], []>} : vector<4x16xbf16>, vector<16x128xbf16>, vector<4x128xf32> -> vector<4x128xf32>
    %c24 = arith.constant 24 : index
    %c0_176 = arith.constant 0 : index
    %300 = vector.load %arg5[%c24, %c0_176] : memref<43x128xf32, #tpu.memory_space<vmem>>, vector<1x128xf32>
    %301 = vector.shape_cast %300 : vector<1x128xf32> to vector<128xf32>
    %302 = vector.shape_cast %301 : vector<128xf32> to vector<1x128xf32>
    %303 = vector.broadcast %302 : vector<1x128xf32> to vector<4x128xf32>
    %304 = arith.mulf %299, %303 : vector<4x128xf32>
    %305 = arith.addf %296, %304 : vector<4x128xf32>
    %c7_177 = arith.constant 7 : index
    %c0_178 = arith.constant 0 : index
    %c0_179 = arith.constant 0 : index
    %306 = vector.load %arg8[%c7_177, %c0_178, %c0_179] : memref<25x4x16xbf16, #tpu.memory_space<vmem>>, vector<1x4x16xbf16>
    %307 = vector.shape_cast %306 : vector<1x4x16xbf16> to vector<4x16xbf16>
    %cst_180 = arith.constant dense<0.000000e+00> : vector<4x128xf32>
    %308 = tpu.matmul %307, %241, %cst_180 {dimension_numbers = #tpu.dot_dimension_numbers<[1], [0], [0], [1], [0, 0, 1, 1], [], []>} : vector<4x16xbf16>, vector<16x128xbf16>, vector<4x128xf32> -> vector<4x128xf32>
    %c25 = arith.constant 25 : index
    %c0_181 = arith.constant 0 : index
    %309 = vector.load %arg5[%c25, %c0_181] : memref<43x128xf32, #tpu.memory_space<vmem>>, vector<1x128xf32>
    %310 = vector.shape_cast %309 : vector<1x128xf32> to vector<128xf32>
    %311 = vector.shape_cast %310 : vector<128xf32> to vector<1x128xf32>
    %312 = vector.broadcast %311 : vector<1x128xf32> to vector<4x128xf32>
    %313 = arith.mulf %308, %312 : vector<4x128xf32>
    %314 = arith.addf %305, %313 : vector<4x128xf32>
    %c8_182 = arith.constant 8 : index
    %c0_183 = arith.constant 0 : index
    %c0_184 = arith.constant 0 : index
    %315 = vector.load %arg8[%c8_182, %c0_183, %c0_184] : memref<25x4x16xbf16, #tpu.memory_space<vmem>>, vector<1x4x16xbf16>
    %316 = vector.shape_cast %315 : vector<1x4x16xbf16> to vector<4x16xbf16>
    %cst_185 = arith.constant dense<0.000000e+00> : vector<4x128xf32>
    %317 = tpu.matmul %316, %241, %cst_185 {dimension_numbers = #tpu.dot_dimension_numbers<[1], [0], [0], [1], [0, 0, 1, 1], [], []>} : vector<4x16xbf16>, vector<16x128xbf16>, vector<4x128xf32> -> vector<4x128xf32>
    %c26 = arith.constant 26 : index
    %c0_186 = arith.constant 0 : index
    %318 = vector.load %arg5[%c26, %c0_186] : memref<43x128xf32, #tpu.memory_space<vmem>>, vector<1x128xf32>
    %319 = vector.shape_cast %318 : vector<1x128xf32> to vector<128xf32>
    %320 = vector.shape_cast %319 : vector<128xf32> to vector<1x128xf32>
    %321 = vector.broadcast %320 : vector<1x128xf32> to vector<4x128xf32>
    %322 = arith.mulf %317, %321 : vector<4x128xf32>
    %323 = arith.addf %314, %322 : vector<4x128xf32>
    %c9_187 = arith.constant 9 : index
    %c0_188 = arith.constant 0 : index
    %c0_189 = arith.constant 0 : index
    %324 = vector.load %arg8[%c9_187, %c0_188, %c0_189] : memref<25x4x16xbf16, #tpu.memory_space<vmem>>, vector<1x4x16xbf16>
    %325 = vector.shape_cast %324 : vector<1x4x16xbf16> to vector<4x16xbf16>
    %cst_190 = arith.constant dense<0.000000e+00> : vector<4x128xf32>
    %326 = tpu.matmul %325, %241, %cst_190 {dimension_numbers = #tpu.dot_dimension_numbers<[1], [0], [0], [1], [0, 0, 1, 1], [], []>} : vector<4x16xbf16>, vector<16x128xbf16>, vector<4x128xf32> -> vector<4x128xf32>
    %c27 = arith.constant 27 : index
    %c0_191 = arith.constant 0 : index
    %327 = vector.load %arg5[%c27, %c0_191] : memref<43x128xf32, #tpu.memory_space<vmem>>, vector<1x128xf32>
    %328 = vector.shape_cast %327 : vector<1x128xf32> to vector<128xf32>
    %329 = vector.shape_cast %328 : vector<128xf32> to vector<1x128xf32>
    %330 = vector.broadcast %329 : vector<1x128xf32> to vector<4x128xf32>
    %331 = arith.mulf %326, %330 : vector<4x128xf32>
    %332 = arith.addf %323, %331 : vector<4x128xf32>
    %c10_192 = arith.constant 10 : index
    %c0_193 = arith.constant 0 : index
    %c0_194 = arith.constant 0 : index
    %333 = vector.load %arg8[%c10_192, %c0_193, %c0_194] : memref<25x4x16xbf16, #tpu.memory_space<vmem>>, vector<1x4x16xbf16>
    %334 = vector.shape_cast %333 : vector<1x4x16xbf16> to vector<4x16xbf16>
    %cst_195 = arith.constant dense<0.000000e+00> : vector<4x128xf32>
    %335 = tpu.matmul %334, %241, %cst_195 {dimension_numbers = #tpu.dot_dimension_numbers<[1], [0], [0], [1], [0, 0, 1, 1], [], []>} : vector<4x16xbf16>, vector<16x128xbf16>, vector<4x128xf32> -> vector<4x128xf32>
    %c28 = arith.constant 28 : index
    %c0_196 = arith.constant 0 : index
    %336 = vector.load %arg5[%c28, %c0_196] : memref<43x128xf32, #tpu.memory_space<vmem>>, vector<1x128xf32>
    %337 = vector.shape_cast %336 : vector<1x128xf32> to vector<128xf32>
    %338 = vector.shape_cast %337 : vector<128xf32> to vector<1x128xf32>
    %339 = vector.broadcast %338 : vector<1x128xf32> to vector<4x128xf32>
    %340 = arith.mulf %335, %339 : vector<4x128xf32>
    %341 = arith.addf %332, %340 : vector<4x128xf32>
    %c11_197 = arith.constant 11 : index
    %c0_198 = arith.constant 0 : index
    %c0_199 = arith.constant 0 : index
    %342 = vector.load %arg8[%c11_197, %c0_198, %c0_199] : memref<25x4x16xbf16, #tpu.memory_space<vmem>>, vector<1x4x16xbf16>
    %343 = vector.shape_cast %342 : vector<1x4x16xbf16> to vector<4x16xbf16>
    %cst_200 = arith.constant dense<0.000000e+00> : vector<4x128xf32>
    %344 = tpu.matmul %343, %241, %cst_200 {dimension_numbers = #tpu.dot_dimension_numbers<[1], [0], [0], [1], [0, 0, 1, 1], [], []>} : vector<4x16xbf16>, vector<16x128xbf16>, vector<4x128xf32> -> vector<4x128xf32>
    %c29 = arith.constant 29 : index
    %c0_201 = arith.constant 0 : index
    %345 = vector.load %arg5[%c29, %c0_201] : memref<43x128xf32, #tpu.memory_space<vmem>>, vector<1x128xf32>
    %346 = vector.shape_cast %345 : vector<1x128xf32> to vector<128xf32>
    %347 = vector.shape_cast %346 : vector<128xf32> to vector<1x128xf32>
    %348 = vector.broadcast %347 : vector<1x128xf32> to vector<4x128xf32>
    %349 = arith.mulf %344, %348 : vector<4x128xf32>
    %350 = arith.addf %341, %349 : vector<4x128xf32>
    %c12_202 = arith.constant 12 : index
    %c0_203 = arith.constant 0 : index
    %c0_204 = arith.constant 0 : index
    %351 = vector.load %arg8[%c12_202, %c0_203, %c0_204] : memref<25x4x16xbf16, #tpu.memory_space<vmem>>, vector<1x4x16xbf16>
    %352 = vector.shape_cast %351 : vector<1x4x16xbf16> to vector<4x16xbf16>
    %cst_205 = arith.constant dense<0.000000e+00> : vector<4x128xf32>
    %353 = tpu.matmul %352, %241, %cst_205 {dimension_numbers = #tpu.dot_dimension_numbers<[1], [0], [0], [1], [0, 0, 1, 1], [], []>} : vector<4x16xbf16>, vector<16x128xbf16>, vector<4x128xf32> -> vector<4x128xf32>
    %c30 = arith.constant 30 : index
    %c0_206 = arith.constant 0 : index
    %354 = vector.load %arg5[%c30, %c0_206] : memref<43x128xf32, #tpu.memory_space<vmem>>, vector<1x128xf32>
    %355 = vector.shape_cast %354 : vector<1x128xf32> to vector<128xf32>
    %356 = vector.shape_cast %355 : vector<128xf32> to vector<1x128xf32>
    %357 = vector.broadcast %356 : vector<1x128xf32> to vector<4x128xf32>
    %358 = arith.mulf %353, %357 : vector<4x128xf32>
    %359 = arith.addf %350, %358 : vector<4x128xf32>
    %c13_207 = arith.constant 13 : index
    %c0_208 = arith.constant 0 : index
    %c0_209 = arith.constant 0 : index
    %360 = vector.load %arg8[%c13_207, %c0_208, %c0_209] : memref<25x4x16xbf16, #tpu.memory_space<vmem>>, vector<1x4x16xbf16>
    %361 = vector.shape_cast %360 : vector<1x4x16xbf16> to vector<4x16xbf16>
    %cst_210 = arith.constant dense<0.000000e+00> : vector<4x128xf32>
    %362 = tpu.matmul %361, %241, %cst_210 {dimension_numbers = #tpu.dot_dimension_numbers<[1], [0], [0], [1], [0, 0, 1, 1], [], []>} : vector<4x16xbf16>, vector<16x128xbf16>, vector<4x128xf32> -> vector<4x128xf32>
    %c31 = arith.constant 31 : index
    %c0_211 = arith.constant 0 : index
    %363 = vector.load %arg5[%c31, %c0_211] : memref<43x128xf32, #tpu.memory_space<vmem>>, vector<1x128xf32>
    %364 = vector.shape_cast %363 : vector<1x128xf32> to vector<128xf32>
    %365 = vector.shape_cast %364 : vector<128xf32> to vector<1x128xf32>
    %366 = vector.broadcast %365 : vector<1x128xf32> to vector<4x128xf32>
    %367 = arith.mulf %362, %366 : vector<4x128xf32>
    %368 = arith.addf %359, %367 : vector<4x128xf32>
    %c14_212 = arith.constant 14 : index
    %c0_213 = arith.constant 0 : index
    %c0_214 = arith.constant 0 : index
    %369 = vector.load %arg8[%c14_212, %c0_213, %c0_214] : memref<25x4x16xbf16, #tpu.memory_space<vmem>>, vector<1x4x16xbf16>
    %370 = vector.shape_cast %369 : vector<1x4x16xbf16> to vector<4x16xbf16>
    %cst_215 = arith.constant dense<0.000000e+00> : vector<4x128xf32>
    %371 = tpu.matmul %370, %241, %cst_215 {dimension_numbers = #tpu.dot_dimension_numbers<[1], [0], [0], [1], [0, 0, 1, 1], [], []>} : vector<4x16xbf16>, vector<16x128xbf16>, vector<4x128xf32> -> vector<4x128xf32>
    %c32 = arith.constant 32 : index
    %c0_216 = arith.constant 0 : index
    %372 = vector.load %arg5[%c32, %c0_216] : memref<43x128xf32, #tpu.memory_space<vmem>>, vector<1x128xf32>
    %373 = vector.shape_cast %372 : vector<1x128xf32> to vector<128xf32>
    %374 = vector.shape_cast %373 : vector<128xf32> to vector<1x128xf32>
    %375 = vector.broadcast %374 : vector<1x128xf32> to vector<4x128xf32>
    %376 = arith.mulf %371, %375 : vector<4x128xf32>
    %377 = arith.addf %368, %376 : vector<4x128xf32>
    %c15_217 = arith.constant 15 : index
    %c0_218 = arith.constant 0 : index
    %c0_219 = arith.constant 0 : index
    %378 = vector.load %arg8[%c15_217, %c0_218, %c0_219] : memref<25x4x16xbf16, #tpu.memory_space<vmem>>, vector<1x4x16xbf16>
    %379 = vector.shape_cast %378 : vector<1x4x16xbf16> to vector<4x16xbf16>
    %cst_220 = arith.constant dense<0.000000e+00> : vector<4x128xf32>
    %380 = tpu.matmul %379, %241, %cst_220 {dimension_numbers = #tpu.dot_dimension_numbers<[1], [0], [0], [1], [0, 0, 1, 1], [], []>} : vector<4x16xbf16>, vector<16x128xbf16>, vector<4x128xf32> -> vector<4x128xf32>
    %c33 = arith.constant 33 : index
    %c0_221 = arith.constant 0 : index
    %381 = vector.load %arg5[%c33, %c0_221] : memref<43x128xf32, #tpu.memory_space<vmem>>, vector<1x128xf32>
    %382 = vector.shape_cast %381 : vector<1x128xf32> to vector<128xf32>
    %383 = vector.shape_cast %382 : vector<128xf32> to vector<1x128xf32>
    %384 = vector.broadcast %383 : vector<1x128xf32> to vector<4x128xf32>
    %385 = arith.mulf %380, %384 : vector<4x128xf32>
    %386 = arith.addf %377, %385 : vector<4x128xf32>
    %c16_222 = arith.constant 16 : index
    %c0_223 = arith.constant 0 : index
    %c0_224 = arith.constant 0 : index
    %387 = vector.load %arg8[%c16_222, %c0_223, %c0_224] : memref<25x4x16xbf16, #tpu.memory_space<vmem>>, vector<1x4x16xbf16>
    %388 = vector.shape_cast %387 : vector<1x4x16xbf16> to vector<4x16xbf16>
    %cst_225 = arith.constant dense<0.000000e+00> : vector<4x128xf32>
    %389 = tpu.matmul %388, %241, %cst_225 {dimension_numbers = #tpu.dot_dimension_numbers<[1], [0], [0], [1], [0, 0, 1, 1], [], []>} : vector<4x16xbf16>, vector<16x128xbf16>, vector<4x128xf32> -> vector<4x128xf32>
    %c34 = arith.constant 34 : index
    %c0_226 = arith.constant 0 : index
    %390 = vector.load %arg5[%c34, %c0_226] : memref<43x128xf32, #tpu.memory_space<vmem>>, vector<1x128xf32>
    %391 = vector.shape_cast %390 : vector<1x128xf32> to vector<128xf32>
    %392 = vector.shape_cast %391 : vector<128xf32> to vector<1x128xf32>
    %393 = vector.broadcast %392 : vector<1x128xf32> to vector<4x128xf32>
    %394 = arith.mulf %389, %393 : vector<4x128xf32>
    %395 = arith.addf %386, %394 : vector<4x128xf32>
    %c17_227 = arith.constant 17 : index
    %c0_228 = arith.constant 0 : index
    %c0_229 = arith.constant 0 : index
    %396 = vector.load %arg8[%c17_227, %c0_228, %c0_229] : memref<25x4x16xbf16, #tpu.memory_space<vmem>>, vector<1x4x16xbf16>
    %397 = vector.shape_cast %396 : vector<1x4x16xbf16> to vector<4x16xbf16>
    %cst_230 = arith.constant dense<0.000000e+00> : vector<4x128xf32>
    %398 = tpu.matmul %397, %241, %cst_230 {dimension_numbers = #tpu.dot_dimension_numbers<[1], [0], [0], [1], [0, 0, 1, 1], [], []>} : vector<4x16xbf16>, vector<16x128xbf16>, vector<4x128xf32> -> vector<4x128xf32>
    %c35 = arith.constant 35 : index
    %c0_231 = arith.constant 0 : index
    %399 = vector.load %arg5[%c35, %c0_231] : memref<43x128xf32, #tpu.memory_space<vmem>>, vector<1x128xf32>
    %400 = vector.shape_cast %399 : vector<1x128xf32> to vector<128xf32>
    %401 = vector.shape_cast %400 : vector<128xf32> to vector<1x128xf32>
    %402 = vector.broadcast %401 : vector<1x128xf32> to vector<4x128xf32>
    %403 = arith.mulf %398, %402 : vector<4x128xf32>
    %404 = arith.addf %395, %403 : vector<4x128xf32>
    %c18_232 = arith.constant 18 : index
    %c0_233 = arith.constant 0 : index
    %c0_234 = arith.constant 0 : index
    %405 = vector.load %arg8[%c18_232, %c0_233, %c0_234] : memref<25x4x16xbf16, #tpu.memory_space<vmem>>, vector<1x4x16xbf16>
    %406 = vector.shape_cast %405 : vector<1x4x16xbf16> to vector<4x16xbf16>
    %cst_235 = arith.constant dense<0.000000e+00> : vector<4x128xf32>
    %407 = tpu.matmul %406, %241, %cst_235 {dimension_numbers = #tpu.dot_dimension_numbers<[1], [0], [0], [1], [0, 0, 1, 1], [], []>} : vector<4x16xbf16>, vector<16x128xbf16>, vector<4x128xf32> -> vector<4x128xf32>
    %c36 = arith.constant 36 : index
    %c0_236 = arith.constant 0 : index
    %408 = vector.load %arg5[%c36, %c0_236] : memref<43x128xf32, #tpu.memory_space<vmem>>, vector<1x128xf32>
    %409 = vector.shape_cast %408 : vector<1x128xf32> to vector<128xf32>
    %410 = vector.shape_cast %409 : vector<128xf32> to vector<1x128xf32>
    %411 = vector.broadcast %410 : vector<1x128xf32> to vector<4x128xf32>
    %412 = arith.mulf %407, %411 : vector<4x128xf32>
    %413 = arith.addf %404, %412 : vector<4x128xf32>
    %c19_237 = arith.constant 19 : index
    %c0_238 = arith.constant 0 : index
    %c0_239 = arith.constant 0 : index
    %414 = vector.load %arg8[%c19_237, %c0_238, %c0_239] : memref<25x4x16xbf16, #tpu.memory_space<vmem>>, vector<1x4x16xbf16>
    %415 = vector.shape_cast %414 : vector<1x4x16xbf16> to vector<4x16xbf16>
    %cst_240 = arith.constant dense<0.000000e+00> : vector<4x128xf32>
    %416 = tpu.matmul %415, %241, %cst_240 {dimension_numbers = #tpu.dot_dimension_numbers<[1], [0], [0], [1], [0, 0, 1, 1], [], []>} : vector<4x16xbf16>, vector<16x128xbf16>, vector<4x128xf32> -> vector<4x128xf32>
    %c37 = arith.constant 37 : index
    %c0_241 = arith.constant 0 : index
    %417 = vector.load %arg5[%c37, %c0_241] : memref<43x128xf32, #tpu.memory_space<vmem>>, vector<1x128xf32>
    %418 = vector.shape_cast %417 : vector<1x128xf32> to vector<128xf32>
    %419 = vector.shape_cast %418 : vector<128xf32> to vector<1x128xf32>
    %420 = vector.broadcast %419 : vector<1x128xf32> to vector<4x128xf32>
    %421 = arith.mulf %416, %420 : vector<4x128xf32>
    %422 = arith.addf %413, %421 : vector<4x128xf32>
    %c20_242 = arith.constant 20 : index
    %c0_243 = arith.constant 0 : index
    %c0_244 = arith.constant 0 : index
    %423 = vector.load %arg8[%c20_242, %c0_243, %c0_244] : memref<25x4x16xbf16, #tpu.memory_space<vmem>>, vector<1x4x16xbf16>
    %424 = vector.shape_cast %423 : vector<1x4x16xbf16> to vector<4x16xbf16>
    %cst_245 = arith.constant dense<0.000000e+00> : vector<4x128xf32>
    %425 = tpu.matmul %424, %241, %cst_245 {dimension_numbers = #tpu.dot_dimension_numbers<[1], [0], [0], [1], [0, 0, 1, 1], [], []>} : vector<4x16xbf16>, vector<16x128xbf16>, vector<4x128xf32> -> vector<4x128xf32>
    %c38 = arith.constant 38 : index
    %c0_246 = arith.constant 0 : index
    %426 = vector.load %arg5[%c38, %c0_246] : memref<43x128xf32, #tpu.memory_space<vmem>>, vector<1x128xf32>
    %427 = vector.shape_cast %426 : vector<1x128xf32> to vector<128xf32>
    %428 = vector.shape_cast %427 : vector<128xf32> to vector<1x128xf32>
    %429 = vector.broadcast %428 : vector<1x128xf32> to vector<4x128xf32>
    %430 = arith.mulf %425, %429 : vector<4x128xf32>
    %431 = arith.addf %422, %430 : vector<4x128xf32>
    %c21_247 = arith.constant 21 : index
    %c0_248 = arith.constant 0 : index
    %c0_249 = arith.constant 0 : index
    %432 = vector.load %arg8[%c21_247, %c0_248, %c0_249] : memref<25x4x16xbf16, #tpu.memory_space<vmem>>, vector<1x4x16xbf16>
    %433 = vector.shape_cast %432 : vector<1x4x16xbf16> to vector<4x16xbf16>
    %cst_250 = arith.constant dense<0.000000e+00> : vector<4x128xf32>
    %434 = tpu.matmul %433, %241, %cst_250 {dimension_numbers = #tpu.dot_dimension_numbers<[1], [0], [0], [1], [0, 0, 1, 1], [], []>} : vector<4x16xbf16>, vector<16x128xbf16>, vector<4x128xf32> -> vector<4x128xf32>
    %c39 = arith.constant 39 : index
    %c0_251 = arith.constant 0 : index
    %435 = vector.load %arg5[%c39, %c0_251] : memref<43x128xf32, #tpu.memory_space<vmem>>, vector<1x128xf32>
    %436 = vector.shape_cast %435 : vector<1x128xf32> to vector<128xf32>
    %437 = vector.shape_cast %436 : vector<128xf32> to vector<1x128xf32>
    %438 = vector.broadcast %437 : vector<1x128xf32> to vector<4x128xf32>
    %439 = arith.mulf %434, %438 : vector<4x128xf32>
    %440 = arith.addf %431, %439 : vector<4x128xf32>
    %c22_252 = arith.constant 22 : index
    %c0_253 = arith.constant 0 : index
    %c0_254 = arith.constant 0 : index
    %441 = vector.load %arg8[%c22_252, %c0_253, %c0_254] : memref<25x4x16xbf16, #tpu.memory_space<vmem>>, vector<1x4x16xbf16>
    %442 = vector.shape_cast %441 : vector<1x4x16xbf16> to vector<4x16xbf16>
    %cst_255 = arith.constant dense<0.000000e+00> : vector<4x128xf32>
    %443 = tpu.matmul %442, %241, %cst_255 {dimension_numbers = #tpu.dot_dimension_numbers<[1], [0], [0], [1], [0, 0, 1, 1], [], []>} : vector<4x16xbf16>, vector<16x128xbf16>, vector<4x128xf32> -> vector<4x128xf32>
    %c40 = arith.constant 40 : index
    %c0_256 = arith.constant 0 : index
    %444 = vector.load %arg5[%c40, %c0_256] : memref<43x128xf32, #tpu.memory_space<vmem>>, vector<1x128xf32>
    %445 = vector.shape_cast %444 : vector<1x128xf32> to vector<128xf32>
    %446 = vector.shape_cast %445 : vector<128xf32> to vector<1x128xf32>
    %447 = vector.broadcast %446 : vector<1x128xf32> to vector<4x128xf32>
    %448 = arith.mulf %443, %447 : vector<4x128xf32>
    %449 = arith.addf %440, %448 : vector<4x128xf32>
    %c23_257 = arith.constant 23 : index
    %c0_258 = arith.constant 0 : index
    %c0_259 = arith.constant 0 : index
    %450 = vector.load %arg8[%c23_257, %c0_258, %c0_259] : memref<25x4x16xbf16, #tpu.memory_space<vmem>>, vector<1x4x16xbf16>
    %451 = vector.shape_cast %450 : vector<1x4x16xbf16> to vector<4x16xbf16>
    %cst_260 = arith.constant dense<0.000000e+00> : vector<4x128xf32>
    %452 = tpu.matmul %451, %241, %cst_260 {dimension_numbers = #tpu.dot_dimension_numbers<[1], [0], [0], [1], [0, 0, 1, 1], [], []>} : vector<4x16xbf16>, vector<16x128xbf16>, vector<4x128xf32> -> vector<4x128xf32>
    %c41 = arith.constant 41 : index
    %c0_261 = arith.constant 0 : index
    %453 = vector.load %arg5[%c41, %c0_261] : memref<43x128xf32, #tpu.memory_space<vmem>>, vector<1x128xf32>
    %454 = vector.shape_cast %453 : vector<1x128xf32> to vector<128xf32>
    %455 = vector.shape_cast %454 : vector<128xf32> to vector<1x128xf32>
    %456 = vector.broadcast %455 : vector<1x128xf32> to vector<4x128xf32>
    %457 = arith.mulf %452, %456 : vector<4x128xf32>
    %458 = arith.addf %449, %457 : vector<4x128xf32>
    %c24_262 = arith.constant 24 : index
    %c0_263 = arith.constant 0 : index
    %c0_264 = arith.constant 0 : index
    %459 = vector.load %arg8[%c24_262, %c0_263, %c0_264] : memref<25x4x16xbf16, #tpu.memory_space<vmem>>, vector<1x4x16xbf16>
    %460 = vector.shape_cast %459 : vector<1x4x16xbf16> to vector<4x16xbf16>
    %cst_265 = arith.constant dense<0.000000e+00> : vector<4x128xf32>
    %461 = tpu.matmul %460, %241, %cst_265 {dimension_numbers = #tpu.dot_dimension_numbers<[1], [0], [0], [1], [0, 0, 1, 1], [], []>} : vector<4x16xbf16>, vector<16x128xbf16>, vector<4x128xf32> -> vector<4x128xf32>
    %c42 = arith.constant 42 : index
    %c0_266 = arith.constant 0 : index
    %462 = vector.load %arg5[%c42, %c0_266] : memref<43x128xf32, #tpu.memory_space<vmem>>, vector<1x128xf32>
    %463 = vector.shape_cast %462 : vector<1x128xf32> to vector<128xf32>
    %464 = vector.shape_cast %463 : vector<128xf32> to vector<1x128xf32>
    %465 = vector.broadcast %464 : vector<1x128xf32> to vector<4x128xf32>
    %466 = arith.mulf %461, %465 : vector<4x128xf32>
    %467 = arith.addf %458, %466 : vector<4x128xf32>
    %c7_267 = arith.constant 7 : index
    %c0_268 = arith.constant 0 : index
    %468 = vector.load %arg4[%c7_267, %c0_268] : memref<11x128xf32, #tpu.memory_space<vmem>>, vector<1x128xf32>
    %469 = vector.shape_cast %468 : vector<1x128xf32> to vector<128xf32>
    %470 = vector.shape_cast %469 : vector<128xf32> to vector<1x128xf32>
    %471 = vector.broadcast %470 : vector<1x128xf32> to vector<4x128xf32>
    %472 = arith.addf %467, %471 : vector<4x128xf32>
    %cst_269 = arith.constant 0.000000e+00 : f32
    %473 = vector.broadcast %cst_269 : f32 to vector<4x128xf32>
    %474 = arith.maximumf %472, %473 : vector<4x128xf32>
    %cst_270 = arith.constant dense<0.000000e+00> : vector<128xf32>
    %475 = vector.multi_reduction <add>, %474, %cst_270 [0] : vector<4x128xf32> to vector<128xf32>
    %476 = vector.shape_cast %475 : vector<128xf32> to vector<1x128xf32>
    %cst_271 = arith.constant 4.000000e+00 : f32
    %477 = vector.broadcast %cst_271 : f32 to vector<1x128xf32>
    %478 = arith.divf %476, %477 : vector<1x128xf32>
    %479 = arith.truncf %478 : vector<1x128xf32> to vector<1x128xbf16>
    %c4_272 = arith.constant 4 : index
    %c0_273 = arith.constant 0 : index
    %c0_274 = arith.constant 0 : index
    %480 = vector.load %arg3[%c4_272, %c0_273, %c0_274] : memref<7x128x128xbf16, #tpu.memory_space<vmem>>, vector<1x128x128xbf16>
    %481 = vector.shape_cast %480 : vector<1x128x128xbf16> to vector<128x128xbf16>
    %cst_275 = arith.constant dense<0.000000e+00> : vector<1x128xf32>
    %482 = tpu.matmul %479, %481, %cst_275 {dimension_numbers = #tpu.dot_dimension_numbers<[1], [0], [0], [1], [0, 0, 1, 1], [], []>} : vector<1x128xbf16>, vector<128x128xbf16>, vector<1x128xf32> -> vector<1x128xf32>
    %c8_276 = arith.constant 8 : index
    %c0_277 = arith.constant 0 : index
    %483 = vector.load %arg4[%c8_276, %c0_277] : memref<11x128xf32, #tpu.memory_space<vmem>>, vector<1x128xf32>
    %484 = vector.shape_cast %483 : vector<1x128xf32> to vector<128xf32>
    %485 = vector.shape_cast %484 : vector<128xf32> to vector<1x128xf32>
    %486 = arith.addf %482, %485 : vector<1x128xf32>
    %cst_278 = arith.constant 0.000000e+00 : f32
    %487 = vector.broadcast %cst_278 : f32 to vector<1x128xf32>
    %488 = arith.maximumf %486, %487 : vector<1x128xf32>
    %489 = arith.truncf %488 : vector<1x128xf32> to vector<1x128xbf16>
    %c5_279 = arith.constant 5 : index
    %c0_280 = arith.constant 0 : index
    %c0_281 = arith.constant 0 : index
    %490 = vector.load %arg3[%c5_279, %c0_280, %c0_281] : memref<7x128x128xbf16, #tpu.memory_space<vmem>>, vector<1x128x128xbf16>
    %491 = vector.shape_cast %490 : vector<1x128x128xbf16> to vector<128x128xbf16>
    %cst_282 = arith.constant dense<0.000000e+00> : vector<1x128xf32>
    %492 = tpu.matmul %489, %491, %cst_282 {dimension_numbers = #tpu.dot_dimension_numbers<[1], [0], [0], [1], [0, 0, 1, 1], [], []>} : vector<1x128xbf16>, vector<128x128xbf16>, vector<1x128xf32> -> vector<1x128xf32>
    %c9_283 = arith.constant 9 : index
    %c0_284 = arith.constant 0 : index
    %493 = vector.load %arg4[%c9_283, %c0_284] : memref<11x128xf32, #tpu.memory_space<vmem>>, vector<1x128xf32>
    %494 = vector.shape_cast %493 : vector<1x128xf32> to vector<128xf32>
    %495 = vector.shape_cast %494 : vector<128xf32> to vector<1x128xf32>
    %496 = arith.addf %492, %495 : vector<1x128xf32>
    %cst_285 = arith.constant 6.000000e+00 : f32
    %497 = vector.broadcast %cst_285 : f32 to vector<1x128xf32>
    %498 = arith.divf %496, %497 : vector<1x128xf32>
    %cst_286 = arith.constant 5.000000e-01 : f32
    %499 = vector.broadcast %cst_286 : f32 to vector<1x128xf32>
    %500 = arith.addf %498, %499 : vector<1x128xf32>
    %cst_287 = arith.constant 0.000000e+00 : f32
    %cst_288 = arith.constant 1.000000e+00 : f32
    %501 = vector.broadcast %cst_287 : f32 to vector<1x128xf32>
    %502 = arith.maximumf %501, %500 : vector<1x128xf32>
    %503 = vector.broadcast %cst_288 : f32 to vector<1x128xf32>
    %504 = arith.minimumf %503, %502 : vector<1x128xf32>
    %505 = vector.broadcast %504 : vector<1x128xf32> to vector<4x128xf32>
    %506 = arith.mulf %474, %505 : vector<4x128xf32>
    %507 = arith.truncf %506 : vector<4x128xf32> to vector<4x128xbf16>
    %c6_289 = arith.constant 6 : index
    %c0_290 = arith.constant 0 : index
    %c0_291 = arith.constant 0 : index
    %508 = vector.load %arg3[%c6_289, %c0_290, %c0_291] : memref<7x128x128xbf16, #tpu.memory_space<vmem>>, vector<1x128x128xbf16>
    %509 = vector.shape_cast %508 : vector<1x128x128xbf16> to vector<128x128xbf16>
    %cst_292 = arith.constant dense<0.000000e+00> : vector<4x128xf32>
    %510 = tpu.matmul %507, %509, %cst_292 {dimension_numbers = #tpu.dot_dimension_numbers<[1], [0], [0], [1], [0, 0, 1, 1], [], []>} : vector<4x128xbf16>, vector<128x128xbf16>, vector<4x128xf32> -> vector<4x128xf32>
    %c10_293 = arith.constant 10 : index
    %c0_294 = arith.constant 0 : index
    %511 = vector.load %arg4[%c10_293, %c0_294] : memref<11x128xf32, #tpu.memory_space<vmem>>, vector<1x128xf32>
    %512 = vector.shape_cast %511 : vector<1x128xf32> to vector<128xf32>
    %513 = vector.shape_cast %512 : vector<128xf32> to vector<1x128xf32>
    %514 = vector.broadcast %513 : vector<1x128xf32> to vector<4x128xf32>
    %515 = arith.addf %510, %514 : vector<4x128xf32>
    %c0_295 = arith.constant 0 : index
    %c0_296 = arith.constant 0 : index
    %c0_297 = arith.constant 0 : index
    %516 = vector.load %arg12[%c0_295, %c0_296, %c0_297] : memref<1x4x128xf32, #tpu.memory_space<vmem>>, vector<1x4x128xf32>
    %517 = vector.shape_cast %516 : vector<1x4x128xf32> to vector<4x128xf32>
    %518 = vector.shape_cast %515 : vector<4x128xf32> to vector<1x4x128xf32>
    tpu.vector_store %arg12[%c0_295, %c0_296, %c0_297], %518 {strides = array<i32>} : memref<1x4x128xf32, #tpu.memory_space<vmem>>, vector<1x4x128xf32>,
    return
  }
  func.func @transform_0(%arg0: i32) -> (i32, i32, i32) {
    %c0_i32 = arith.constant 0 : i32
    %c0_i32_0 = arith.constant 0 : i32
    %c0_i32_1 = arith.constant 0 : i32
    return %arg0, %c0_i32, %c0_i32_0 : i32, i32, i32
  }
  func.func @transform_1(%arg0: i32) -> (i32, i32) {
    %c0_i32 = arith.constant 0 : i32
    %c0_i32_0 = arith.constant 0 : i32
    %c0_i32_1 = arith.constant 0 : i32
    return %c0_i32, %c0_i32_0 : i32, i32
  }
  func.func @transform_2(%arg0: i32) -> (i32, i32, i32) {
    %c0_i32 = arith.constant 0 : i32
    %c0_i32_0 = arith.constant 0 : i32
    %c0_i32_1 = arith.constant 0 : i32
    %c0_i32_2 = arith.constant 0 : i32
    return %c0_i32, %c0_i32_0, %c0_i32_1 : i32, i32, i32
  }
  func.func @transform_3(%arg0: i32) -> (i32, i32) {
    %c0_i32 = arith.constant 0 : i32
    %c0_i32_0 = arith.constant 0 : i32
    %c0_i32_1 = arith.constant 0 : i32
    return %c0_i32, %c0_i32_0 : i32, i32
  }
  func.func @transform_4(%arg0: i32) -> (i32, i32) {
    %c0_i32 = arith.constant 0 : i32
    %c0_i32_0 = arith.constant 0 : i32
    %c0_i32_1 = arith.constant 0 : i32
    return %c0_i32, %c0_i32_0 : i32, i32
  }
  func.func @transform_5(%arg0: i32) -> (i32, i32, i32) {
    %c0_i32 = arith.constant 0 : i32
    %c0_i32_0 = arith.constant 0 : i32
    %c0_i32_1 = arith.constant 0 : i32
    %c0_i32_2 = arith.constant 0 : i32
    return %c0_i32, %c0_i32_0, %c0_i32_1 : i32, i32, i32
  }
  func.func @transform_6(%arg0: i32) -> (i32, i32, i32) {
    %c0_i32 = arith.constant 0 : i32
    %c0_i32_0 = arith.constant 0 : i32
    %c0_i32_1 = arith.constant 0 : i32
    %c0_i32_2 = arith.constant 0 : i32
    return %c0_i32, %c0_i32_0, %c0_i32_1 : i32, i32, i32
  }
  func.func @transform_7(%arg0: i32) -> (i32, i32, i32) {
    %c0_i32 = arith.constant 0 : i32
    %c0_i32_0 = arith.constant 0 : i32
    %c0_i32_1 = arith.constant 0 : i32
    %c0_i32_2 = arith.constant 0 : i32
    return %c0_i32, %c0_i32_0, %c0_i32_1 : i32, i32, i32
  }
  func.func @transform_8(%arg0: i32) -> (i32, i32, i32) {
    %c0_i32 = arith.constant 0 : i32
    %c0_i32_0 = arith.constant 0 : i32
    %c0_i32_1 = arith.constant 0 : i32
    return %arg0, %c0_i32, %c0_i32_0 : i32, i32, i32
  }
  func.func @transform_9(%arg0: i32) -> (i32, i32, i32) {
    %c0_i32 = arith.constant 0 : i32
    %c0_i32_0 = arith.constant 0 : i32
    %c0_i32_1 = arith.constant 0 : i32
    return %arg0, %c0_i32, %c0_i32_0 : i32, i32, i32
  }
  func.func @transform_10(%arg0: i32) -> (i32, i32, i32) {
    %c0_i32 = arith.constant 0 : i32
    %c0_i32_0 = arith.constant 0 : i32
    %c0_i32_1 = arith.constant 0 : i32
    return %arg0, %c0_i32, %c0_i32_0 : i32, i32, i32
  }
  func.func @transform_11(%arg0: i32) -> (i32, i32, i32) {
    %c0_i32 = arith.constant 0 : i32
    %c0_i32_0 = arith.constant 0 : i32
    %c0_i32_1 = arith.constant 0 : i32
    return %arg0, %c0_i32, %c0_i32_0 : i32, i32, i32
  }
}

</mosaic_0001>

<llo_original>
// kernel: mobilenetv3_features.1
$region0: #{mobilenetv3_features.1}
  #allocation0 [shape = 'u32[]', space=smem, size = 0x4, offset = 0x4, fixed_abs, tag = 'smem constant byte address 0x4 - core index']
  #allocation1 [shape = 'u32[72,128]{1,0:T(1,128)}', space=vmem, size = 0x9000, scoped, tag = 'internal scratch']
  %s0 = inlined_call_operand.vmem [shape: bf16[2,64,32], index: 0, kind: input, shape index: {}]
  %s1 = inlined_call_operand.vmem [shape: bf16[32,128], index: 1, kind: input, shape index: {}]
  %s2 = inlined_call_operand.vmem [shape: bf16[7,128,128], index: 2, kind: input, shape index: {}]
  %s3 = inlined_call_operand.vmem [shape: f32[11,128], index: 3, kind: input, shape index: {}]
  %s4 = inlined_call_operand.vmem [shape: f32[43,128], index: 4, kind: input, shape index: {}]
  %s5 = inlined_call_operand.vmem [shape: bf16[9,64,64], index: 5, kind: input, shape index: {}]
  %s6 = inlined_call_operand.vmem [shape: bf16[9,16,64], index: 6, kind: input, shape index: {}]
  %s7 = inlined_call_operand.vmem [shape: bf16[25,4,16], index: 7, kind: input, shape index: {}]
  %s8 = inlined_call_operand.vmem [shape: f32[2,64,128], index: 8, kind: output, shape index: {0}]
  %s9 = inlined_call_operand.vmem [shape: f32[2,64,128], index: 9, kind: output, shape index: {1}]
  %s10 = inlined_call_operand.vmem [shape: f32[2,16,128], index: 10, kind: output, shape index: {2}]
  %s11 = inlined_call_operand.vmem [shape: f32[2,4,128], index: 11, kind: output, shape index: {3}]
  %12 = xla_tuple %s8, %s9, %s10, %s11
  %s13 = sld [smem:[#allocation0]]
  $region89: #{mobilenetv3_features.1} parent=0
    _
  %s15 = ssub.s32 1, %s13
  %s16 = scalar_select 0, %s15, %s13
  loop: start=0, step=1, limit=4
  $region2: #{mobilenetv3_features.1} parent=0 // loop_pre_header
    _
  $region3: #{mobilenetv3_features.1} parent=0 // loop_header
    %s18 = sphi 0, %s22
    %p19 = scmp.ge.s32.totalorder %s18, 4
    %s28 = sphi 0, %s30
    %s31 = sphi 0, %s28
    %s32 = sphi 0, %s31
    %s48 = sphi 0, %s32
    %s52 = sphi 0, %s52
    %s54 = sphi 0, %s52
    %s55 = sphi 0, %s54
    %s69 = sphi 0, %s55
    %s73 = sphi 0, %s73
    %s75 = sphi 0, %s73
    %s76 = sphi 0, %s75
    %s90 = sphi 0, %s76
    %s94 = sphi 0, %s94
    %s96 = sphi 0, %s94
    %s97 = sphi 0, %s96
    %s111 = sphi 0, %s97
    %s115 = sphi 0, %s115
    %s117 = sphi 0, %s115
    %s118 = sphi 0, %s117
    %s132 = sphi 0, %s118
    %s136 = sphi 0, %s136
    %s138 = sphi 0, %s136
    %s139 = sphi 0, %s138
    %s153 = sphi 0, %s139
    %s157 = sphi 0, %s157
    %s159 = sphi 0, %s157
    %s160 = sphi 0, %s159
    %s174 = sphi 0, %s160
    %s178 = sphi 0, %s178
    %s180 = sphi 0, %s178
    %s181 = sphi 0, %s180
    %s195 = sphi 0, %s181
    %s201 = sphi 0, %s203
    %s204 = sphi 0, %s201
    %s205 = sphi 0, %s204
    %s221 = sphi 0, %s205
    %s227 = sphi 0, %s229
    %s230 = sphi 0, %s227
    %s231 = sphi 0, %s230
    %s247 = sphi 0, %s231
    %s253 = sphi 0, %s255
    %s256 = sphi 0, %s253
    %s257 = sphi 0, %s256
    %s273 = sphi 0, %s257
    %s279 = sphi 0, %s281
    %s282 = sphi 0, %s279
    %s283 = sphi 0, %s282
    %s299 = sphi 0, %s283
  $region4: #{mobilenetv3_features.1} parent=0 // loop_header_branch
    %21 = sbr.rel (%p19) target = $region8
  $region5: #{mobilenetv3_features.1} parent=0 // loop_body
    %s23 = ssub.s32 %s18, 1
    %s24 = ssub.s32 %s18, 2
    %s25 = sadd.s32 %s18, 1
    %s26 = ssub.s32 %s18, %s25
    %p27 = scmp.eq.s32.totalorder %s26, 0
    %s29 = sadd.s32 %s28, 1
    %s30 = scalar_select %p27, %s28, %s29
    %p33 = pneg %p27
    %p34 = scmp.eq.s32.totalorder %s18, 1
    %p35 = por %p33, %p34
    %p36 = scmp.ne.s32.totalorder %s28, %s31
    %p37 = scmp.eq.s32.totalorder %s18, 0
    %p38 = por %p36, %p37
    %p39 = scmp.ne.s32.totalorder %s28, %s31
    %p40 = scmp.eq.s32.totalorder %s23, 1
    %p41 = por %p39, %p40
    %p42 = scmp.ne.s32.totalorder %s31, %s32
    %p43 = scmp.eq.s32.totalorder %s23, 0
    %p44 = por %p42, %p43
    %p45 = scmp.ne.s32.totalorder %s31, %s32
    %p46 = scmp.eq.s32.totalorder %s24, 1
    %p47 = por %p45, %p46
    %p49 = scmp.ne.s32.totalorder %s32, %s48
    %p50 = scmp.eq.s32.totalorder %s24, 0
    %p51 = por %p49, %p50
    %s53 = sadd.s32 %s52, 1
    %p56 = scmp.eq.s32.totalorder %s18, 1
    %p57 = scmp.ne.s32.totalorder %s52, %s54
    %p58 = scmp.eq.s32.totalorder %s18, 0
    %p59 = por %p57, %p58
    %p60 = scmp.ne.s32.totalorder %s52, %s54
    %p61 = scmp.eq.s32.totalorder %s23, 1
    %p62 = por %p60, %p61
    %p63 = scmp.ne.s32.totalorder %s54, %s55
    %p64 = scmp.eq.s32.totalorder %s23, 0
    %p65 = por %p63, %p64
    %p66 = scmp.ne.s32.totalorder %s54, %s55
    %p67 = scmp.eq.s32.totalorder %s24, 1
    %p68 = por %p66, %p67
    %p70 = scmp.ne.s32.totalorder %s55, %s69
    %p71 = scmp.eq.s32.totalorder %s24, 0
    %p72 = por %p70, %p71
    %s74 = sadd.s32 %s73, 1
    %p77 = scmp.eq.s32.totalorder %s18, 1
    %p78 = scmp.ne.s32.totalorder %s73, %s75
    %p79 = scmp.eq.s32.totalorder %s18, 0
    %p80 = por %p78, %p79
    %p81 = scmp.ne.s32.totalorder %s73, %s75
    %p82 = scmp.eq.s32.totalorder %s23, 1
    %p83 = por %p81, %p82
    %p84 = scmp.ne.s32.totalorder %s75, %s76
    %p85 = scmp.eq.s32.totalorder %s23, 0
    %p86 = por %p84, %p85
    %p87 = scmp.ne.s32.totalorder %s75, %s76
    %p88 = scmp.eq.s32.totalorder %s24, 1
    %p89 = por %p87, %p88
    %p91 = scmp.ne.s32.totalorder %s76, %s90
    %p92 = scmp.eq.s32.totalorder %s24, 0
    %p93 = por %p91, %p92
    %s95 = sadd.s32 %s94, 1
    %p98 = scmp.eq.s32.totalorder %s18, 1
    %p99 = scmp.ne.s32.totalorder %s94, %s96
    %p100 = scmp.eq.s32.totalorder %s18, 0
    %p101 = por %p99, %p100
    %p102 = scmp.ne.s32.totalorder %s94, %s96
    %p103 = scmp.eq.s32.totalorder %s23, 1
    %p104 = por %p102, %p103
    %p105 = scmp.ne.s32.totalorder %s96, %s97
    %p106 = scmp.eq.s32.totalorder %s23, 0
    %p107 = por %p105, %p106
    %p108 = scmp.ne.s32.totalorder %s96, %s97
    %p109 = scmp.eq.s32.totalorder %s24, 1
    %p110 = por %p108, %p109
    %p112 = scmp.ne.s32.totalorder %s97, %s111
    %p113 = scmp.eq.s32.totalorder %s24, 0
    %p114 = por %p112, %p113
    %s116 = sadd.s32 %s115, 1
    %p119 = scmp.eq.s32.totalorder %s18, 1
    %p120 = scmp.ne.s32.totalorder %s115, %s117
    %p121 = scmp.eq.s32.totalorder %s18, 0
    %p122 = por %p120, %p121
    %p123 = scmp.ne.s32.totalorder %s115, %s117
    %p124 = scmp.eq.s32.totalorder %s23, 1
    %p125 = por %p123, %p124
    %p126 = scmp.ne.s32.totalorder %s117, %s118
    %p127 = scmp.eq.s32.totalorder %s23, 0
    %p128 = por %p126, %p127
    %p129 = scmp.ne.s32.totalorder %s117, %s118
    %p130 = scmp.eq.s32.totalorder %s24, 1
    %p131 = por %p129, %p130
    %p133 = scmp.ne.s32.totalorder %s118, %s132
    %p134 = scmp.eq.s32.totalorder %s24, 0
    %p135 = por %p133, %p134
    %s137 = sadd.s32 %s136, 1
    %p140 = scmp.eq.s32.totalorder %s18, 1
    %p141 = scmp.ne.s32.totalorder %s136, %s138
    %p142 = scmp.eq.s32.totalorder %s18, 0
    %p143 = por %p141, %p142
    %p144 = scmp.ne.s32.totalorder %s136, %s138
    %p145 = scmp.eq.s32.totalorder %s23, 1
    %p146 = por %p144, %p145
    %p147 = scmp.ne.s32.totalorder %s138, %s139
    %p148 = scmp.eq.s32.totalorder %s23, 0
    %p149 = por %p147, %p148
    %p150 = scmp.ne.s32.totalorder %s138, %s139
    %p151 = scmp.eq.s32.totalorder %s24, 1
    %p152 = por %p150, %p151
    %p154 = scmp.ne.s32.totalorder %s139, %s153
    %p155 = scmp.eq.s32.totalorder %s24, 0
    %p156 = por %p154, %p155
    %s158 = sadd.s32 %s157, 1
    %p161 = scmp.eq.s32.totalorder %s18, 1
    %p162 = scmp.ne.s32.totalorder %s157, %s159
    %p163 = scmp.eq.s32.totalorder %s18, 0
    %p164 = por %p162, %p163
    %p165 = scmp.ne.s32.totalorder %s157, %s159
    %p166 = scmp.eq.s32.totalorder %s23, 1
    %p167 = por %p165, %p166
    %p168 = scmp.ne.s32.totalorder %s159, %s160
    %p169 = scmp.eq.s32.totalorder %s23, 0
    %p170 = por %p168, %p169
    %p171 = scmp.ne.s32.totalorder %s159, %s160
    %p172 = scmp.eq.s32.totalorder %s24, 1
    %p173 = por %p171, %p172
    %p175 = scmp.ne.s32.totalorder %s160, %s174
    %p176 = scmp.eq.s32.totalorder %s24, 0
    %p177 = por %p175, %p176
    %s179 = sadd.s32 %s178, 1
    %p182 = scmp.eq.s32.totalorder %s18, 1
    %p183 = scmp.ne.s32.totalorder %s178, %s180
    %p184 = scmp.eq.s32.totalorder %s18, 0
    %p185 = por %p183, %p184
    %p186 = scmp.ne.s32.totalorder %s178, %s180
    %p187 = scmp.eq.s32.totalorder %s23, 1
    %p188 = por %p186, %p187
    %p189 = scmp.ne.s32.totalorder %s180, %s181
    %p190 = scmp.eq.s32.totalorder %s23, 0
    %p191 = por %p189, %p190
    %p192 = scmp.ne.s32.totalorder %s180, %s181
    %p193 = scmp.eq.s32.totalorder %s24, 1
    %p194 = por %p192, %p193
    %p196 = scmp.ne.s32.totalorder %s181, %s195
    %p197 = scmp.eq.s32.totalorder %s24, 0
    %p198 = por %p196, %p197
    %s199 = ssub.s32 %s18, %s25
    %p200 = scmp.eq.s32.totalorder %s199, 0
    %s202 = sadd.s32 %s201, 1
    %s203 = scalar_select %p200, %s201, %s202
    %p206 = pneg %p200
    %p207 = scmp.eq.s32.totalorder %s18, 1
    %p208 = por %p206, %p207
    %p209 = scmp.ne.s32.totalorder %s201, %s204
    %p210 = scmp.eq.s32.totalorder %s18, 0
    %p211 = por %p209, %p210
    %p212 = scmp.ne.s32.totalorder %s201, %s204
    %p213 = scmp.eq.s32.totalorder %s23, 1
    %p214 = por %p212, %p213
    %p215 = scmp.ne.s32.totalorder %s204, %s205
    %p216 = scmp.eq.s32.totalorder %s23, 0
    %p217 = por %p215, %p216
    %p218 = scmp.ne.s32.totalorder %s204, %s205
    %p219 = scmp.eq.s32.totalorder %s24, 1
    %p220 = por %p218, %p219
    %p222 = scmp.ne.s32.totalorder %s205, %s221
    %p223 = scmp.eq.s32.totalorder %s24, 0
    %p224 = por %p222, %p223
    %s225 = ssub.s32 %s18, %s25
    %p226 = scmp.eq.s32.totalorder %s225, 0
    %s228 = sadd.s32 %s227, 1
    %s229 = scalar_select %p226, %s227, %s228
    %p232 = pneg %p226
    %p233 = scmp.eq.s32.totalorder %s18, 1
    %p234 = por %p232, %p233
    %p235 = scmp.ne.s32.totalorder %s227, %s230
    %p236 = scmp.eq.s32.totalorder %s18, 0
    %p237 = por %p235, %p236
    %p238 = scmp.ne.s32.totalorder %s227, %s230
    %p239 = scmp.eq.s32.totalorder %s23, 1
    %p240 = por %p238, %p239
    %p241 = scmp.ne.s32.totalorder %s230, %s231
    %p242 = scmp.eq.s32.totalorder %s23, 0
    %p243 = por %p241, %p242
    %p244 = scmp.ne.s32.totalorder %s230, %s231
    %p245 = scmp.eq.s32.totalorder %s24, 1
    %p246 = por %p244, %p245
    %p248 = scmp.ne.s32.totalorder %s231, %s247
    %p249 = scmp.eq.s32.totalorder %s24, 0
    %p250 = por %p248, %p249
    %s251 = ssub.s32 %s18, %s25
    %p252 = scmp.eq.s32.totalorder %s251, 0
    %s254 = sadd.s32 %s253, 1
    %s255 = scalar_select %p252, %s253, %s254
    %p258 = pneg %p252
    %p259 = scmp.eq.s32.totalorder %s18, 1
    %p260 = por %p258, %p259
    %p261 = scmp.ne.s32.totalorder %s253, %s256
    %p262 = scmp.eq.s32.totalorder %s18, 0
    %p263 = por %p261, %p262
    %p264 = scmp.ne.s32.totalorder %s253, %s256
    %p265 = scmp.eq.s32.totalorder %s23, 1
    %p266 = por %p264, %p265
    %p267 = scmp.ne.s32.totalorder %s256, %s257
    %p268 = scmp.eq.s32.totalorder %s23, 0
    %p269 = por %p267, %p268
    %p270 = scmp.ne.s32.totalorder %s256, %s257
    %p271 = scmp.eq.s32.totalorder %s24, 1
    %p272 = por %p270, %p271
    %p274 = scmp.ne.s32.totalorder %s257, %s273
    %p275 = scmp.eq.s32.totalorder %s24, 0
    %p276 = por %p274, %p275
    %s277 = ssub.s32 %s18, %s25
    %p278 = scmp.eq.s32.totalorder %s277, 0
    %s280 = sadd.s32 %s279, 1
    %s281 = scalar_select %p278, %s279, %s280
    %p284 = pneg %p278
    %p285 = scmp.eq.s32.totalorder %s18, 1
    %p286 = por %p284, %p285
    %p287 = scmp.ne.s32.totalorder %s279, %s282
    %p288 = scmp.eq.s32.totalorder %s18, 0
    %p289 = por %p287, %p288
    %p290 = scmp.ne.s32.totalorder %s279, %s282
    %p291 = scmp.eq.s32.totalorder %s23, 1
    %p292 = por %p290, %p291
    %p293 = scmp.ne.s32.totalorder %s282, %s283
    %p294 = scmp.eq.s32.totalorder %s23, 0
    %p295 = por %p293, %p294
    %p296 = scmp.ne.s32.totalorder %s282, %s283
    %p297 = scmp.eq.s32.totalorder %s24, 1
    %p298 = por %p296, %p297
    %p300 = scmp.ne.s32.totalorder %s283, %s299
    %p301 = scmp.eq.s32.totalorder %s24, 0
    %p302 = por %p300, %p301
    %p303 = scmp.le.s32.totalorder 1, %s18
    %p304 = scmp.lt.s32.totalorder %s18, 3
    %p305 = pnand %p303, %p304
    %p306 = pneg %p305
    // Predicated region
    $region9: #{mobilenetv3_features.1} parent=5 // pred_check
      _
    $region10: #{mobilenetv3_features.1} parent=5 // pred_check_branch
      %308 = sbr.rel (%p305) target = $region12
    $region11: #{mobilenetv3_features.1} parent=5 // pred_region
      %s309 = ssub.s32 %s18, 1
      // Predicated region
      $region13: #{mobilenetv3_features.1} parent=11 // pred_check
        %p310 = pneg %p65
      $region14: #{mobilenetv3_features.1} parent=11 // pred_check_branch
        %312 = sbr.rel (%p310) target = $region16
      $region15: #{mobilenetv3_features.1} parent=11 // pred_region
        _
      $region16: #{mobilenetv3_features.1} parent=11 // pred_fallthru
        _
      // Predicated region
      $region17: #{mobilenetv3_features.1} parent=11 // pred_check
        %p313 = pneg %p86
      $region18: #{mobilenetv3_features.1} parent=11 // pred_check_branch
        %315 = sbr.rel (%p313) target = $region20
      $region19: #{mobilenetv3_features.1} parent=11 // pred_region
        _
      $region20: #{mobilenetv3_features.1} parent=11 // pred_fallthru
        _
      // Predicated region
      $region21: #{mobilenetv3_features.1} parent=11 // pred_check
        %p316 = pneg %p107
      $region22: #{mobilenetv3_features.1} parent=11 // pred_check_branch
        %318 = sbr.rel (%p316) target = $region24
      $region23: #{mobilenetv3_features.1} parent=11 // pred_region
        _
      $region24: #{mobilenetv3_features.1} parent=11 // pred_fallthru
        _
      // Predicated region
      $region25: #{mobilenetv3_features.1} parent=11 // pred_check
        %p319 = pneg %p128
      $region26: #{mobilenetv3_features.1} parent=11 // pred_check_branch
        %321 = sbr.rel (%p319) target = $region28
      $region27: #{mobilenetv3_features.1} parent=11 // pred_region
        _
      $region28: #{mobilenetv3_features.1} parent=11 // pred_fallthru
        _
      // Predicated region
      $region29: #{mobilenetv3_features.1} parent=11 // pred_check
        %p322 = pneg %p149
      $region30: #{mobilenetv3_features.1} parent=11 // pred_check_branch
        %324 = sbr.rel (%p322) target = $region32
      $region31: #{mobilenetv3_features.1} parent=11 // pred_region
        _
      $region32: #{mobilenetv3_features.1} parent=11 // pred_fallthru
        _
      // Predicated region
      $region33: #{mobilenetv3_features.1} parent=11 // pred_check
        %p325 = pneg %p170
      $region34: #{mobilenetv3_features.1} parent=11 // pred_check_branch
        %327 = sbr.rel (%p325) target = $region36
      $region35: #{mobilenetv3_features.1} parent=11 // pred_region
        _
      $region36: #{mobilenetv3_features.1} parent=11 // pred_fallthru
        _
      // Predicated region
      $region37: #{mobilenetv3_features.1} parent=11 // pred_check
        %p328 = pneg %p191
      $region38: #{mobilenetv3_features.1} parent=11 // pred_check_branch
        %330 = sbr.rel (%p328) target = $region40
      $region39: #{mobilenetv3_features.1} parent=11 // pred_region
        _
      $region40: #{mobilenetv3_features.1} parent=11 // pred_fallthru
        _
    $region12: #{mobilenetv3_features.1} parent=5 // pred_fallthru
      _
    %p331 = scmp.lt.s32.totalorder %s18, 2
    // Predicated region
    $region41: #{mobilenetv3_features.1} parent=5 // pred_check
      %p332 = pneg %p331
    $region42: #{mobilenetv3_features.1} parent=5 // pred_check_branch
      %334 = sbr.rel (%p332) target = $region44
    $region43: #{mobilenetv3_features.1} parent=5 // pred_region
      // Predicated region
      $region45: #{mobilenetv3_features.1} parent=43 // pred_check
        %p335 = pneg %p38
      $region46: #{mobilenetv3_features.1} parent=43 // pred_check_branch
        %337 = sbr.rel (%p335) target = $region48
      $region47: #{mobilenetv3_features.1} parent=43 // pred_region
        %p338 = scmp.lt.s32.totalorder %s18, 1
        %s339 = scalar_select %p338, %s18, 1
        %s340 = smul.addr %s339, 8
        %s341 = smul.addr %s340, 4
        %s342 = scalar_lea.vmem %s0, %s341
      $region48: #{mobilenetv3_features.1} parent=43 // pred_fallthru
        _
    $region44: #{mobilenetv3_features.1} parent=5 // pred_fallthru
      _
    %p343 = scmp.le.s32.totalorder 1, %s18
    %p344 = scmp.lt.s32.totalorder %s18, 3
    %p345 = pnand %p343, %p344
    %p346 = pneg %p345
    // Predicated region
    $region49: #{mobilenetv3_features.1} parent=5 // pred_check
      _
    $region50: #{mobilenetv3_features.1} parent=5 // pred_check_branch
      %348 = sbr.rel (%p345) target = $region52
    $region51: #{mobilenetv3_features.1} parent=5 // pred_region
      %s349 = ssub.s32 %s18, 1
      %p350 = scmp.lt.s32.totalorder %s23, 1
      %s351 = scalar_select %p350, %s23, 1
      %s352 = smul.addr %s351, 8
      %s353 = smul.addr %s352, 4
      %s354 = scalar_lea.vmem %s0, %s353
      %p355 = pneg %p44
      %p356 = pneg %p41
      %p357 = pneg %p65
      %p358 = pneg %p62
      %p359 = pneg %p86
      %p360 = pneg %p83
      %p361 = pneg %p107
      %p362 = pneg %p104
      %p363 = pneg %p128
      %p364 = pneg %p125
      %p365 = pneg %p149
      %p366 = pneg %p146
      %p367 = pneg %p170
      %p368 = pneg %p167
      %p369 = pneg %p191
      %p370 = pneg %p188
      %p371 = pneg %p217
      %p372 = pneg %p214
      %p373 = scmp.lt.s32.totalorder %s23, 1
      %s374 = scalar_select %p373, %s23, 1
      %s375 = smul.addr %s374, 8
      %s376 = smul.addr %s375, 8
      %s377 = scalar_lea.vmem %s8, %s376
      %p378 = pneg %p243
      %p379 = pneg %p240
      %p380 = scmp.lt.s32.totalorder %s23, 1
      %s381 = scalar_select %p380, %s23, 1
      %s382 = smul.addr %s381, 8
      %s383 = smul.addr %s382, 8
      %s384 = scalar_lea.vmem %s9, %s383
      %p385 = pneg %p269
      %p386 = pneg %p266
      %p387 = scmp.lt.s32.totalorder %s23, 1
      %s388 = scalar_select %p387, %s23, 1
      %s389 = smul.addr %s388, 2
      %s390 = smul.addr %s389, 8
      %s391 = scalar_lea.vmem %s10, %s390
      %p392 = pneg %p295
      %p393 = pneg %p292
      %p394 = scmp.lt.s32.totalorder %s23, 1
      %s395 = scalar_select %p394, %s23, 1
      %s396 = smul.addr %s395, 4
      %s397 = scalar_lea.vmem %s11, %s396
      %p398 = scmp.lt.s32.totalorder %s23, 1
      %s399 = scalar_select %p398, %s23, 1
      %s400 = smul.addr %s399, 8
      %s401 = smul.addr %s400, 4
      %s402 = scalar_lea.vmem %s0, %s401
      %p403 = scmp.lt.s32.totalorder %s23, 1
      %s404 = scalar_select %p403, %s23, 1
      %s405 = smul.addr %s404, 8
      %s406 = smul.addr %s405, 8
      %s407 = scalar_lea.vmem %s8, %s406
      %p408 = scmp.lt.s32.totalorder %s23, 1
      %s409 = scalar_select %p408, %s23, 1
      %s410 = smul.addr %s409, 8
      %s411 = smul.addr %s410, 8
      %s412 = scalar_lea.vmem %s9, %s411
      %p413 = scmp.lt.s32.totalorder %s23, 1
      %s414 = scalar_select %p413, %s23, 1
      %s415 = smul.addr %s414, 2
      %s416 = smul.addr %s415, 8
      %s417 = scalar_lea.vmem %s10, %s416
      %p418 = scmp.lt.s32.totalorder %s23, 1
      %s419 = scalar_select %p418, %s23, 1
      %s420 = smul.addr %s419, 4
      %s421 = scalar_lea.vmem %s11, %s420
      %v423 = vld [vmem:[%s402] sm:$0xf]
      %v424 = vld [vmem:[%s402 + $0x4] sm:$0xf]
      %v425 = vld [vmem:[%s402 + $0x8] sm:$0xf]
      %v426 = vld [vmem:[%s402 + $0xc] sm:$0xf]
      %v427 = vld [vmem:[%s402 + $0x10] sm:$0xf]
      %v428 = vld [vmem:[%s402 + $0x14] sm:$0xf]
      %v429 = vld [vmem:[%s402 + $0x18] sm:$0xf]
      %v430 = vld [vmem:[%s402 + $0x1c] sm:$0xf]
      %v431 = vld [vmem:[%s1] sm:$0xf]
      %v432 = vld [vmem:[%s1 + $0x4] sm:$0xf]
      %v433 = vld [vmem:[%s1 + $0x8] sm:$0xf]
      %v434 = vld [vmem:[%s1 + $0xc] sm:$0xf]
      %v435 = vld [vmem:[%s3] sm:$0x1]
      %v436 = vperm.slane %v435, 0
      %v445 = vunpack.c.l.b16 %v423
      %v446 = vunpack.c.l.b16 %v424
      %v447 = vunpack.c.l.b16 %v425
      %v448 = vunpack.c.l.b16 %v426
      %v449 = vunpack.c.l.b16 %v427
      %v450 = vunpack.c.l.b16 %v428
      %v451 = vunpack.c.l.b16 %v429
      %v452 = vunpack.c.l.b16 %v430
      %v453 = vpack.c.b16 %v446, %v445
      %v454 = vpack.c.b16 %v448, %v447
      %v455 = vpack.c.b16 %v450, %v449
      %v456 = vpack.c.b16 %v452, %v451
      %v461 = vunpack.c.l.b16 %v431
      %v462 = vunpack.c.l.b16 %v432
      %v463 = vunpack.c.l.b16 %v433
      %v464 = vunpack.c.l.b16 %v434
      %v465 = vpack.c.b16 %v462, %v461
      %v466 = vpack.c.b16 %v464, %v463
      %vm469 = vcmask 261120
      %v471 = vsel %vm469, %v453, 0
      %v474 = vsel %vm469, %v454, 0
      %v477 = vsel %vm469, %v455, 0
      %v480 = vsel %vm469, %v456, 0
      %482 = vmatpush.bf16.msra.mxu0 0
      %483 = vmatpush.bf16.msra.mxu0 0
      %484 = vmatpush.bf16.msra.mxu0 0
      %485 = vmatpush.bf16.msra.mxu0 0
      %486 = vmatpush.bf16.msra.mxu0 0
      %487 = vmatpush.bf16.msra.mxu0 0
      %488 = vmatpush.bf16.msra.mxu0 %v466
      %489 = vmatpush.bf16.msra.mxu0 %v465
      %490 = vmatmul.bf16.gmra.mxu0 %v471
      %v491 = vpop.f32.mrf.mxu0
      %v492 = vadd.f32 %v436, %v491
      %v493 = vpop.f32.mrf.mxu0
      %v494 = vadd.f32 %v436, %v493
      %495 = vmatmul.bf16.gmra.mxu0 %v474
      %v496 = vpop.f32.mrf.mxu0
      %v497 = vadd.f32 %v436, %v496
      %v498 = vpop.f32.mrf.mxu0
      %v499 = vadd.f32 %v436, %v498
      %500 = vmatmul.bf16.gmra.mxu0 %v477
      %v501 = vpop.f32.mrf.mxu0
      %v502 = vadd.f32 %v436, %v501
      %v503 = vpop.f32.mrf.mxu0
      %v504 = vadd.f32 %v436, %v503
      %505 = vmatmul.bf16.gmra.mxu0 %v480
      %v506 = vpop.f32.mrf.mxu0
      %v507 = vadd.f32 %v436, %v506
      %v508 = vpop.f32.mrf.mxu0
      %v509 = vadd.f32 %v436, %v508
      %510 = vdwg.mxu0
      %v511 = vmax.f32 %v492, 0.0
      %v512 = vmax.f32 %v494, 0.0
      %v513 = vmax.f32 %v497, 0.0
      %v514 = vmax.f32 %v499, 0.0
      %v515 = vmax.f32 %v502, 0.0
      %v516 = vmax.f32 %v504, 0.0
      %v517 = vmax.f32 %v507, 0.0
      %v518 = vmax.f32 %v509, 0.0
      %519 = vst [vmem:[%s407] sm:$0xff] %v511
      %520 = vst [vmem:[%s407 + $0x8] sm:$0xff] %v512
      %521 = vst [vmem:[%s407 + $0x10] sm:$0xff] %v513
      %522 = vst [vmem:[%s407 + $0x18] sm:$0xff] %v514
      %523 = vst [vmem:[%s407 + $0x20] sm:$0xff] %v515
      %524 = vst [vmem:[%s407 + $0x28] sm:$0xff] %v516
      %525 = vst [vmem:[%s407 + $0x30] sm:$0xff] %v517
      %526 = vst [vmem:[%s407 + $0x38] sm:$0xff] %v518
      %v527 = vpack.c.bf16 %v512, %v511
      %v528 = vpack.c.bf16 %v514, %v513
      %v529 = vpack.c.bf16 %v516, %v515
      %v530 = vpack.c.bf16 %v518, %v517
      %v531 = vld [vmem:[%s5] sm:$0xf]
      %v532 = vld [vmem:[%s5 + $0x4] sm:$0xf]
      %v533 = vld [vmem:[%s5 + $0x8] sm:$0xf]
      %v534 = vld [vmem:[%s5 + $0xc] sm:$0xf]
      %v535 = vld [vmem:[%s5 + $0x10] sm:$0xf]
      %v536 = vld [vmem:[%s5 + $0x14] sm:$0xf]
      %v537 = vld [vmem:[%s5 + $0x18] sm:$0xf]
      %v538 = vld [vmem:[%s5 + $0x1c] sm:$0xf]
      %v547 = vunpack.c.l.b16 %v531
      %v548 = vunpack.c.l.b16 %v532
      %v549 = vunpack.c.l.b16 %v533
      %v550 = vunpack.c.l.b16 %v534
      %v551 = vunpack.c.l.b16 %v535
      %v552 = vunpack.c.l.b16 %v536
      %v553 = vunpack.c.l.b16 %v537
      %v554 = vunpack.c.l.b16 %v538
      %v555 = vpack.c.b16 %v548, %v547
      %v556 = vpack.c.b16 %v550, %v549
      %v557 = vpack.c.b16 %v552, %v551
      %v558 = vpack.c.b16 %v554, %v553
      %vm559 = vcmask 523264
      %v561 = vsel %vm559, %v555, 0
      %v564 = vsel %vm559, %v556, 0
      %v567 = vsel %vm559, %v557, 0
      %v570 = vsel %vm559, %v558, 0
      %572 = vmatpush.bf16.msra.mxu0 0
      %573 = vmatpush.bf16.msra.mxu0 0
      %574 = vmatpush.bf16.msra.mxu0 0
      %575 = vmatpush.bf16.msra.mxu0 0
      %576 = vmatpush.bf16.msra.mxu0 %v530
      %577 = vmatpush.bf16.msra.mxu0 %v529
      %578 = vmatpush.bf16.msra.mxu0 %v528
      %579 = vmatpush.bf16.msra.mxu0 %v527
      %580 = vmatmul.bf16.gmra.mxu0 %v561
      %v581 = vpop.f32.mrf.mxu0
      %v582 = vadd.f32 0.0, %v581
      %v583 = vpop.f32.mrf.mxu0
      %v584 = vadd.f32 0.0, %v583
      %585 = vmatmul.bf16.gmra.mxu0 %v564
      %v586 = vpop.f32.mrf.mxu0
      %v587 = vadd.f32 0.0, %v586
      %v588 = vpop.f32.mrf.mxu0
      %v589 = vadd.f32 0.0, %v588
      %590 = vmatmul.bf16.gmra.mxu0 %v567
      %v591 = vpop.f32.mrf.mxu0
      %v592 = vadd.f32 0.0, %v591
      %v593 = vpop.f32.mrf.mxu0
      %v594 = vadd.f32 0.0, %v593
      %595 = vmatmul.bf16.gmra.mxu0 %v570
      %v596 = vpop.f32.mrf.mxu0
      %v597 = vadd.f32 0.0, %v596
      %v598 = vpop.f32.mrf.mxu0
      %v599 = vadd.f32 0.0, %v598
      %600 = vdwg.mxu0
      %v601 = vld [vmem:[%s4] sm:$0x1]
      %v602 = vperm.slane %v601, 0
      %v603 = vmul.f32 %v582, %v602
      %v604 = vmul.f32 %v584, %v602
      %v605 = vmul.f32 %v587, %v602
      %v606 = vmul.f32 %v589, %v602
      %v607 = vmul.f32 %v592, %v602
      %v608 = vmul.f32 %v594, %v602
      %v609 = vmul.f32 %v597, %v602
      %v610 = vmul.f32 %v599, %v602
      %v611 = vadd.f32 %v603, 0.0
      %v612 = vadd.f32 %v604, 0.0
      %v613 = vadd.f32 %v605, 0.0
      %v614 = vadd.f32 %v606, 0.0
      %v615 = vadd.f32 %v607, 0.0
      %v616 = vadd.f32 %v608, 0.0
      %v617 = vadd.f32 %v609, 0.0
      %v618 = vadd.f32 %v610, 0.0
      %s619 = scalar_lea.vmem %s5, 32
      %v620 = vld [vmem:[%s619] sm:$0xf]
      %v621 = vld [vmem:[%s619 + $0x4] sm:$0xf]
      %v622 = vld [vmem:[%s619 + $0x8] sm:$0xf]
      %v623 = vld [vmem:[%s619 + $0xc] sm:$0xf]
      %v624 = vld [vmem:[%s619 + $0x10] sm:$0xf]
      %v625 = vld [vmem:[%s619 + $0x14] sm:$0xf]
      %v626 = vld [vmem:[%s619 + $0x18] sm:$0xf]
      %v627 = vld [vmem:[%s619 + $0x1c] sm:$0xf]
      %v636 = vunpack.c.l.b16 %v620
      %v637 = vunpack.c.l.b16 %v621
      %v638 = vunpack.c.l.b16 %v622
      %v639 = vunpack.c.l.b16 %v623
      %v640 = vunpack.c.l.b16 %v624
      %v641 = vunpack.c.l.b16 %v625
      %v642 = vunpack.c.l.b16 %v626
      %v643 = vunpack.c.l.b16 %v627
      %v644 = vpack.c.b16 %v637, %v636
      %v645 = vpack.c.b16 %v639, %v638
      %v646 = vpack.c.b16 %v641, %v640
      %v647 = vpack.c.b16 %v643, %v642
      %v649 = vsel %vm559, %v644, 0
      %v652 = vsel %vm559, %v645, 0
      %v655 = vsel %vm559, %v646, 0
      %v658 = vsel %vm559, %v647, 0
      %660 = vmatpush.bf16.msra.mxu0 0
      %661 = vmatpush.bf16.msra.mxu0 0
      %662 = vmatpush.bf16.msra.mxu0 0
      %663 = vmatpush.bf16.msra.mxu0 0
      %664 = vmatpush.bf16.msra.mxu0 %v530
      %665 = vmatpush.bf16.msra.mxu0 %v529
      %666 = vmatpush.bf16.msra.mxu0 %v528
      %667 = vmatpush.bf16.msra.mxu0 %v527
      %668 = vmatmul.bf16.gmra.mxu0 %v649
      %v669 = vpop.f32.mrf.mxu0
      %v670 = vadd.f32 0.0, %v669
      %v671 = vpop.f32.mrf.mxu0
      %v672 = vadd.f32 0.0, %v671
      %673 = vmatmul.bf16.gmra.mxu0 %v652
      %v674 = vpop.f32.mrf.mxu0
      %v675 = vadd.f32 0.0, %v674
      %v676 = vpop.f32.mrf.mxu0
      %v677 = vadd.f32 0.0, %v676
      %678 = vmatmul.bf16.gmra.mxu0 %v655
      %v679 = vpop.f32.mrf.mxu0
      %v680 = vadd.f32 0.0, %v679
      %v681 = vpop.f32.mrf.mxu0
      %v682 = vadd.f32 0.0, %v681
      %683 = vmatmul.bf16.gmra.mxu0 %v658
      %v684 = vpop.f32.mrf.mxu0
      %v685 = vadd.f32 0.0, %v684
      %v686 = vpop.f32.mrf.mxu0
      %v687 = vadd.f32 0.0, %v686
      %688 = vdwg.mxu0
      %v689 = vld [vmem:[%s4 + $0x1] sm:$0x1]
      %v690 = vperm.slane %v689, 0
      %v691 = vmul.f32 %v670, %v690
      %v692 = vmul.f32 %v672, %v690
      %v693 = vmul.f32 %v675, %v690
      %v694 = vmul.f32 %v677, %v690
      %v695 = vmul.f32 %v680, %v690
      %v696 = vmul.f32 %v682, %v690
      %v697 = vmul.f32 %v685, %v690
      %v698 = vmul.f32 %v687, %v690
      %v699 = vadd.f32 %v611, %v691
      %v700 = vadd.f32 %v612, %v692
      %v701 = vadd.f32 %v613, %v693
      %v702 = vadd.f32 %v614, %v694
      %v703 = vadd.f32 %v615, %v695
      %v704 = vadd.f32 %v616, %v696
      %v705 = vadd.f32 %v617, %v697
      %v706 = vadd.f32 %v618, %v698
      %s707 = scalar_lea.vmem %s5, 64
      %v708 = vld [vmem:[%s707] sm:$0xf]
      %v709 = vld [vmem:[%s707 + $0x4] sm:$0xf]
      %v710 = vld [vmem:[%s707 + $0x8] sm:$0xf]
      %v711 = vld [vmem:[%s707 + $0xc] sm:$0xf]
      %v712 = vld [vmem:[%s707 + $0x10] sm:$0xf]
      %v713 = vld [vmem:[%s707 + $0x14] sm:$0xf]
      %v714 = vld [vmem:[%s707 + $0x18] sm:$0xf]
      %v715 = vld [vmem:[%s707 + $0x1c] sm:$0xf]
      %v724 = vunpack.c.l.b16 %v708
      %v725 = vunpack.c.l.b16 %v709
      %v726 = vunpack.c.l.b16 %v710
      %v727 = vunpack.c.l.b16 %v711
      %v728 = vunpack.c.l.b16 %v712
      %v729 = vunpack.c.l.b16 %v713
      %v730 = vunpack.c.l.b16 %v714
      %v731 = vunpack.c.l.b16 %v715
      %v732 = vpack.c.b16 %v725, %v724
      %v733 = vpack.c.b16 %v727, %v726
      %v734 = vpack.c.b16 %v729, %v728
      %v735 = vpack.c.b16 %v731, %v730
      %v737 = vsel %vm559, %v732, 0
      %v740 = vsel %vm559, %v733, 0
      %v743 = vsel %vm559, %v734, 0
      %v746 = vsel %vm559, %v735, 0
      %748 = vmatpush.bf16.msra.mxu0 0
      %749 = vmatpush.bf16.msra.mxu0 0
      %750 = vmatpush.bf16.msra.mxu0 0
      %751 = vmatpush.bf16.msra.mxu0 0
      %752 = vmatpush.bf16.msra.mxu0 %v530
      %753 = vmatpush.bf16.msra.mxu0 %v529
      %754 = vmatpush.bf16.msra.mxu0 %v528
      %755 = vmatpush.bf16.msra.mxu0 %v527
      %756 = vmatmul.bf16.gmra.mxu0 %v737
      %v757 = vpop.f32.mrf.mxu0
      %v758 = vadd.f32 0.0, %v757
      %v759 = vpop.f32.mrf.mxu0
      %v760 = vadd.f32 0.0, %v759
      %761 = vmatmul.bf16.gmra.mxu0 %v740
      %v762 = vpop.f32.mrf.mxu0
      %v763 = vadd.f32 0.0, %v762
      %v764 = vpop.f32.mrf.mxu0
      %v765 = vadd.f32 0.0, %v764
      %766 = vmatmul.bf16.gmra.mxu0 %v743
      %v767 = vpop.f32.mrf.mxu0
      %v768 = vadd.f32 0.0, %v767
      %v769 = vpop.f32.mrf.mxu0
      %v770 = vadd.f32 0.0, %v769
      %771 = vmatmul.bf16.gmra.mxu0 %v746
      %v772 = vpop.f32.mrf.mxu0
      %v773 = vadd.f32 0.0, %v772
      %v774 = vpop.f32.mrf.mxu0
      %v775 = vadd.f32 0.0, %v774
      %776 = vdwg.mxu0
      %v777 = vld [vmem:[%s4 + $0x2] sm:$0x1]
      %v778 = vperm.slane %v777, 0
      %v779 = vmul.f32 %v758, %v778
      %v780 = vmul.f32 %v760, %v778
      %v781 = vmul.f32 %v763, %v778
      %v782 = vmul.f32 %v765, %v778
      %v783 = vmul.f32 %v768, %v778
      %v784 = vmul.f32 %v770, %v778
      %v785 = vmul.f32 %v773, %v778
      %v786 = vmul.f32 %v775, %v778
      %v787 = vadd.f32 %v699, %v779
      %v788 = vadd.f32 %v700, %v780
      %v789 = vadd.f32 %v701, %v781
      %v790 = vadd.f32 %v702, %v782
      %v791 = vadd.f32 %v703, %v783
      %v792 = vadd.f32 %v704, %v784
      %v793 = vadd.f32 %v705, %v785
      %v794 = vadd.f32 %v706, %v786
      %s795 = scalar_lea.vmem %s5, 96
      %v796 = vld [vmem:[%s795] sm:$0xf]
      %v797 = vld [vmem:[%s795 + $0x4] sm:$0xf]
      %v798 = vld [vmem:[%s795 + $0x8] sm:$0xf]
      %v799 = vld [vmem:[%s795 + $0xc] sm:$0xf]
      %v800 = vld [vmem:[%s795 + $0x10] sm:$0xf]
      %v801 = vld [vmem:[%s795 + $0x14] sm:$0xf]
      %v802 = vld [vmem:[%s795 + $0x18] sm:$0xf]
      %v803 = vld [vmem:[%s795 + $0x1c] sm:$0xf]
      %v812 = vunpack.c.l.b16 %v796
      %v813 = vunpack.c.l.b16 %v797
      %v814 = vunpack.c.l.b16 %v798
      %v815 = vunpack.c.l.b16 %v799
      %v816 = vunpack.c.l.b16 %v800
      %v817 = vunpack.c.l.b16 %v801
      %v818 = vunpack.c.l.b16 %v802
      %v819 = vunpack.c.l.b16 %v803
      %v820 = vpack.c.b16 %v813, %v812
      %v821 = vpack.c.b16 %v815, %v814
      %v822 = vpack.c.b16 %v817, %v816
      %v823 = vpack.c.b16 %v819, %v818
      %v825 = vsel %vm559, %v820, 0
      %v828 = vsel %vm559, %v821, 0
      %v831 = vsel %vm559, %v822, 0
      %v834 = vsel %vm559, %v823, 0
      %836 = vmatpush.bf16.msra.mxu0 0
      %837 = vmatpush.bf16.msra.mxu0 0
      %838 = vmatpush.bf16.msra.mxu0 0
      %839 = vmatpush.bf16.msra.mxu0 0
      %840 = vmatpush.bf16.msra.mxu0 %v530
      %841 = vmatpush.bf16.msra.mxu0 %v529
      %842 = vmatpush.bf16.msra.mxu0 %v528
      %843 = vmatpush.bf16.msra.mxu0 %v527
      %844 = vmatmul.bf16.gmra.mxu0 %v825
      %v845 = vpop.f32.mrf.mxu0
      %v846 = vadd.f32 0.0, %v845
      %v847 = vpop.f32.mrf.mxu0
      %v848 = vadd.f32 0.0, %v847
      %849 = vmatmul.bf16.gmra.mxu0 %v828
      %v850 = vpop.f32.mrf.mxu0
      %v851 = vadd.f32 0.0, %v850
      %v852 = vpop.f32.mrf.mxu0
      %v853 = vadd.f32 0.0, %v852
      %854 = vmatmul.bf16.gmra.mxu0 %v831
      %v855 = vpop.f32.mrf.mxu0
      %v856 = vadd.f32 0.0, %v855
      %v857 = vpop.f32.mrf.mxu0
      %v858 = vadd.f32 0.0, %v857
      %859 = vmatmul.bf16.gmra.mxu0 %v834
      %v860 = vpop.f32.mrf.mxu0
      %v861 = vadd.f32 0.0, %v860
      %v862 = vpop.f32.mrf.mxu0
      %v863 = vadd.f32 0.0, %v862
      %864 = vdwg.mxu0
      %v865 = vld [vmem:[%s4 + $0x3] sm:$0x1]
      %v866 = vperm.slane %v865, 0
      %v867 = vmul.f32 %v846, %v866
      %v868 = vmul.f32 %v848, %v866
      %v869 = vmul.f32 %v851, %v866
      %v870 = vmul.f32 %v853, %v866
      %v871 = vmul.f32 %v856, %v866
      %v872 = vmul.f32 %v858, %v866
      %v873 = vmul.f32 %v861, %v866
      %v874 = vmul.f32 %v863, %v866
      %v875 = vadd.f32 %v787, %v867
      %v876 = vadd.f32 %v788, %v868
      %v877 = vadd.f32 %v789, %v869
      %v878 = vadd.f32 %v790, %v870
      %v879 = vadd.f32 %v791, %v871
      %v880 = vadd.f32 %v792, %v872
      %v881 = vadd.f32 %v793, %v873
      %v882 = vadd.f32 %v794, %v874
      %s883 = scalar_lea.vmem %s5, 128
      %v884 = vld [vmem:[%s883] sm:$0xf]
      %v885 = vld [vmem:[%s883 + $0x4] sm:$0xf]
      %v886 = vld [vmem:[%s883 + $0x8] sm:$0xf]
      %v887 = vld [vmem:[%s883 + $0xc] sm:$0xf]
      %v888 = vld [vmem:[%s883 + $0x10] sm:$0xf]
      %v889 = vld [vmem:[%s883 + $0x14] sm:$0xf]
      %v890 = vld [vmem:[%s883 + $0x18] sm:$0xf]
      %v891 = vld [vmem:[%s883 + $0x1c] sm:$0xf]
      %v900 = vunpack.c.l.b16 %v884
      %v901 = vunpack.c.l.b16 %v885
      %v902 = vunpack.c.l.b16 %v886
      %v903 = vunpack.c.l.b16 %v887
      %v904 = vunpack.c.l.b16 %v888
      %v905 = vunpack.c.l.b16 %v889
      %v906 = vunpack.c.l.b16 %v890
      %v907 = vunpack.c.l.b16 %v891
      %v908 = vpack.c.b16 %v901, %v900
      %v909 = vpack.c.b16 %v903, %v902
      %v910 = vpack.c.b16 %v905, %v904
      %v911 = vpack.c.b16 %v907, %v906
      %v913 = vsel %vm559, %v908, 0
      %v916 = vsel %vm559, %v909, 0
      %v919 = vsel %vm559, %v910, 0
      %v922 = vsel %vm559, %v911, 0
      %924 = vmatpush.bf16.msra.mxu0 0
      %925 = vmatpush.bf16.msra.mxu0 0
      %926 = vmatpush.bf16.msra.mxu0 0
      %927 = vmatpush.bf16.msra.mxu0 0
      %928 = vmatpush.bf16.msra.mxu0 %v530
      %929 = vmatpush.bf16.msra.mxu0 %v529
      %930 = vmatpush.bf16.msra.mxu0 %v528
      %931 = vmatpush.bf16.msra.mxu0 %v527
      %932 = vmatmul.bf16.gmra.mxu0 %v913
      %v933 = vpop.f32.mrf.mxu0
      %v934 = vadd.f32 0.0, %v933
      %v935 = vpop.f32.mrf.mxu0
      %v936 = vadd.f32 0.0, %v935
      %937 = vmatmul.bf16.gmra.mxu0 %v916
      %v938 = vpop.f32.mrf.mxu0
      %v939 = vadd.f32 0.0, %v938
      %v940 = vpop.f32.mrf.mxu0
      %v941 = vadd.f32 0.0, %v940
      %942 = vmatmul.bf16.gmra.mxu0 %v919
      %v943 = vpop.f32.mrf.mxu0
      %v944 = vadd.f32 0.0, %v943
      %v945 = vpop.f32.mrf.mxu0
      %v946 = vadd.f32 0.0, %v945
      %947 = vmatmul.bf16.gmra.mxu0 %v922
      %v948 = vpop.f32.mrf.mxu0
      %v949 = vadd.f32 0.0, %v948
      %v950 = vpop.f32.mrf.mxu0
      %v951 = vadd.f32 0.0, %v950
      %952 = vdwg.mxu0
      %v953 = vld [vmem:[%s4 + $0x4] sm:$0x1]
      %v954 = vperm.slane %v953, 0
      %v955 = vmul.f32 %v934, %v954
      %v956 = vmul.f32 %v936, %v954
      %v957 = vmul.f32 %v939, %v954
      %v958 = vmul.f32 %v941, %v954
      %v959 = vmul.f32 %v944, %v954
      %v960 = vmul.f32 %v946, %v954
      %v961 = vmul.f32 %v949, %v954
      %v962 = vmul.f32 %v951, %v954
      %v963 = vadd.f32 %v875, %v955
      %v964 = vadd.f32 %v876, %v956
      %v965 = vadd.f32 %v877, %v957
      %v966 = vadd.f32 %v878, %v958
      %v967 = vadd.f32 %v879, %v959
      %v968 = vadd.f32 %v880, %v960
      %v969 = vadd.f32 %v881, %v961
      %v970 = vadd.f32 %v882, %v962
      %s971 = scalar_lea.vmem %s5, 160
      %v972 = vld [vmem:[%s971] sm:$0xf]
      %v973 = vld [vmem:[%s971 + $0x4] sm:$0xf]
      %v974 = vld [vmem:[%s971 + $0x8] sm:$0xf]
      %v975 = vld [vmem:[%s971 + $0xc] sm:$0xf]
      %v976 = vld [vmem:[%s971 + $0x10] sm:$0xf]
      %v977 = vld [vmem:[%s971 + $0x14] sm:$0xf]
      %v978 = vld [vmem:[%s971 + $0x18] sm:$0xf]
      %v979 = vld [vmem:[%s971 + $0x1c] sm:$0xf]
      %v988 = vunpack.c.l.b16 %v972
      %v989 = vunpack.c.l.b16 %v973
      %v990 = vunpack.c.l.b16 %v974
      %v991 = vunpack.c.l.b16 %v975
      %v992 = vunpack.c.l.b16 %v976
      %v993 = vunpack.c.l.b16 %v977
      %v994 = vunpack.c.l.b16 %v978
      %v995 = vunpack.c.l.b16 %v979
      %v996 = vpack.c.b16 %v989, %v988
      %v997 = vpack.c.b16 %v991, %v990
      %v998 = vpack.c.b16 %v993, %v992
      %v999 = vpack.c.b16 %v995, %v994
      %v1001 = vsel %vm559, %v996, 0
      %v1004 = vsel %vm559, %v997, 0
      %v1007 = vsel %vm559, %v998, 0
      %v1010 = vsel %vm559, %v999, 0
      %1012 = vmatpush.bf16.msra.mxu0 0
      %1013 = vmatpush.bf16.msra.mxu0 0
      %1014 = vmatpush.bf16.msra.mxu0 0
      %1015 = vmatpush.bf16.msra.mxu0 0
      %1016 = vmatpush.bf16.msra.mxu0 %v530
      %1017 = vmatpush.bf16.msra.mxu0 %v529
      %1018 = vmatpush.bf16.msra.mxu0 %v528
      %1019 = vmatpush.bf16.msra.mxu0 %v527
      %1020 = vmatmul.bf16.gmra.mxu0 %v1001
      %v1021 = vpop.f32.mrf.mxu0
      %v1022 = vadd.f32 0.0, %v1021
      %v1023 = vpop.f32.mrf.mxu0
      %v1024 = vadd.f32 0.0, %v1023
      %1025 = vmatmul.bf16.gmra.mxu0 %v1004
      %v1026 = vpop.f32.mrf.mxu0
      %v1027 = vadd.f32 0.0, %v1026
      %v1028 = vpop.f32.mrf.mxu0
      %v1029 = vadd.f32 0.0, %v1028
      %1030 = vmatmul.bf16.gmra.mxu0 %v1007
      %v1031 = vpop.f32.mrf.mxu0
      %v1032 = vadd.f32 0.0, %v1031
      %v1033 = vpop.f32.mrf.mxu0
      %v1034 = vadd.f32 0.0, %v1033
      %1035 = vmatmul.bf16.gmra.mxu0 %v1010
      %v1036 = vpop.f32.mrf.mxu0
      %v1037 = vadd.f32 0.0, %v1036
      %v1038 = vpop.f32.mrf.mxu0
      %v1039 = vadd.f32 0.0, %v1038
      %1040 = vdwg.mxu0
      %v1041 = vld [vmem:[%s4 + $0x5] sm:$0x1]
      %v1042 = vperm.slane %v1041, 0
      %v1043 = vmul.f32 %v1022, %v1042
      %v1044 = vmul.f32 %v1024, %v1042
      %v1045 = vmul.f32 %v1027, %v1042
      %v1046 = vmul.f32 %v1029, %v1042
      %v1047 = vmul.f32 %v1032, %v1042
      %v1048 = vmul.f32 %v1034, %v1042
      %v1049 = vmul.f32 %v1037, %v1042
      %v1050 = vmul.f32 %v1039, %v1042
      %v1051 = vadd.f32 %v963, %v1043
      %v1052 = vadd.f32 %v964, %v1044
      %v1053 = vadd.f32 %v965, %v1045
      %v1054 = vadd.f32 %v966, %v1046
      %v1055 = vadd.f32 %v967, %v1047
      %v1056 = vadd.f32 %v968, %v1048
      %v1057 = vadd.f32 %v969, %v1049
      %v1058 = vadd.f32 %v970, %v1050
      %s1059 = scalar_lea.vmem %s5, 192
      %v1060 = vld [vmem:[%s1059] sm:$0xf]
      %v1061 = vld [vmem:[%s1059 + $0x4] sm:$0xf]
      %v1062 = vld [vmem:[%s1059 + $0x8] sm:$0xf]
      %v1063 = vld [vmem:[%s1059 + $0xc] sm:$0xf]
      %v1064 = vld [vmem:[%s1059 + $0x10] sm:$0xf]
      %v1065 = vld [vmem:[%s1059 + $0x14] sm:$0xf]
      %v1066 = vld [vmem:[%s1059 + $0x18] sm:$0xf]
      %v1067 = vld [vmem:[%s1059 + $0x1c] sm:$0xf]
      %v1076 = vunpack.c.l.b16 %v1060
      %v1077 = vunpack.c.l.b16 %v1061
      %v1078 = vunpack.c.l.b16 %v1062
      %v1079 = vunpack.c.l.b16 %v1063
      %v1080 = vunpack.c.l.b16 %v1064
      %v1081 = vunpack.c.l.b16 %v1065
      %v1082 = vunpack.c.l.b16 %v1066
      %v1083 = vunpack.c.l.b16 %v1067
      %v1084 = vpack.c.b16 %v1077, %v1076
      %v1085 = vpack.c.b16 %v1079, %v1078
      %v1086 = vpack.c.b16 %v1081, %v1080
      %v1087 = vpack.c.b16 %v1083, %v1082
      %v1089 = vsel %vm559, %v1084, 0
      %v1092 = vsel %vm559, %v1085, 0
      %v1095 = vsel %vm559, %v1086, 0
      %v1098 = vsel %vm559, %v1087, 0
      %1100 = vmatpush.bf16.msra.mxu0 0
      %1101 = vmatpush.bf16.msra.mxu0 0
      %1102 = vmatpush.bf16.msra.mxu0 0
      %1103 = vmatpush.bf16.msra.mxu0 0
      %1104 = vmatpush.bf16.msra.mxu0 %v530
      %1105 = vmatpush.bf16.msra.mxu0 %v529
      %1106 = vmatpush.bf16.msra.mxu0 %v528
      %1107 = vmatpush.bf16.msra.mxu0 %v527
      %1108 = vmatmul.bf16.gmra.mxu0 %v1089
      %v1109 = vpop.f32.mrf.mxu0
      %v1110 = vadd.f32 0.0, %v1109
      %v1111 = vpop.f32.mrf.mxu0
      %v1112 = vadd.f32 0.0, %v1111
      %1113 = vmatmul.bf16.gmra.mxu0 %v1092
      %v1114 = vpop.f32.mrf.mxu0
      %v1115 = vadd.f32 0.0, %v1114
      %v1116 = vpop.f32.mrf.mxu0
      %v1117 = vadd.f32 0.0, %v1116
      %1118 = vmatmul.bf16.gmra.mxu0 %v1095
      %v1119 = vpop.f32.mrf.mxu0
      %v1120 = vadd.f32 0.0, %v1119
      %v1121 = vpop.f32.mrf.mxu0
      %v1122 = vadd.f32 0.0, %v1121
      %1123 = vmatmul.bf16.gmra.mxu0 %v1098
      %v1124 = vpop.f32.mrf.mxu0
      %v1125 = vadd.f32 0.0, %v1124
      %v1126 = vpop.f32.mrf.mxu0
      %v1127 = vadd.f32 0.0, %v1126
      %1128 = vdwg.mxu0
      %v1129 = vld [vmem:[%s4 + $0x6] sm:$0x1]
      %v1130 = vperm.slane %v1129, 0
      %v1131 = vmul.f32 %v1110, %v1130
      %v1132 = vmul.f32 %v1112, %v1130
      %v1133 = vmul.f32 %v1115, %v1130
      %v1134 = vmul.f32 %v1117, %v1130
      %v1135 = vmul.f32 %v1120, %v1130
      %v1136 = vmul.f32 %v1122, %v1130
      %v1137 = vmul.f32 %v1125, %v1130
      %v1138 = vmul.f32 %v1127, %v1130
      %v1139 = vadd.f32 %v1051, %v1131
      %v1140 = vadd.f32 %v1052, %v1132
      %v1141 = vadd.f32 %v1053, %v1133
      %v1142 = vadd.f32 %v1054, %v1134
      %v1143 = vadd.f32 %v1055, %v1135
      %v1144 = vadd.f32 %v1056, %v1136
      %v1145 = vadd.f32 %v1057, %v1137
      %v1146 = vadd.f32 %v1058, %v1138
      %s1147 = scalar_lea.vmem %s5, 224
      %v1148 = vld [vmem:[%s1147] sm:$0xf]
      %v1149 = vld [vmem:[%s1147 + $0x4] sm:$0xf]
      %v1150 = vld [vmem:[%s1147 + $0x8] sm:$0xf]
      %v1151 = vld [vmem:[%s1147 + $0xc] sm:$0xf]
      %v1152 = vld [vmem:[%s1147 + $0x10] sm:$0xf]
      %v1153 = vld [vmem:[%s1147 + $0x14] sm:$0xf]
      %v1154 = vld [vmem:[%s1147 + $0x18] sm:$0xf]
      %v1155 = vld [vmem:[%s1147 + $0x1c] sm:$0xf]
      %v1164 = vunpack.c.l.b16 %v1148
      %v1165 = vunpack.c.l.b16 %v1149
      %v1166 = vunpack.c.l.b16 %v1150
      %v1167 = vunpack.c.l.b16 %v1151
      %v1168 = vunpack.c.l.b16 %v1152
      %v1169 = vunpack.c.l.b16 %v1153
      %v1170 = vunpack.c.l.b16 %v1154
      %v1171 = vunpack.c.l.b16 %v1155
      %v1172 = vpack.c.b16 %v1165, %v1164
      %v1173 = vpack.c.b16 %v1167, %v1166
      %v1174 = vpack.c.b16 %v1169, %v1168
      %v1175 = vpack.c.b16 %v1171, %v1170
      %v1177 = vsel %vm559, %v1172, 0
      %v1180 = vsel %vm559, %v1173, 0
      %v1183 = vsel %vm559, %v1174, 0
      %v1186 = vsel %vm559, %v1175, 0
      %1188 = vmatpush.bf16.msra.mxu0 0
      %1189 = vmatpush.bf16.msra.mxu0 0
      %1190 = vmatpush.bf16.msra.mxu0 0
      %1191 = vmatpush.bf16.msra.mxu0 0
      %1192 = vmatpush.bf16.msra.mxu0 %v530
      %1193 = vmatpush.bf16.msra.mxu0 %v529
      %1194 = vmatpush.bf16.msra.mxu0 %v528
      %1195 = vmatpush.bf16.msra.mxu0 %v527
      %1196 = vmatmul.bf16.gmra.mxu0 %v1177
      %v1197 = vpop.f32.mrf.mxu0
      %v1198 = vadd.f32 0.0, %v1197
      %v1199 = vpop.f32.mrf.mxu0
      %v1200 = vadd.f32 0.0, %v1199
      %1201 = vmatmul.bf16.gmra.mxu0 %v1180
      %v1202 = vpop.f32.mrf.mxu0
      %v1203 = vadd.f32 0.0, %v1202
      %v1204 = vpop.f32.mrf.mxu0
      %v1205 = vadd.f32 0.0, %v1204
      %1206 = vmatmul.bf16.gmra.mxu0 %v1183
      %v1207 = vpop.f32.mrf.mxu0
      %v1208 = vadd.f32 0.0, %v1207
      %v1209 = vpop.f32.mrf.mxu0
      %v1210 = vadd.f32 0.0, %v1209
      %1211 = vmatmul.bf16.gmra.mxu0 %v1186
      %v1212 = vpop.f32.mrf.mxu0
      %v1213 = vadd.f32 0.0, %v1212
      %v1214 = vpop.f32.mrf.mxu0
      %v1215 = vadd.f32 0.0, %v1214
      %1216 = vdwg.mxu0
      %v1217 = vld [vmem:[%s4 + $0x7] sm:$0x1]
      %v1218 = vperm.slane %v1217, 0
      %v1219 = vmul.f32 %v1198, %v1218
      %v1220 = vmul.f32 %v1200, %v1218
      %v1221 = vmul.f32 %v1203, %v1218
      %v1222 = vmul.f32 %v1205, %v1218
      %v1223 = vmul.f32 %v1208, %v1218
      %v1224 = vmul.f32 %v1210, %v1218
      %v1225 = vmul.f32 %v1213, %v1218
      %v1226 = vmul.f32 %v1215, %v1218
      %v1227 = vadd.f32 %v1139, %v1219
      %v1228 = vadd.f32 %v1140, %v1220
      %v1229 = vadd.f32 %v1141, %v1221
      %v1230 = vadd.f32 %v1142, %v1222
      %v1231 = vadd.f32 %v1143, %v1223
      %v1232 = vadd.f32 %v1144, %v1224
      %v1233 = vadd.f32 %v1145, %v1225
      %v1234 = vadd.f32 %v1146, %v1226
      %s1235 = scalar_lea.vmem %s5, 256
      %v1236 = vld [vmem:[%s1235] sm:$0xf]
      %v1237 = vld [vmem:[%s1235 + $0x4] sm:$0xf]
      %v1238 = vld [vmem:[%s1235 + $0x8] sm:$0xf]
      %v1239 = vld [vmem:[%s1235 + $0xc] sm:$0xf]
      %v1240 = vld [vmem:[%s1235 + $0x10] sm:$0xf]
      %v1241 = vld [vmem:[%s1235 + $0x14] sm:$0xf]
      %v1242 = vld [vmem:[%s1235 + $0x18] sm:$0xf]
      %v1243 = vld [vmem:[%s1235 + $0x1c] sm:$0xf]
      %v1252 = vunpack.c.l.b16 %v1236
      %v1253 = vunpack.c.l.b16 %v1237
      %v1254 = vunpack.c.l.b16 %v1238
      %v1255 = vunpack.c.l.b16 %v1239
      %v1256 = vunpack.c.l.b16 %v1240
      %v1257 = vunpack.c.l.b16 %v1241
      %v1258 = vunpack.c.l.b16 %v1242
      %v1259 = vunpack.c.l.b16 %v1243
      %v1260 = vpack.c.b16 %v1253, %v1252
      %v1261 = vpack.c.b16 %v1255, %v1254
      %v1262 = vpack.c.b16 %v1257, %v1256
      %v1263 = vpack.c.b16 %v1259, %v1258
      %v1265 = vsel %vm559, %v1260, 0
      %v1268 = vsel %vm559, %v1261, 0
      %v1271 = vsel %vm559, %v1262, 0
      %v1274 = vsel %vm559, %v1263, 0
      %1276 = vmatpush.bf16.msra.mxu0 0
      %1277 = vmatpush.bf16.msra.mxu0 0
      %1278 = vmatpush.bf16.msra.mxu0 0
      %1279 = vmatpush.bf16.msra.mxu0 0
      %1280 = vmatpush.bf16.msra.mxu0 %v530
      %1281 = vmatpush.bf16.msra.mxu0 %v529
      %1282 = vmatpush.bf16.msra.mxu0 %v528
      %1283 = vmatpush.bf16.msra.mxu0 %v527
      %1284 = vmatmul.bf16.gmra.mxu0 %v1265
      %v1285 = vpop.f32.mrf.mxu0
      %v1286 = vadd.f32 0.0, %v1285
      %v1287 = vpop.f32.mrf.mxu0
      %v1288 = vadd.f32 0.0, %v1287
      %1289 = vmatmul.bf16.gmra.mxu0 %v1268
      %v1290 = vpop.f32.mrf.mxu0
      %v1291 = vadd.f32 0.0, %v1290
      %v1292 = vpop.f32.mrf.mxu0
      %v1293 = vadd.f32 0.0, %v1292
      %1294 = vmatmul.bf16.gmra.mxu0 %v1271
      %v1295 = vpop.f32.mrf.mxu0
      %v1296 = vadd.f32 0.0, %v1295
      %v1297 = vpop.f32.mrf.mxu0
      %v1298 = vadd.f32 0.0, %v1297
      %1299 = vmatmul.bf16.gmra.mxu0 %v1274
      %v1300 = vpop.f32.mrf.mxu0
      %v1301 = vadd.f32 0.0, %v1300
      %v1302 = vpop.f32.mrf.mxu0
      %v1303 = vadd.f32 0.0, %v1302
      %1304 = vdwg.mxu0
      %v1305 = vld [vmem:[%s4 + $0x8] sm:$0x1]
      %v1306 = vperm.slane %v1305, 0
      %v1307 = vmul.f32 %v1286, %v1306
      %v1308 = vmul.f32 %v1288, %v1306
      %v1309 = vmul.f32 %v1291, %v1306
      %v1310 = vmul.f32 %v1293, %v1306
      %v1311 = vmul.f32 %v1296, %v1306
      %v1312 = vmul.f32 %v1298, %v1306
      %v1313 = vmul.f32 %v1301, %v1306
      %v1314 = vmul.f32 %v1303, %v1306
      %v1315 = vadd.f32 %v1227, %v1307
      %v1316 = vadd.f32 %v1228, %v1308
      %v1317 = vadd.f32 %v1229, %v1309
      %v1318 = vadd.f32 %v1230, %v1310
      %v1319 = vadd.f32 %v1231, %v1311
      %v1320 = vadd.f32 %v1232, %v1312
      %v1321 = vadd.f32 %v1233, %v1313
      %v1322 = vadd.f32 %v1234, %v1314
      %v1323 = vld [vmem:[%s3 + $0x1] sm:$0x1]
      %v1324 = vperm.slane %v1323, 0
      %v1325 = vadd.f32 %v1315, %v1324
      %v1326 = vadd.f32 %v1316, %v1324
      %v1327 = vadd.f32 %v1317, %v1324
      %v1328 = vadd.f32 %v1318, %v1324
      %v1329 = vadd.f32 %v1319, %v1324
      %v1330 = vadd.f32 %v1320, %v1324
      %v1331 = vadd.f32 %v1321, %v1324
      %v1332 = vadd.f32 %v1322, %v1324
      %v1333 = vmax.f32 %v1325, 0.0
      %v1334 = vmax.f32 %v1326, 0.0
      %v1335 = vmax.f32 %v1327, 0.0
      %v1336 = vmax.f32 %v1328, 0.0
      %v1337 = vmax.f32 %v1329, 0.0
      %v1338 = vmax.f32 %v1330, 0.0
      %v1339 = vmax.f32 %v1331, 0.0
      %v1340 = vmax.f32 %v1332, 0.0
      %v1341 = vpack.c.bf16 %v1334, %v1333
      %v1342 = vpack.c.bf16 %v1336, %v1335
      %v1343 = vpack.c.bf16 %v1338, %v1337
      %v1344 = vpack.c.bf16 %v1340, %v1339
      %v1345 = vld [vmem:[%s2] sm:$0xf]
      %v1346 = vld [vmem:[%s2 + $0x4] sm:$0xf]
      %v1347 = vld [vmem:[%s2 + $0x8] sm:$0xf]
      %v1348 = vld [vmem:[%s2 + $0xc] sm:$0xf]
      %v1349 = vld [vmem:[%s2 + $0x10] sm:$0xf]
      %v1350 = vld [vmem:[%s2 + $0x14] sm:$0xf]
      %v1351 = vld [vmem:[%s2 + $0x18] sm:$0xf]
      %v1352 = vld [vmem:[%s2 + $0x1c] sm:$0xf]
      %v1353 = vld [vmem:[%s2 + $0x20] sm:$0xf]
      %v1354 = vld [vmem:[%s2 + $0x24] sm:$0xf]
      %v1355 = vld [vmem:[%s2 + $0x28] sm:$0xf]
      %v1356 = vld [vmem:[%s2 + $0x2c] sm:$0xf]
      %v1357 = vld [vmem:[%s2 + $0x30] sm:$0xf]
      %v1358 = vld [vmem:[%s2 + $0x34] sm:$0xf]
      %v1359 = vld [vmem:[%s2 + $0x38] sm:$0xf]
      %v1360 = vld [vmem:[%s2 + $0x3c] sm:$0xf]
      %v1361 = vld [vmem:[%s3 + $0x2] sm:$0x1]
      %v1362 = vperm.slane %v1361, 0
      %v1379 = vunpack.c.l.b16 %v1345
      %v1380 = vunpack.c.l.b16 %v1346
      %v1381 = vunpack.c.l.b16 %v1347
      %v1382 = vunpack.c.l.b16 %v1348
      %v1383 = vunpack.c.l.b16 %v1349
      %v1384 = vunpack.c.l.b16 %v1350
      %v1385 = vunpack.c.l.b16 %v1351
      %v1386 = vunpack.c.l.b16 %v1352
      %v1387 = vunpack.c.l.b16 %v1353
      %v1388 = vunpack.c.l.b16 %v1354
      %v1389 = vunpack.c.l.b16 %v1355
      %v1390 = vunpack.c.l.b16 %v1356
      %v1391 = vunpack.c.l.b16 %v1357
      %v1392 = vunpack.c.l.b16 %v1358
      %v1393 = vunpack.c.l.b16 %v1359
      %v1394 = vunpack.c.l.b16 %v1360
      %v1395 = vpack.c.b16 %v1380, %v1379
      %v1396 = vpack.c.b16 %v1382, %v1381
      %v1397 = vpack.c.b16 %v1384, %v1383
      %v1398 = vpack.c.b16 %v1386, %v1385
      %v1399 = vpack.c.b16 %v1388, %v1387
      %v1400 = vpack.c.b16 %v1390, %v1389
      %v1401 = vpack.c.b16 %v1392, %v1391
      %v1402 = vpack.c.b16 %v1394, %v1393
      %1411 = vmatpush.bf16.msra.mxu0 %v1402
      %1412 = vmatpush.bf16.msra.mxu0 %v1401
      %1413 = vmatpush.bf16.msra.mxu0 %v1400
      %1414 = vmatpush.bf16.msra.mxu0 %v1399
      %1415 = vmatpush.bf16.msra.mxu0 %v1398
      %1416 = vmatpush.bf16.msra.mxu0 %v1397
      %1417 = vmatpush.bf16.msra.mxu0 %v1396
      %1418 = vmatpush.bf16.msra.mxu0 %v1395
      %1419 = vmatmul.bf16.gmra.mxu0 %v1341
      %v1420 = vpop.f32.mrf.mxu0
      %v1421 = vadd.f32 %v1362, %v1420
      %v1422 = vpop.f32.mrf.mxu0
      %v1423 = vadd.f32 %v1362, %v1422
      %1424 = vmatmul.bf16.gmra.mxu0 %v1342
      %v1425 = vpop.f32.mrf.mxu0
      %v1426 = vadd.f32 %v1362, %v1425
      %v1427 = vpop.f32.mrf.mxu0
      %v1428 = vadd.f32 %v1362, %v1427
      %1429 = vmatmul.bf16.gmra.mxu0 %v1343
      %v1430 = vpop.f32.mrf.mxu0
      %v1431 = vadd.f32 %v1362, %v1430
      %v1432 = vpop.f32.mrf.mxu0
      %v1433 = vadd.f32 %v1362, %v1432
      %1434 = vmatmul.bf16.gmra.mxu0 %v1344
      %v1435 = vpop.f32.mrf.mxu0
      %v1436 = vadd.f32 %v1362, %v1435
      %v1437 = vpop.f32.mrf.mxu0
      %v1438 = vadd.f32 %v1362, %v1437
      %1439 = vdwg.mxu0
      %v1440 = vadd.f32 %v1421, %v511
      %v1441 = vadd.f32 %v1423, %v512
      %v1442 = vadd.f32 %v1426, %v513
      %v1443 = vadd.f32 %v1428, %v514
      %v1444 = vadd.f32 %v1431, %v515
      %v1445 = vadd.f32 %v1433, %v516
      %v1446 = vadd.f32 %v1436, %v517
      %v1447 = vadd.f32 %v1438, %v518
      %1448 = vst [vmem:[%s412] sm:$0xff] %v1440
      %1449 = vst [vmem:[%s412 + $0x8] sm:$0xff] %v1441
      %1450 = vst [vmem:[%s412 + $0x10] sm:$0xff] %v1442
      %1451 = vst [vmem:[%s412 + $0x18] sm:$0xff] %v1443
      %1452 = vst [vmem:[%s412 + $0x20] sm:$0xff] %v1444
      %1453 = vst [vmem:[%s412 + $0x28] sm:$0xff] %v1445
      %1454 = vst [vmem:[%s412 + $0x30] sm:$0xff] %v1446
      %1455 = vst [vmem:[%s412 + $0x38] sm:$0xff] %v1447
      %v1456 = vpack.c.bf16 %v1441, %v1440
      %v1457 = vpack.c.bf16 %v1443, %v1442
      %v1458 = vpack.c.bf16 %v1445, %v1444
      %v1459 = vpack.c.bf16 %v1447, %v1446
      %s1460 = scalar_lea.vmem %s2, 64
      %v1461 = vld [vmem:[%s1460] sm:$0xf]
      %v1462 = vld [vmem:[%s1460 + $0x4] sm:$0xf]
      %v1463 = vld [vmem:[%s1460 + $0x8] sm:$0xf]
      %v1464 = vld [vmem:[%s1460 + $0xc] sm:$0xf]
      %v1465 = vld [vmem:[%s1460 + $0x10] sm:$0xf]
      %v1466 = vld [vmem:[%s1460 + $0x14] sm:$0xf]
      %v1467 = vld [vmem:[%s1460 + $0x18] sm:$0xf]
      %v1468 = vld [vmem:[%s1460 + $0x1c] sm:$0xf]
      %v1469 = vld [vmem:[%s1460 + $0x20] sm:$0xf]
      %v1470 = vld [vmem:[%s1460 + $0x24] sm:$0xf]
      %v1471 = vld [vmem:[%s1460 + $0x28] sm:$0xf]
      %v1472 = vld [vmem:[%s1460 + $0x2c] sm:$0xf]
      %v1473 = vld [vmem:[%s1460 + $0x30] sm:$0xf]
      %v1474 = vld [vmem:[%s1460 + $0x34] sm:$0xf]
      %v1475 = vld [vmem:[%s1460 + $0x38] sm:$0xf]
      %v1476 = vld [vmem:[%s1460 + $0x3c] sm:$0xf]
      %v1477 = vld [vmem:[%s3 + $0x3] sm:$0x1]
      %v1478 = vperm.slane %v1477, 0
      %v1495 = vunpack.c.l.b16 %v1461
      %v1496 = vunpack.c.l.b16 %v1462
      %v1497 = vunpack.c.l.b16 %v1463
      %v1498 = vunpack.c.l.b16 %v1464
      %v1499 = vunpack.c.l.b16 %v1465
      %v1500 = vunpack.c.l.b16 %v1466
      %v1501 = vunpack.c.l.b16 %v1467
      %v1502 = vunpack.c.l.b16 %v1468
      %v1503 = vunpack.c.l.b16 %v1469
      %v1504 = vunpack.c.l.b16 %v1470
      %v1505 = vunpack.c.l.b16 %v1471
      %v1506 = vunpack.c.l.b16 %v1472
      %v1507 = vunpack.c.l.b16 %v1473
      %v1508 = vunpack.c.l.b16 %v1474
      %v1509 = vunpack.c.l.b16 %v1475
      %v1510 = vunpack.c.l.b16 %v1476
      %v1511 = vpack.c.b16 %v1496, %v1495
      %v1512 = vpack.c.b16 %v1498, %v1497
      %v1513 = vpack.c.b16 %v1500, %v1499
      %v1514 = vpack.c.b16 %v1502, %v1501
      %v1515 = vpack.c.b16 %v1504, %v1503
      %v1516 = vpack.c.b16 %v1506, %v1505
      %v1517 = vpack.c.b16 %v1508, %v1507
      %v1518 = vpack.c.b16 %v1510, %v1509
      %1527 = vmatpush.bf16.msra.mxu0 %v1518
      %1528 = vmatpush.bf16.msra.mxu0 %v1517
      %1529 = vmatpush.bf16.msra.mxu0 %v1516
      %1530 = vmatpush.bf16.msra.mxu0 %v1515
      %1531 = vmatpush.bf16.msra.mxu0 %v1514
      %1532 = vmatpush.bf16.msra.mxu0 %v1513
      %1533 = vmatpush.bf16.msra.mxu0 %v1512
      %1534 = vmatpush.bf16.msra.mxu0 %v1511
      %1535 = vmatmul.bf16.gmra.mxu0 %v1456
      %v1536 = vpop.f32.mrf.mxu0
      %v1537 = vadd.f32 %v1478, %v1536
      %v1538 = vpop.f32.mrf.mxu0
      %v1539 = vadd.f32 %v1478, %v1538
      %1540 = vmatmul.bf16.gmra.mxu0 %v1457
      %v1541 = vpop.f32.mrf.mxu0
      %v1542 = vadd.f32 %v1478, %v1541
      %v1543 = vpop.f32.mrf.mxu0
      %v1544 = vadd.f32 %v1478, %v1543
      %1545 = vmatmul.bf16.gmra.mxu0 %v1458
      %v1546 = vpop.f32.mrf.mxu0
      %v1547 = vadd.f32 %v1478, %v1546
      %v1548 = vpop.f32.mrf.mxu0
      %v1549 = vadd.f32 %v1478, %v1548
      %1550 = vmatmul.bf16.gmra.mxu0 %v1459
      %v1551 = vpop.f32.mrf.mxu0
      %v1552 = vadd.f32 %v1478, %v1551
      %v1553 = vpop.f32.mrf.mxu0
      %v1554 = vadd.f32 %v1478, %v1553
      %1555 = vdwg.mxu0
      %v1556 = vmax.f32 %v1537, 0.0
      %v1557 = vmax.f32 %v1539, 0.0
      %v1558 = vmax.f32 %v1542, 0.0
      %v1559 = vmax.f32 %v1544, 0.0
      %v1560 = vmax.f32 %v1547, 0.0
      %v1561 = vmax.f32 %v1549, 0.0
      %v1562 = vmax.f32 %v1552, 0.0
      %v1563 = vmax.f32 %v1554, 0.0
      %v1564 = vpack.c.bf16 %v1557, %v1556
      %v1565 = vpack.c.bf16 %v1559, %v1558
      %v1566 = vpack.c.bf16 %v1561, %v1560
      %v1567 = vpack.c.bf16 %v1563, %v1562
      %v1568 = vld [vmem:[%s6] sm:$0xf]
      %v1569 = vld [vmem:[%s6 + $0x4] sm:$0xf]
      %v1572 = vunpack.c.l.b16 %v1568
      %v1573 = vunpack.c.l.b16 %v1569
      %v1574 = vpack.c.b16 %v1573, %v1572
      %v1576 = vsel %vm559, %v1574, 0
      %1578 = vmatpush.bf16.msra.mxu0 0
      %1579 = vmatpush.bf16.msra.mxu0 0
      %1580 = vmatpush.bf16.msra.mxu0 0
      %1581 = vmatpush.bf16.msra.mxu0 0
      %1582 = vmatpush.bf16.msra.mxu0 %v1567
      %1583 = vmatpush.bf16.msra.mxu0 %v1566
      %1584 = vmatpush.bf16.msra.mxu0 %v1565
      %1585 = vmatpush.bf16.msra.mxu0 %v1564
      %1586 = vmatmul.bf16.gmra.mxu0 %v1576
      %v1587 = vpop.f32.mrf.mxu0
      %v1588 = vadd.f32 0.0, %v1587
      %v1589 = vpop.f32.mrf.mxu0
      %v1590 = vadd.f32 0.0, %v1589
      %1591 = vdwg.mxu0
      %v1592 = vld [vmem:[%s4 + $0x9] sm:$0x1]
      %v1593 = vperm.slane %v1592, 0
      %v1594 = vmul.f32 %v1588, %v1593
      %v1595 = vmul.f32 %v1590, %v1593
      %v1596 = vadd.f32 %v1594, 0.0
      %v1597 = vadd.f32 %v1595, 0.0
      %s1598 = scalar_lea.vmem %s6, 8
      %v1599 = vld [vmem:[%s1598] sm:$0xf]
      %v1600 = vld [vmem:[%s1598 + $0x4] sm:$0xf]
      %v1603 = vunpack.c.l.b16 %v1599
      %v1604 = vunpack.c.l.b16 %v1600
      %v1605 = vpack.c.b16 %v1604, %v1603
      %v1607 = vsel %vm559, %v1605, 0
      %1609 = vmatpush.bf16.msra.mxu0 0
      %1610 = vmatpush.bf16.msra.mxu0 0
      %1611 = vmatpush.bf16.msra.mxu0 0
      %1612 = vmatpush.bf16.msra.mxu0 0
      %1613 = vmatpush.bf16.msra.mxu0 %v1567
      %1614 = vmatpush.bf16.msra.mxu0 %v1566
      %1615 = vmatpush.bf16.msra.mxu0 %v1565
      %1616 = vmatpush.bf16.msra.mxu0 %v1564
      %1617 = vmatmul.bf16.gmra.mxu0 %v1607
      %v1618 = vpop.f32.mrf.mxu0
      %v1619 = vadd.f32 0.0, %v1618
      %v1620 = vpop.f32.mrf.mxu0
      %v1621 = vadd.f32 0.0, %v1620
      %1622 = vdwg.mxu0
      %v1623 = vld [vmem:[%s4 + $0xa] sm:$0x1]
      %v1624 = vperm.slane %v1623, 0
      %v1625 = vmul.f32 %v1619, %v1624
      %v1626 = vmul.f32 %v1621, %v1624
      %v1627 = vadd.f32 %v1596, %v1625
      %v1628 = vadd.f32 %v1597, %v1626
      %s1629 = scalar_lea.vmem %s6, 16
      %v1630 = vld [vmem:[%s1629] sm:$0xf]
      %v1631 = vld [vmem:[%s1629 + $0x4] sm:$0xf]
      %v1634 = vunpack.c.l.b16 %v1630
      %v1635 = vunpack.c.l.b16 %v1631
      %v1636 = vpack.c.b16 %v1635, %v1634
      %v1638 = vsel %vm559, %v1636, 0
      %1640 = vmatpush.bf16.msra.mxu0 0
      %1641 = vmatpush.bf16.msra.mxu0 0
      %1642 = vmatpush.bf16.msra.mxu0 0
      %1643 = vmatpush.bf16.msra.mxu0 0
      %1644 = vmatpush.bf16.msra.mxu0 %v1567
      %1645 = vmatpush.bf16.msra.mxu0 %v1566
      %1646 = vmatpush.bf16.msra.mxu0 %v1565
      %1647 = vmatpush.bf16.msra.mxu0 %v1564
      %1648 = vmatmul.bf16.gmra.mxu0 %v1638
      %v1649 = vpop.f32.mrf.mxu0
      %v1650 = vadd.f32 0.0, %v1649
      %v1651 = vpop.f32.mrf.mxu0
      %v1652 = vadd.f32 0.0, %v1651
      %1653 = vdwg.mxu0
      %v1654 = vld [vmem:[%s4 + $0xb] sm:$0x1]
      %v1655 = vperm.slane %v1654, 0
      %v1656 = vmul.f32 %v1650, %v1655
      %v1657 = vmul.f32 %v1652, %v1655
      %v1658 = vadd.f32 %v1627, %v1656
      %v1659 = vadd.f32 %v1628, %v1657
      %s1660 = scalar_lea.vmem %s6, 24
      %v1661 = vld [vmem:[%s1660] sm:$0xf]
      %v1662 = vld [vmem:[%s1660 + $0x4] sm:$0xf]
      %v1665 = vunpack.c.l.b16 %v1661
      %v1666 = vunpack.c.l.b16 %v1662
      %v1667 = vpack.c.b16 %v1666, %v1665
      %v1669 = vsel %vm559, %v1667, 0
      %1671 = vmatpush.bf16.msra.mxu0 0
      %1672 = vmatpush.bf16.msra.mxu0 0
      %1673 = vmatpush.bf16.msra.mxu0 0
      %1674 = vmatpush.bf16.msra.mxu0 0
      %1675 = vmatpush.bf16.msra.mxu0 %v1567
      %1676 = vmatpush.bf16.msra.mxu0 %v1566
      %1677 = vmatpush.bf16.msra.mxu0 %v1565
      %1678 = vmatpush.bf16.msra.mxu0 %v1564
      %1679 = vmatmul.bf16.gmra.mxu0 %v1669
      %v1680 = vpop.f32.mrf.mxu0
      %v1681 = vadd.f32 0.0, %v1680
      %v1682 = vpop.f32.mrf.mxu0
      %v1683 = vadd.f32 0.0, %v1682
      %1684 = vdwg.mxu0
      %v1685 = vld [vmem:[%s4 + $0xc] sm:$0x1]
      %v1686 = vperm.slane %v1685, 0
      %v1687 = vmul.f32 %v1681, %v1686
      %v1688 = vmul.f32 %v1683, %v1686
      %v1689 = vadd.f32 %v1658, %v1687
      %v1690 = vadd.f32 %v1659, %v1688
      %s1691 = scalar_lea.vmem %s6, 32
      %v1692 = vld [vmem:[%s1691] sm:$0xf]
      %v1693 = vld [vmem:[%s1691 + $0x4] sm:$0xf]
      %v1696 = vunpack.c.l.b16 %v1692
      %v1697 = vunpack.c.l.b16 %v1693
      %v1698 = vpack.c.b16 %v1697, %v1696
      %v1700 = vsel %vm559, %v1698, 0
      %1702 = vmatpush.bf16.msra.mxu0 0
      %1703 = vmatpush.bf16.msra.mxu0 0
      %1704 = vmatpush.bf16.msra.mxu0 0
      %1705 = vmatpush.bf16.msra.mxu0 0
      %1706 = vmatpush.bf16.msra.mxu0 %v1567
      %1707 = vmatpush.bf16.msra.mxu0 %v1566
      %1708 = vmatpush.bf16.msra.mxu0 %v1565
      %1709 = vmatpush.bf16.msra.mxu0 %v1564
      %1710 = vmatmul.bf16.gmra.mxu0 %v1700
      %v1711 = vpop.f32.mrf.mxu0
      %v1712 = vadd.f32 0.0, %v1711
      %v1713 = vpop.f32.mrf.mxu0
      %v1714 = vadd.f32 0.0, %v1713
      %1715 = vdwg.mxu0
      %v1716 = vld [vmem:[%s4 + $0xd] sm:$0x1]
      %v1717 = vperm.slane %v1716, 0
      %v1718 = vmul.f32 %v1712, %v1717
      %v1719 = vmul.f32 %v1714, %v1717
      %v1720 = vadd.f32 %v1689, %v1718
      %v1721 = vadd.f32 %v1690, %v1719
      %s1722 = scalar_lea.vmem %s6, 40
      %v1723 = vld [vmem:[%s1722] sm:$0xf]
      %v1724 = vld [vmem:[%s1722 + $0x4] sm:$0xf]
      %v1727 = vunpack.c.l.b16 %v1723
      %v1728 = vunpack.c.l.b16 %v1724
      %v1729 = vpack.c.b16 %v1728, %v1727
      %v1731 = vsel %vm559, %v1729, 0
      %1733 = vmatpush.bf16.msra.mxu0 0
      %1734 = vmatpush.bf16.msra.mxu0 0
      %1735 = vmatpush.bf16.msra.mxu0 0
      %1736 = vmatpush.bf16.msra.mxu0 0
      %1737 = vmatpush.bf16.msra.mxu0 %v1567
      %1738 = vmatpush.bf16.msra.mxu0 %v1566
      %1739 = vmatpush.bf16.msra.mxu0 %v1565
      %1740 = vmatpush.bf16.msra.mxu0 %v1564
      %1741 = vmatmul.bf16.gmra.mxu0 %v1731
      %v1742 = vpop.f32.mrf.mxu0
      %v1743 = vadd.f32 0.0, %v1742
      %v1744 = vpop.f32.mrf.mxu0
      %v1745 = vadd.f32 0.0, %v1744
      %1746 = vdwg.mxu0
      %v1747 = vld [vmem:[%s4 + $0xe] sm:$0x1]
      %v1748 = vperm.slane %v1747, 0
      %v1749 = vmul.f32 %v1743, %v1748
      %v1750 = vmul.f32 %v1745, %v1748
      %v1751 = vadd.f32 %v1720, %v1749
      %v1752 = vadd.f32 %v1721, %v1750
      %s1753 = scalar_lea.vmem %s6, 48
      %v1754 = vld [vmem:[%s1753] sm:$0xf]
      %v1755 = vld [vmem:[%s1753 + $0x4] sm:$0xf]
      %v1758 = vunpack.c.l.b16 %v1754
      %v1759 = vunpack.c.l.b16 %v1755
      %v1760 = vpack.c.b16 %v1759, %v1758
      %v1762 = vsel %vm559, %v1760, 0
      %1764 = vmatpush.bf16.msra.mxu0 0
      %1765 = vmatpush.bf16.msra.mxu0 0
      %1766 = vmatpush.bf16.msra.mxu0 0
      %1767 = vmatpush.bf16.msra.mxu0 0
      %1768 = vmatpush.bf16.msra.mxu0 %v1567
      %1769 = vmatpush.bf16.msra.mxu0 %v1566
      %1770 = vmatpush.bf16.msra.mxu0 %v1565
      %1771 = vmatpush.bf16.msra.mxu0 %v1564
      %1772 = vmatmul.bf16.gmra.mxu0 %v1762
      %v1773 = vpop.f32.mrf.mxu0
      %v1774 = vadd.f32 0.0, %v1773
      %v1775 = vpop.f32.mrf.mxu0
      %v1776 = vadd.f32 0.0, %v1775
      %1777 = vdwg.mxu0
      %v1778 = vld [vmem:[%s4 + $0xf] sm:$0x1]
      %v1779 = vperm.slane %v1778, 0
      %v1780 = vmul.f32 %v1774, %v1779
      %v1781 = vmul.f32 %v1776, %v1779
      %v1782 = vadd.f32 %v1751, %v1780
      %v1783 = vadd.f32 %v1752, %v1781
      %s1784 = scalar_lea.vmem %s6, 56
      %v1785 = vld [vmem:[%s1784] sm:$0xf]
      %v1786 = vld [vmem:[%s1784 + $0x4] sm:$0xf]
      %v1789 = vunpack.c.l.b16 %v1785
      %v1790 = vunpack.c.l.b16 %v1786
      %v1791 = vpack.c.b16 %v1790, %v1789
      %v1793 = vsel %vm559, %v1791, 0
      %1795 = vmatpush.bf16.msra.mxu0 0
      %1796 = vmatpush.bf16.msra.mxu0 0
      %1797 = vmatpush.bf16.msra.mxu0 0
      %1798 = vmatpush.bf16.msra.mxu0 0
      %1799 = vmatpush.bf16.msra.mxu0 %v1567
      %1800 = vmatpush.bf16.msra.mxu0 %v1566
      %1801 = vmatpush.bf16.msra.mxu0 %v1565
      %1802 = vmatpush.bf16.msra.mxu0 %v1564
      %1803 = vmatmul.bf16.gmra.mxu0 %v1793
      %v1804 = vpop.f32.mrf.mxu0
      %v1805 = vadd.f32 0.0, %v1804
      %v1806 = vpop.f32.mrf.mxu0
      %v1807 = vadd.f32 0.0, %v1806
      %1808 = vdwg.mxu0
      %v1809 = vld [vmem:[%s4 + $0x10] sm:$0x1]
      %v1810 = vperm.slane %v1809, 0
      %v1811 = vmul.f32 %v1805, %v1810
      %v1812 = vmul.f32 %v1807, %v1810
      %v1813 = vadd.f32 %v1782, %v1811
      %v1814 = vadd.f32 %v1783, %v1812
      %s1815 = scalar_lea.vmem %s6, 64
      %v1816 = vld [vmem:[%s1815] sm:$0xf]
      %v1817 = vld [vmem:[%s1815 + $0x4] sm:$0xf]
      %v1820 = vunpack.c.l.b16 %v1816
      %v1821 = vunpack.c.l.b16 %v1817
      %v1822 = vpack.c.b16 %v1821, %v1820
      %v1824 = vsel %vm559, %v1822, 0
      %1826 = vmatpush.bf16.msra.mxu0 0
      %1827 = vmatpush.bf16.msra.mxu0 0
      %1828 = vmatpush.bf16.msra.mxu0 0
      %1829 = vmatpush.bf16.msra.mxu0 0
      %1830 = vmatpush.bf16.msra.mxu0 %v1567
      %1831 = vmatpush.bf16.msra.mxu0 %v1566
      %1832 = vmatpush.bf16.msra.mxu0 %v1565
      %1833 = vmatpush.bf16.msra.mxu0 %v1564
      %1834 = vmatmul.bf16.gmra.mxu0 %v1824
      %v1835 = vpop.f32.mrf.mxu0
      %v1836 = vadd.f32 0.0, %v1835
      %v1837 = vpop.f32.mrf.mxu0
      %v1838 = vadd.f32 0.0, %v1837
      %1839 = vdwg.mxu0
      %v1840 = vld [vmem:[%s4 + $0x11] sm:$0x1]
      %v1841 = vperm.slane %v1840, 0
      %v1842 = vmul.f32 %v1836, %v1841
      %v1843 = vmul.f32 %v1838, %v1841
      %v1844 = vadd.f32 %v1813, %v1842
      %v1845 = vadd.f32 %v1814, %v1843
      %v1846 = vld [vmem:[%s3 + $0x4] sm:$0x1]
      %v1847 = vperm.slane %v1846, 0
      %v1848 = vadd.f32 %v1844, %v1847
      %v1849 = vadd.f32 %v1845, %v1847
      %v1850 = vmax.f32 %v1848, 0.0
      %v1851 = vmax.f32 %v1849, 0.0
      %v1852 = vpack.c.bf16 %v1851, %v1850
      %s1853 = scalar_lea.vmem %s2, 128
      %v1854 = vld [vmem:[%s1853] sm:$0xf]
      %v1855 = vld [vmem:[%s1853 + $0x4] sm:$0xf]
      %v1856 = vld [vmem:[%s1853 + $0x8] sm:$0xf]
      %v1857 = vld [vmem:[%s1853 + $0xc] sm:$0xf]
      %v1858 = vld [vmem:[%s1853 + $0x10] sm:$0xf]
      %v1859 = vld [vmem:[%s1853 + $0x14] sm:$0xf]
      %v1860 = vld [vmem:[%s1853 + $0x18] sm:$0xf]
      %v1861 = vld [vmem:[%s1853 + $0x1c] sm:$0xf]
      %v1862 = vld [vmem:[%s1853 + $0x20] sm:$0xf]
      %v1863 = vld [vmem:[%s1853 + $0x24] sm:$0xf]
      %v1864 = vld [vmem:[%s1853 + $0x28] sm:$0xf]
      %v1865 = vld [vmem:[%s1853 + $0x2c] sm:$0xf]
      %v1866 = vld [vmem:[%s1853 + $0x30] sm:$0xf]
      %v1867 = vld [vmem:[%s1853 + $0x34] sm:$0xf]
      %v1868 = vld [vmem:[%s1853 + $0x38] sm:$0xf]
      %v1869 = vld [vmem:[%s1853 + $0x3c] sm:$0xf]
      %v1870 = vld [vmem:[%s3 + $0x5] sm:$0x1]
      %v1871 = vperm.slane %v1870, 0
      %v1888 = vunpack.c.l.b16 %v1854
      %v1889 = vunpack.c.l.b16 %v1855
      %v1890 = vunpack.c.l.b16 %v1856
      %v1891 = vunpack.c.l.b16 %v1857
      %v1892 = vunpack.c.l.b16 %v1858
      %v1893 = vunpack.c.l.b16 %v1859
      %v1894 = vunpack.c.l.b16 %v1860
      %v1895 = vunpack.c.l.b16 %v1861
      %v1896 = vunpack.c.l.b16 %v1862
      %v1897 = vunpack.c.l.b16 %v1863
      %v1898 = vunpack.c.l.b16 %v1864
      %v1899 = vunpack.c.l.b16 %v1865
      %v1900 = vunpack.c.l.b16 %v1866
      %v1901 = vunpack.c.l.b16 %v1867
      %v1902 = vunpack.c.l.b16 %v1868
      %v1903 = vunpack.c.l.b16 %v1869
      %v1904 = vpack.c.b16 %v1889, %v1888
      %v1905 = vpack.c.b16 %v1891, %v1890
      %v1906 = vpack.c.b16 %v1893, %v1892
      %v1907 = vpack.c.b16 %v1895, %v1894
      %v1908 = vpack.c.b16 %v1897, %v1896
      %v1909 = vpack.c.b16 %v1899, %v1898
      %v1910 = vpack.c.b16 %v1901, %v1900
      %v1911 = vpack.c.b16 %v1903, %v1902
      %1920 = vmatpush.bf16.msra.mxu0 %v1911
      %1921 = vmatpush.bf16.msra.mxu0 %v1910
      %1922 = vmatpush.bf16.msra.mxu0 %v1909
      %1923 = vmatpush.bf16.msra.mxu0 %v1908
      %1924 = vmatpush.bf16.msra.mxu0 %v1907
      %1925 = vmatpush.bf16.msra.mxu0 %v1906
      %1926 = vmatpush.bf16.msra.mxu0 %v1905
      %1927 = vmatpush.bf16.msra.mxu0 %v1904
      %1928 = vmatmul.bf16.gmra.mxu0 %v1852
      %v1929 = vpop.f32.mrf.mxu0
      %v1930 = vadd.f32 %v1871, %v1929
      %v1931 = vpop.f32.mrf.mxu0
      %v1932 = vadd.f32 %v1871, %v1931
      %1933 = vdwg.mxu0
      %1934 = vst [vmem:[%s417] sm:$0xff] %v1930
      %1935 = vst [vmem:[%s417 + $0x8] sm:$0xff] %v1932
      %v1936 = vpack.c.bf16 %v1932, %v1930
      %s1937 = scalar_lea.vmem %s2, 192
      %v1938 = vld [vmem:[%s1937] sm:$0xf]
      %v1939 = vld [vmem:[%s1937 + $0x4] sm:$0xf]
      %v1940 = vld [vmem:[%s1937 + $0x8] sm:$0xf]
      %v1941 = vld [vmem:[%s1937 + $0xc] sm:$0xf]
      %v1942 = vld [vmem:[%s1937 + $0x10] sm:$0xf]
      %v1943 = vld [vmem:[%s1937 + $0x14] sm:$0xf]
      %v1944 = vld [vmem:[%s1937 + $0x18] sm:$0xf]
      %v1945 = vld [vmem:[%s1937 + $0x1c] sm:$0xf]
      %v1946 = vld [vmem:[%s1937 + $0x20] sm:$0xf]
      %v1947 = vld [vmem:[%s1937 + $0x24] sm:$0xf]
      %v1948 = vld [vmem:[%s1937 + $0x28] sm:$0xf]
      %v1949 = vld [vmem:[%s1937 + $0x2c] sm:$0xf]
      %v1950 = vld [vmem:[%s1937 + $0x30] sm:$0xf]
      %v1951 = vld [vmem:[%s1937 + $0x34] sm:$0xf]
      %v1952 = vld [vmem:[%s1937 + $0x38] sm:$0xf]
      %v1953 = vld [vmem:[%s1937 + $0x3c] sm:$0xf]
      %v1954 = vld [vmem:[%s3 + $0x6] sm:$0x1]
      %v1955 = vperm.slane %v1954, 0
      %v1972 = vunpack.c.l.b16 %v1938
      %v1973 = vunpack.c.l.b16 %v1939
      %v1974 = vunpack.c.l.b16 %v1940
      %v1975 = vunpack.c.l.b16 %v1941
      %v1976 = vunpack.c.l.b16 %v1942
      %v1977 = vunpack.c.l.b16 %v1943
      %v1978 = vunpack.c.l.b16 %v1944
      %v1979 = vunpack.c.l.b16 %v1945
      %v1980 = vunpack.c.l.b16 %v1946
      %v1981 = vunpack.c.l.b16 %v1947
      %v1982 = vunpack.c.l.b16 %v1948
      %v1983 = vunpack.c.l.b16 %v1949
      %v1984 = vunpack.c.l.b16 %v1950
      %v1985 = vunpack.c.l.b16 %v1951
      %v1986 = vunpack.c.l.b16 %v1952
      %v1987 = vunpack.c.l.b16 %v1953
      %v1988 = vpack.c.b16 %v1973, %v1972
      %v1989 = vpack.c.b16 %v1975, %v1974
      %v1990 = vpack.c.b16 %v1977, %v1976
      %v1991 = vpack.c.b16 %v1979, %v1978
      %v1992 = vpack.c.b16 %v1981, %v1980
      %v1993 = vpack.c.b16 %v1983, %v1982
      %v1994 = vpack.c.b16 %v1985, %v1984
      %v1995 = vpack.c.b16 %v1987, %v1986
      %2004 = vmatpush.bf16.msra.mxu0 %v1995
      %2005 = vmatpush.bf16.msra.mxu0 %v1994
      %2006 = vmatpush.bf16.msra.mxu0 %v1993
      %2007 = vmatpush.bf16.msra.mxu0 %v1992
      %2008 = vmatpush.bf16.msra.mxu0 %v1991
      %2009 = vmatpush.bf16.msra.mxu0 %v1990
      %2010 = vmatpush.bf16.msra.mxu0 %v1989
      %2011 = vmatpush.bf16.msra.mxu0 %v1988
      %2012 = vmatmul.bf16.gmra.mxu0 %v1936
      %v2013 = vpop.f32.mrf.mxu0
      %v2014 = vadd.f32 %v1955, %v2013
      %v2015 = vpop.f32.mrf.mxu0
      %v2016 = vadd.f32 %v1955, %v2015
      %2017 = vdwg.mxu0
      %v2018 = vmax.f32 %v2014, 0.0
      %v2019 = vmax.f32 %v2016, 0.0
      %v2020 = vpack.c.bf16 %v2019, %v2018
      %v2021 = vld [vmem:[%s7] sm:$0x3]
      %vm2022 = vcmask 130048
      %v2024 = vsel %vm2022, %v2021, 0
      %2026 = vmatpush.bf16.msra.mxu0 0
      %2027 = vmatpush.bf16.msra.mxu0 0
      %2028 = vmatpush.bf16.msra.mxu0 0
      %2029 = vmatpush.bf16.msra.mxu0 0
      %2030 = vmatpush.bf16.msra.mxu0 0
      %2031 = vmatpush.bf16.msra.mxu0 0
      %2032 = vmatpush.bf16.msra.mxu0 0
      %2033 = vmatpush.bf16.msra.mxu0 %v2020
      %2034 = vmatmul.bf16.gmra.mxu0 %v2024
      %v2035 = vpop.f32.mrf.mxu0
      %v2036 = vadd.f32 0.0, %v2035
      %v2037 = vpop.f32.mrf.mxu0
      %2038 = vdwg.mxu0
      %v2039 = vld [vmem:[%s4 + $0x12] sm:$0x1]
      %v2040 = vperm.slane %v2039, 0
      %v2041 = vmul.f32 %v2036, %v2040
      %v2042 = vadd.f32 %v2041, 0.0
      %s2043 = scalar_lea.vmem %s7, 2
      %v2044 = vld [vmem:[%s2043] sm:$0x3]
      %v2046 = vsel %vm2022, %v2044, 0
      %2048 = vmatpush.bf16.msra.mxu0 0
      %2049 = vmatpush.bf16.msra.mxu0 0
      %2050 = vmatpush.bf16.msra.mxu0 0
      %2051 = vmatpush.bf16.msra.mxu0 0
      %2052 = vmatpush.bf16.msra.mxu0 0
      %2053 = vmatpush.bf16.msra.mxu0 0
      %2054 = vmatpush.bf16.msra.mxu0 0
      %2055 = vmatpush.bf16.msra.mxu0 %v2020
      %2056 = vmatmul.bf16.gmra.mxu0 %v2046
      %v2057 = vpop.f32.mrf.mxu0
      %v2058 = vadd.f32 0.0, %v2057
      %v2059 = vpop.f32.mrf.mxu0
      %2060 = vdwg.mxu0
      %v2061 = vld [vmem:[%s4 + $0x13] sm:$0x1]
      %v2062 = vperm.slane %v2061, 0
      %v2063 = vmul.f32 %v2058, %v2062
      %v2064 = vadd.f32 %v2042, %v2063
      %s2065 = scalar_lea.vmem %s7, 4
      %v2066 = vld [vmem:[%s2065] sm:$0x3]
      %v2068 = vsel %vm2022, %v2066, 0
      %2070 = vmatpush.bf16.msra.mxu0 0
      %2071 = vmatpush.bf16.msra.mxu0 0
      %2072 = vmatpush.bf16.msra.mxu0 0
      %2073 = vmatpush.bf16.msra.mxu0 0
      %2074 = vmatpush.bf16.msra.mxu0 0
      %2075 = vmatpush.bf16.msra.mxu0 0
      %2076 = vmatpush.bf16.msra.mxu0 0
      %2077 = vmatpush.bf16.msra.mxu0 %v2020
      %2078 = vmatmul.bf16.gmra.mxu0 %v2068
      %v2079 = vpop.f32.mrf.mxu0
      %v2080 = vadd.f32 0.0, %v2079
      %v2081 = vpop.f32.mrf.mxu0
      %2082 = vdwg.mxu0
      %v2083 = vld [vmem:[%s4 + $0x14] sm:$0x1]
      %v2084 = vperm.slane %v2083, 0
      %v2085 = vmul.f32 %v2080, %v2084
      %v2086 = vadd.f32 %v2064, %v2085
      %s2087 = scalar_lea.vmem %s7, 6
      %v2088 = vld [vmem:[%s2087] sm:$0x3]
      %v2090 = vsel %vm2022, %v2088, 0
      %2092 = vmatpush.bf16.msra.mxu0 0
      %2093 = vmatpush.bf16.msra.mxu0 0
      %2094 = vmatpush.bf16.msra.mxu0 0
      %2095 = vmatpush.bf16.msra.mxu0 0
      %2096 = vmatpush.bf16.msra.mxu0 0
      %2097 = vmatpush.bf16.msra.mxu0 0
      %2098 = vmatpush.bf16.msra.mxu0 0
      %2099 = vmatpush.bf16.msra.mxu0 %v2020
      %2100 = vmatmul.bf16.gmra.mxu0 %v2090
      %v2101 = vpop.f32.mrf.mxu0
      %v2102 = vadd.f32 0.0, %v2101
      %v2103 = vpop.f32.mrf.mxu0
      %2104 = vdwg.mxu0
      %v2105 = vld [vmem:[%s4 + $0x15] sm:$0x1]
      %v2106 = vperm.slane %v2105, 0
      %v2107 = vmul.f32 %v2102, %v2106
      %v2108 = vadd.f32 %v2086, %v2107
      %s2109 = scalar_lea.vmem %s7, 8
      %v2110 = vld [vmem:[%s2109] sm:$0x3]
      %v2112 = vsel %vm2022, %v2110, 0
      %2114 = vmatpush.bf16.msra.mxu0 0
      %2115 = vmatpush.bf16.msra.mxu0 0
      %2116 = vmatpush.bf16.msra.mxu0 0
      %2117 = vmatpush.bf16.msra.mxu0 0
      %2118 = vmatpush.bf16.msra.mxu0 0
      %2119 = vmatpush.bf16.msra.mxu0 0
      %2120 = vmatpush.bf16.msra.mxu0 0
      %2121 = vmatpush.bf16.msra.mxu0 %v2020
      %2122 = vmatmul.bf16.gmra.mxu0 %v2112
      %v2123 = vpop.f32.mrf.mxu0
      %v2124 = vadd.f32 0.0, %v2123
      %v2125 = vpop.f32.mrf.mxu0
      %2126 = vdwg.mxu0
      %v2127 = vld [vmem:[%s4 + $0x16] sm:$0x1]
      %v2128 = vperm.slane %v2127, 0
      %v2129 = vmul.f32 %v2124, %v2128
      %v2130 = vadd.f32 %v2108, %v2129
      %s2131 = scalar_lea.vmem %s7, 10
      %v2132 = vld [vmem:[%s2131] sm:$0x3]
      %v2134 = vsel %vm2022, %v2132, 0
      %2136 = vmatpush.bf16.msra.mxu0 0
      %2137 = vmatpush.bf16.msra.mxu0 0
      %2138 = vmatpush.bf16.msra.mxu0 0
      %2139 = vmatpush.bf16.msra.mxu0 0
      %2140 = vmatpush.bf16.msra.mxu0 0
      %2141 = vmatpush.bf16.msra.mxu0 0
      %2142 = vmatpush.bf16.msra.mxu0 0
      %2143 = vmatpush.bf16.msra.mxu0 %v2020
      %2144 = vmatmul.bf16.gmra.mxu0 %v2134
      %v2145 = vpop.f32.mrf.mxu0
      %v2146 = vadd.f32 0.0, %v2145
      %v2147 = vpop.f32.mrf.mxu0
      %2148 = vdwg.mxu0
      %v2149 = vld [vmem:[%s4 + $0x17] sm:$0x1]
      %v2150 = vperm.slane %v2149, 0
      %v2151 = vmul.f32 %v2146, %v2150
      %v2152 = vadd.f32 %v2130, %v2151
      %s2153 = scalar_lea.vmem %s7, 12
      %v2154 = vld [vmem:[%s2153] sm:$0x3]
      %v2156 = vsel %vm2022, %v2154, 0
      %2158 = vmatpush.bf16.msra.mxu0 0
      %2159 = vmatpush.bf16.msra.mxu0 0
      %2160 = vmatpush.bf16.msra.mxu0 0
      %2161 = vmatpush.bf16.msra.mxu0 0
      %2162 = vmatpush.bf16.msra.mxu0 0
      %2163 = vmatpush.bf16.msra.mxu0 0
      %2164 = vmatpush.bf16.msra.mxu0 0
      %2165 = vmatpush.bf16.msra.mxu0 %v2020
      %2166 = vmatmul.bf16.gmra.mxu0 %v2156
      %v2167 = vpop.f32.mrf.mxu0
      %v2168 = vadd.f32 0.0, %v2167
      %v2169 = vpop.f32.mrf.mxu0
      %2170 = vdwg.mxu0
      %v2171 = vld [vmem:[%s4 + $0x18] sm:$0x1]
      %v2172 = vperm.slane %v2171, 0
      %v2173 = vmul.f32 %v2168, %v2172
      %v2174 = vadd.f32 %v2152, %v2173
      %s2175 = scalar_lea.vmem %s7, 14
      %v2176 = vld [vmem:[%s2175] sm:$0x3]
      %v2178 = vsel %vm2022, %v2176, 0
      %2180 = vmatpush.bf16.msra.mxu0 0
      %2181 = vmatpush.bf16.msra.mxu0 0
      %2182 = vmatpush.bf16.msra.mxu0 0
      %2183 = vmatpush.bf16.msra.mxu0 0
      %2184 = vmatpush.bf16.msra.mxu0 0
      %2185 = vmatpush.bf16.msra.mxu0 0
      %2186 = vmatpush.bf16.msra.mxu0 0
      %2187 = vmatpush.bf16.msra.mxu0 %v2020
      %2188 = vmatmul.bf16.gmra.mxu0 %v2178
      %v2189 = vpop.f32.mrf.mxu0
      %v2190 = vadd.f32 0.0, %v2189
      %v2191 = vpop.f32.mrf.mxu0
      %2192 = vdwg.mxu0
      %v2193 = vld [vmem:[%s4 + $0x19] sm:$0x1]
      %v2194 = vperm.slane %v2193, 0
      %v2195 = vmul.f32 %v2190, %v2194
      %v2196 = vadd.f32 %v2174, %v2195
      %s2197 = scalar_lea.vmem %s7, 16
      %v2198 = vld [vmem:[%s2197] sm:$0x3]
      %v2200 = vsel %vm2022, %v2198, 0
      %2202 = vmatpush.bf16.msra.mxu0 0
      %2203 = vmatpush.bf16.msra.mxu0 0
      %2204 = vmatpush.bf16.msra.mxu0 0
      %2205 = vmatpush.bf16.msra.mxu0 0
      %2206 = vmatpush.bf16.msra.mxu0 0
      %2207 = vmatpush.bf16.msra.mxu0 0
      %2208 = vmatpush.bf16.msra.mxu0 0
      %2209 = vmatpush.bf16.msra.mxu0 %v2020
      %2210 = vmatmul.bf16.gmra.mxu0 %v2200
      %v2211 = vpop.f32.mrf.mxu0
      %v2212 = vadd.f32 0.0, %v2211
      %v2213 = vpop.f32.mrf.mxu0
      %2214 = vdwg.mxu0
      %v2215 = vld [vmem:[%s4 + $0x1a] sm:$0x1]
      %v2216 = vperm.slane %v2215, 0
      %v2217 = vmul.f32 %v2212, %v2216
      %v2218 = vadd.f32 %v2196, %v2217
      %s2219 = scalar_lea.vmem %s7, 18
      %v2220 = vld [vmem:[%s2219] sm:$0x3]
      %v2222 = vsel %vm2022, %v2220, 0
      %2224 = vmatpush.bf16.msra.mxu0 0
      %2225 = vmatpush.bf16.msra.mxu0 0
      %2226 = vmatpush.bf16.msra.mxu0 0
      %2227 = vmatpush.bf16.msra.mxu0 0
      %2228 = vmatpush.bf16.msra.mxu0 0
      %2229 = vmatpush.bf16.msra.mxu0 0
      %2230 = vmatpush.bf16.msra.mxu0 0
      %2231 = vmatpush.bf16.msra.mxu0 %v2020
      %2232 = vmatmul.bf16.gmra.mxu0 %v2222
      %v2233 = vpop.f32.mrf.mxu0
      %v2234 = vadd.f32 0.0, %v2233
      %v2235 = vpop.f32.mrf.mxu0
      %2236 = vdwg.mxu0
      %v2237 = vld [vmem:[%s4 + $0x1b] sm:$0x1]
      %v2238 = vperm.slane %v2237, 0
      %v2239 = vmul.f32 %v2234, %v2238
      %v2240 = vadd.f32 %v2218, %v2239
      %s2241 = scalar_lea.vmem %s7, 20
      %v2242 = vld [vmem:[%s2241] sm:$0x3]
      %v2244 = vsel %vm2022, %v2242, 0
      %2246 = vmatpush.bf16.msra.mxu0 0
      %2247 = vmatpush.bf16.msra.mxu0 0
      %2248 = vmatpush.bf16.msra.mxu0 0
      %2249 = vmatpush.bf16.msra.mxu0 0
      %2250 = vmatpush.bf16.msra.mxu0 0
      %2251 = vmatpush.bf16.msra.mxu0 0
      %2252 = vmatpush.bf16.msra.mxu0 0
      %2253 = vmatpush.bf16.msra.mxu0 %v2020
      %2254 = vmatmul.bf16.gmra.mxu0 %v2244
      %v2255 = vpop.f32.mrf.mxu0
      %v2256 = vadd.f32 0.0, %v2255
      %v2257 = vpop.f32.mrf.mxu0
      %2258 = vdwg.mxu0
      %v2259 = vld [vmem:[%s4 + $0x1c] sm:$0x1]
      %v2260 = vperm.slane %v2259, 0
      %v2261 = vmul.f32 %v2256, %v2260
      %v2262 = vadd.f32 %v2240, %v2261
      %s2263 = scalar_lea.vmem %s7, 22
      %v2264 = vld [vmem:[%s2263] sm:$0x3]
      %v2266 = vsel %vm2022, %v2264, 0
      %2268 = vmatpush.bf16.msra.mxu0 0
      %2269 = vmatpush.bf16.msra.mxu0 0
      %2270 = vmatpush.bf16.msra.mxu0 0
      %2271 = vmatpush.bf16.msra.mxu0 0
      %2272 = vmatpush.bf16.msra.mxu0 0
      %2273 = vmatpush.bf16.msra.mxu0 0
      %2274 = vmatpush.bf16.msra.mxu0 0
      %2275 = vmatpush.bf16.msra.mxu0 %v2020
      %2276 = vmatmul.bf16.gmra.mxu0 %v2266
      %v2277 = vpop.f32.mrf.mxu0
      %v2278 = vadd.f32 0.0, %v2277
      %v2279 = vpop.f32.mrf.mxu0
      %2280 = vdwg.mxu0
      %v2281 = vld [vmem:[%s4 + $0x1d] sm:$0x1]
      %v2282 = vperm.slane %v2281, 0
      %v2283 = vmul.f32 %v2278, %v2282
      %v2284 = vadd.f32 %v2262, %v2283
      %s2285 = scalar_lea.vmem %s7, 24
      %v2286 = vld [vmem:[%s2285] sm:$0x3]
      %v2288 = vsel %vm2022, %v2286, 0
      %2290 = vmatpush.bf16.msra.mxu0 0
      %2291 = vmatpush.bf16.msra.mxu0 0
      %2292 = vmatpush.bf16.msra.mxu0 0
      %2293 = vmatpush.bf16.msra.mxu0 0
      %2294 = vmatpush.bf16.msra.mxu0 0
      %2295 = vmatpush.bf16.msra.mxu0 0
      %2296 = vmatpush.bf16.msra.mxu0 0
      %2297 = vmatpush.bf16.msra.mxu0 %v2020
      %2298 = vmatmul.bf16.gmra.mxu0 %v2288
      %v2299 = vpop.f32.mrf.mxu0
      %v2300 = vadd.f32 0.0, %v2299
      %v2301 = vpop.f32.mrf.mxu0
      %2302 = vdwg.mxu0
      %v2303 = vld [vmem:[%s4 + $0x1e] sm:$0x1]
      %v2304 = vperm.slane %v2303, 0
      %v2305 = vmul.f32 %v2300, %v2304
      %v2306 = vadd.f32 %v2284, %v2305
      %s2307 = scalar_lea.vmem %s7, 26
      %v2308 = vld [vmem:[%s2307] sm:$0x3]
      %v2310 = vsel %vm2022, %v2308, 0
      %2312 = vmatpush.bf16.msra.mxu0 0
      %2313 = vmatpush.bf16.msra.mxu0 0
      %2314 = vmatpush.bf16.msra.mxu0 0
      %2315 = vmatpush.bf16.msra.mxu0 0
      %2316 = vmatpush.bf16.msra.mxu0 0
      %2317 = vmatpush.bf16.msra.mxu0 0
      %2318 = vmatpush.bf16.msra.mxu0 0
      %2319 = vmatpush.bf16.msra.mxu0 %v2020
      %2320 = vmatmul.bf16.gmra.mxu0 %v2310
      %v2321 = vpop.f32.mrf.mxu0
      %v2322 = vadd.f32 0.0, %v2321
      %v2323 = vpop.f32.mrf.mxu0
      %2324 = vdwg.mxu0
      %v2325 = vld [vmem:[%s4 + $0x1f] sm:$0x1]
      %v2326 = vperm.slane %v2325, 0
      %v2327 = vmul.f32 %v2322, %v2326
      %v2328 = vadd.f32 %v2306, %v2327
      %s2329 = scalar_lea.vmem %s7, 28
      %v2330 = vld [vmem:[%s2329] sm:$0x3]
      %v2332 = vsel %vm2022, %v2330, 0
      %2334 = vmatpush.bf16.msra.mxu0 0
      %2335 = vmatpush.bf16.msra.mxu0 0
      %2336 = vmatpush.bf16.msra.mxu0 0
      %2337 = vmatpush.bf16.msra.mxu0 0
      %2338 = vmatpush.bf16.msra.mxu0 0
      %2339 = vmatpush.bf16.msra.mxu0 0
      %2340 = vmatpush.bf16.msra.mxu0 0
      %2341 = vmatpush.bf16.msra.mxu0 %v2020
      %2342 = vmatmul.bf16.gmra.mxu0 %v2332
      %v2343 = vpop.f32.mrf.mxu0
      %v2344 = vadd.f32 0.0, %v2343
      %v2345 = vpop.f32.mrf.mxu0
      %2346 = vdwg.mxu0
      %v2347 = vld [vmem:[%s4 + $0x20] sm:$0x1]
      %v2348 = vperm.slane %v2347, 0
      %v2349 = vmul.f32 %v2344, %v2348
      %v2350 = vadd.f32 %v2328, %v2349
      %s2351 = scalar_lea.vmem %s7, 30
      %v2352 = vld [vmem:[%s2351] sm:$0x3]
      %v2354 = vsel %vm2022, %v2352, 0
      %2356 = vmatpush.bf16.msra.mxu0 0
      %2357 = vmatpush.bf16.msra.mxu0 0
      %2358 = vmatpush.bf16.msra.mxu0 0
      %2359 = vmatpush.bf16.msra.mxu0 0
      %2360 = vmatpush.bf16.msra.mxu0 0
      %2361 = vmatpush.bf16.msra.mxu0 0
      %2362 = vmatpush.bf16.msra.mxu0 0
      %2363 = vmatpush.bf16.msra.mxu0 %v2020
      %2364 = vmatmul.bf16.gmra.mxu0 %v2354
      %v2365 = vpop.f32.mrf.mxu0
      %v2366 = vadd.f32 0.0, %v2365
      %v2367 = vpop.f32.mrf.mxu0
      %2368 = vdwg.mxu0
      %v2369 = vld [vmem:[%s4 + $0x21] sm:$0x1]
      %v2370 = vperm.slane %v2369, 0
      %v2371 = vmul.f32 %v2366, %v2370
      %v2372 = vadd.f32 %v2350, %v2371
      %s2373 = scalar_lea.vmem %s7, 32
      %v2374 = vld [vmem:[%s2373] sm:$0x3]
      %v2376 = vsel %vm2022, %v2374, 0
      %2378 = vmatpush.bf16.msra.mxu0 0
      %2379 = vmatpush.bf16.msra.mxu0 0
      %2380 = vmatpush.bf16.msra.mxu0 0
      %2381 = vmatpush.bf16.msra.mxu0 0
      %2382 = vmatpush.bf16.msra.mxu0 0
      %2383 = vmatpush.bf16.msra.mxu0 0
      %2384 = vmatpush.bf16.msra.mxu0 0
      %2385 = vmatpush.bf16.msra.mxu0 %v2020
      %2386 = vmatmul.bf16.gmra.mxu0 %v2376
      %v2387 = vpop.f32.mrf.mxu0
      %v2388 = vadd.f32 0.0, %v2387
      %v2389 = vpop.f32.mrf.mxu0
      %2390 = vdwg.mxu0
      %v2391 = vld [vmem:[%s4 + $0x22] sm:$0x1]
      %v2392 = vperm.slane %v2391, 0
      %v2393 = vmul.f32 %v2388, %v2392
      %v2394 = vadd.f32 %v2372, %v2393
      %s2395 = scalar_lea.vmem %s7, 34
      %v2396 = vld [vmem:[%s2395] sm:$0x3]
      %v2398 = vsel %vm2022, %v2396, 0
      %2400 = vmatpush.bf16.msra.mxu0 0
      %2401 = vmatpush.bf16.msra.mxu0 0
      %2402 = vmatpush.bf16.msra.mxu0 0
      %2403 = vmatpush.bf16.msra.mxu0 0
      %2404 = vmatpush.bf16.msra.mxu0 0
      %2405 = vmatpush.bf16.msra.mxu0 0
      %2406 = vmatpush.bf16.msra.mxu0 0
      %2407 = vmatpush.bf16.msra.mxu0 %v2020
      %2408 = vmatmul.bf16.gmra.mxu0 %v2398
      %v2409 = vpop.f32.mrf.mxu0
      %v2410 = vadd.f32 0.0, %v2409
      %v2411 = vpop.f32.mrf.mxu0
      %2412 = vdwg.mxu0
      %v2413 = vld [vmem:[%s4 + $0x23] sm:$0x1]
      %v2414 = vperm.slane %v2413, 0
      %v2415 = vmul.f32 %v2410, %v2414
      %v2416 = vadd.f32 %v2394, %v2415
      %s2417 = scalar_lea.vmem %s7, 36
      %v2418 = vld [vmem:[%s2417] sm:$0x3]
      %v2420 = vsel %vm2022, %v2418, 0
      %2422 = vmatpush.bf16.msra.mxu0 0
      %2423 = vmatpush.bf16.msra.mxu0 0
      %2424 = vmatpush.bf16.msra.mxu0 0
      %2425 = vmatpush.bf16.msra.mxu0 0
      %2426 = vmatpush.bf16.msra.mxu0 0
      %2427 = vmatpush.bf16.msra.mxu0 0
      %2428 = vmatpush.bf16.msra.mxu0 0
      %2429 = vmatpush.bf16.msra.mxu0 %v2020
      %2430 = vmatmul.bf16.gmra.mxu0 %v2420
      %v2431 = vpop.f32.mrf.mxu0
      %v2432 = vadd.f32 0.0, %v2431
      %v2433 = vpop.f32.mrf.mxu0
      %2434 = vdwg.mxu0
      %v2435 = vld [vmem:[%s4 + $0x24] sm:$0x1]
      %v2436 = vperm.slane %v2435, 0
      %v2437 = vmul.f32 %v2432, %v2436
      %v2438 = vadd.f32 %v2416, %v2437
      %s2439 = scalar_lea.vmem %s7, 38
      %v2440 = vld [vmem:[%s2439] sm:$0x3]
      %v2442 = vsel %vm2022, %v2440, 0
      %2444 = vmatpush.bf16.msra.mxu0 0
      %2445 = vmatpush.bf16.msra.mxu0 0
      %2446 = vmatpush.bf16.msra.mxu0 0
      %2447 = vmatpush.bf16.msra.mxu0 0
      %2448 = vmatpush.bf16.msra.mxu0 0
      %2449 = vmatpush.bf16.msra.mxu0 0
      %2450 = vmatpush.bf16.msra.mxu0 0
      %2451 = vmatpush.bf16.msra.mxu0 %v2020
      %2452 = vmatmul.bf16.gmra.mxu0 %v2442
      %v2453 = vpop.f32.mrf.mxu0
      %v2454 = vadd.f32 0.0, %v2453
      %v2455 = vpop.f32.mrf.mxu0
      %2456 = vdwg.mxu0
      %v2457 = vld [vmem:[%s4 + $0x25] sm:$0x1]
      %v2458 = vperm.slane %v2457, 0
      %v2459 = vmul.f32 %v2454, %v2458
      %v2460 = vadd.f32 %v2438, %v2459
      %s2461 = scalar_lea.vmem %s7, 40
      %v2462 = vld [vmem:[%s2461] sm:$0x3]
      %v2464 = vsel %vm2022, %v2462, 0
      %2466 = vmatpush.bf16.msra.mxu0 0
      %2467 = vmatpush.bf16.msra.mxu0 0
      %2468 = vmatpush.bf16.msra.mxu0 0
      %2469 = vmatpush.bf16.msra.mxu0 0
      %2470 = vmatpush.bf16.msra.mxu0 0
      %2471 = vmatpush.bf16.msra.mxu0 0
      %2472 = vmatpush.bf16.msra.mxu0 0
      %2473 = vmatpush.bf16.msra.mxu0 %v2020
      %2474 = vmatmul.bf16.gmra.mxu0 %v2464
      %v2475 = vpop.f32.mrf.mxu0
      %v2476 = vadd.f32 0.0, %v2475
      %v2477 = vpop.f32.mrf.mxu0
      %2478 = vdwg.mxu0
      %v2479 = vld [vmem:[%s4 + $0x26] sm:$0x1]
      %v2480 = vperm.slane %v2479, 0
      %v2481 = vmul.f32 %v2476, %v2480
      %v2482 = vadd.f32 %v2460, %v2481
      %s2483 = scalar_lea.vmem %s7, 42
      %v2484 = vld [vmem:[%s2483] sm:$0x3]
      %v2486 = vsel %vm2022, %v2484, 0
      %2488 = vmatpush.bf16.msra.mxu0 0
      %2489 = vmatpush.bf16.msra.mxu0 0
      %2490 = vmatpush.bf16.msra.mxu0 0
      %2491 = vmatpush.bf16.msra.mxu0 0
      %2492 = vmatpush.bf16.msra.mxu0 0
      %2493 = vmatpush.bf16.msra.mxu0 0
      %2494 = vmatpush.bf16.msra.mxu0 0
      %2495 = vmatpush.bf16.msra.mxu0 %v2020
      %2496 = vmatmul.bf16.gmra.mxu0 %v2486
      %v2497 = vpop.f32.mrf.mxu0
      %v2498 = vadd.f32 0.0, %v2497
      %v2499 = vpop.f32.mrf.mxu0
      %2500 = vdwg.mxu0
      %v2501 = vld [vmem:[%s4 + $0x27] sm:$0x1]
      %v2502 = vperm.slane %v2501, 0
      %v2503 = vmul.f32 %v2498, %v2502
      %v2504 = vadd.f32 %v2482, %v2503
      %s2505 = scalar_lea.vmem %s7, 44
      %v2506 = vld [vmem:[%s2505] sm:$0x3]
      %v2508 = vsel %vm2022, %v2506, 0
      %2510 = vmatpush.bf16.msra.mxu0 0
      %2511 = vmatpush.bf16.msra.mxu0 0
      %2512 = vmatpush.bf16.msra.mxu0 0
      %2513 = vmatpush.bf16.msra.mxu0 0
      %2514 = vmatpush.bf16.msra.mxu0 0
      %2515 = vmatpush.bf16.msra.mxu0 0
      %2516 = vmatpush.bf16.msra.mxu0 0
      %2517 = vmatpush.bf16.msra.mxu0 %v2020
      %2518 = vmatmul.bf16.gmra.mxu0 %v2508
      %v2519 = vpop.f32.mrf.mxu0
      %v2520 = vadd.f32 0.0, %v2519
      %v2521 = vpop.f32.mrf.mxu0
      %2522 = vdwg.mxu0
      %v2523 = vld [vmem:[%s4 + $0x28] sm:$0x1]
      %v2524 = vperm.slane %v2523, 0
      %v2525 = vmul.f32 %v2520, %v2524
      %v2526 = vadd.f32 %v2504, %v2525
      %s2527 = scalar_lea.vmem %s7, 46
      %v2528 = vld [vmem:[%s2527] sm:$0x3]
      %v2530 = vsel %vm2022, %v2528, 0
      %2532 = vmatpush.bf16.msra.mxu0 0
      %2533 = vmatpush.bf16.msra.mxu0 0
      %2534 = vmatpush.bf16.msra.mxu0 0
      %2535 = vmatpush.bf16.msra.mxu0 0
      %2536 = vmatpush.bf16.msra.mxu0 0
      %2537 = vmatpush.bf16.msra.mxu0 0
      %2538 = vmatpush.bf16.msra.mxu0 0
      %2539 = vmatpush.bf16.msra.mxu0 %v2020
      %2540 = vmatmul.bf16.gmra.mxu0 %v2530
      %v2541 = vpop.f32.mrf.mxu0
      %v2542 = vadd.f32 0.0, %v2541
      %v2543 = vpop.f32.mrf.mxu0
      %2544 = vdwg.mxu0
      %v2545 = vld [vmem:[%s4 + $0x29] sm:$0x1]
      %v2546 = vperm.slane %v2545, 0
      %v2547 = vmul.f32 %v2542, %v2546
      %v2548 = vadd.f32 %v2526, %v2547
      %s2549 = scalar_lea.vmem %s7, 48
      %v2550 = vld [vmem:[%s2549] sm:$0x3]
      %v2552 = vsel %vm2022, %v2550, 0
      %2554 = vmatpush.bf16.msra.mxu0 0
      %2555 = vmatpush.bf16.msra.mxu0 0
      %2556 = vmatpush.bf16.msra.mxu0 0
      %2557 = vmatpush.bf16.msra.mxu0 0
      %2558 = vmatpush.bf16.msra.mxu0 0
      %2559 = vmatpush.bf16.msra.mxu0 0
      %2560 = vmatpush.bf16.msra.mxu0 0
      %2561 = vmatpush.bf16.msra.mxu0 %v2020
      %2562 = vmatmul.bf16.gmra.mxu0 %v2552
      %v2563 = vpop.f32.mrf.mxu0
      %v2564 = vadd.f32 0.0, %v2563
      %v2565 = vpop.f32.mrf.mxu0
      %2566 = vdwg.mxu0
      %v2567 = vld [vmem:[%s4 + $0x2a] sm:$0x1]
      %v2568 = vperm.slane %v2567, 0
      %v2569 = vmul.f32 %v2564, %v2568
      %v2570 = vadd.f32 %v2548, %v2569
      %v2571 = vld [vmem:[%s3 + $0x7] sm:$0x1]
      %v2572 = vperm.slane %v2571, 0
      %v2573 = vadd.f32 %v2570, %v2572
      %v2574 = vmax.f32 %v2573, 0.0
      %vm2575 = vcmask 1043456
      %v2576 = vsel %vm2575, %v2574, 0.0
      %v2577 = vrot.slane %v2576, 4
      %v2578 = vadd.f32 %v2576, %v2577
      %v2579 = vrot.slane %v2578, 2
      %v2580 = vadd.f32 %v2578, %v2579
      %v2581 = vrot.slane %v2580, 1
      %v2582 = vadd.f32 %v2580, %v2581
      %v2583 = vrcp.pop 4.0
      %v2584 = vmul.f32 4.0, %v2583
      %v2585 = vsub.f32 1.0, %v2584
      %v2586 = vmul.f32 %v2583, %v2585
      %v2587 = vadd.f32 %v2583, %v2586
      %vm2588 = vweird.f32 %v2583
      %v2589 = vsel %vm2588, %v2583, %v2587
      %v2590 = vmul.f32 %v2582, %v2589
      %v2591 = vpack.c.bf16 %v2590, %v2590
      %s2592 = scalar_lea.vmem %s2, 256
      %v2593 = vld [vmem:[%s2592] sm:$0xf]
      %v2594 = vld [vmem:[%s2592 + $0x4] sm:$0xf]
      %v2595 = vld [vmem:[%s2592 + $0x8] sm:$0xf]
      %v2596 = vld [vmem:[%s2592 + $0xc] sm:$0xf]
      %v2597 = vld [vmem:[%s2592 + $0x10] sm:$0xf]
      %v2598 = vld [vmem:[%s2592 + $0x14] sm:$0xf]
      %v2599 = vld [vmem:[%s2592 + $0x18] sm:$0xf]
      %v2600 = vld [vmem:[%s2592 + $0x1c] sm:$0xf]
      %v2601 = vld [vmem:[%s2592 + $0x20] sm:$0xf]
      %v2602 = vld [vmem:[%s2592 + $0x24] sm:$0xf]
      %v2603 = vld [vmem:[%s2592 + $0x28] sm:$0xf]
      %v2604 = vld [vmem:[%s2592 + $0x2c] sm:$0xf]
      %v2605 = vld [vmem:[%s2592 + $0x30] sm:$0xf]
      %v2606 = vld [vmem:[%s2592 + $0x34] sm:$0xf]
      %v2607 = vld [vmem:[%s2592 + $0x38] sm:$0xf]
      %v2608 = vld [vmem:[%s2592 + $0x3c] sm:$0xf]
      %v2609 = vld [vmem:[%s3 + $0x8] sm:$0x1]
      %v2626 = vunpack.c.l.b16 %v2593
      %v2627 = vunpack.c.l.b16 %v2594
      %v2628 = vunpack.c.l.b16 %v2595
      %v2629 = vunpack.c.l.b16 %v2596
      %v2630 = vunpack.c.l.b16 %v2597
      %v2631 = vunpack.c.l.b16 %v2598
      %v2632 = vunpack.c.l.b16 %v2599
      %v2633 = vunpack.c.l.b16 %v2600
      %v2634 = vunpack.c.l.b16 %v2601
      %v2635 = vunpack.c.l.b16 %v2602
      %v2636 = vunpack.c.l.b16 %v2603
      %v2637 = vunpack.c.l.b16 %v2604
      %v2638 = vunpack.c.l.b16 %v2605
      %v2639 = vunpack.c.l.b16 %v2606
      %v2640 = vunpack.c.l.b16 %v2607
      %v2641 = vunpack.c.l.b16 %v2608
      %v2642 = vpack.c.b16 %v2627, %v2626
      %v2643 = vpack.c.b16 %v2629, %v2628
      %v2644 = vpack.c.b16 %v2631, %v2630
      %v2645 = vpack.c.b16 %v2633, %v2632
      %v2646 = vpack.c.b16 %v2635, %v2634
      %v2647 = vpack.c.b16 %v2637, %v2636
      %v2648 = vpack.c.b16 %v2639, %v2638
      %v2649 = vpack.c.b16 %v2641, %v2640
      %2658 = vmatpush.bf16.msra.mxu0 %v2649
      %2659 = vmatpush.bf16.msra.mxu0 %v2648
      %2660 = vmatpush.bf16.msra.mxu0 %v2647
      %2661 = vmatpush.bf16.msra.mxu0 %v2646
      %2662 = vmatpush.bf16.msra.mxu0 %v2645
      %2663 = vmatpush.bf16.msra.mxu0 %v2644
      %2664 = vmatpush.bf16.msra.mxu0 %v2643
      %2665 = vmatpush.bf16.msra.mxu0 %v2642
      %2666 = vmatmul.bf16.gmra.mxu0 %v2591
      %v2667 = vpop.f32.mrf.mxu0
      %v2668 = vadd.f32 %v2609, %v2667
      %v2669 = vpop.f32.mrf.mxu0
      %2670 = vdwg.mxu0
      %v2671 = vmax.f32 %v2668, 0.0
      %v2672 = vpack.c.bf16 %v2671, %v2671
      %s2673 = scalar_lea.vmem %s2, 320
      %v2674 = vld [vmem:[%s2673] sm:$0xf]
      %v2675 = vld [vmem:[%s2673 + $0x4] sm:$0xf]
      %v2676 = vld [vmem:[%s2673 + $0x8] sm:$0xf]
      %v2677 = vld [vmem:[%s2673 + $0xc] sm:$0xf]
      %v2678 = vld [vmem:[%s2673 + $0x10] sm:$0xf]
      %v2679 = vld [vmem:[%s2673 + $0x14] sm:$0xf]
      %v2680 = vld [vmem:[%s2673 + $0x18] sm:$0xf]
      %v2681 = vld [vmem:[%s2673 + $0x1c] sm:$0xf]
      %v2682 = vld [vmem:[%s2673 + $0x20] sm:$0xf]
      %v2683 = vld [vmem:[%s2673 + $0x24] sm:$0xf]
      %v2684 = vld [vmem:[%s2673 + $0x28] sm:$0xf]
      %v2685 = vld [vmem:[%s2673 + $0x2c] sm:$0xf]
      %v2686 = vld [vmem:[%s2673 + $0x30] sm:$0xf]
      %v2687 = vld [vmem:[%s2673 + $0x34] sm:$0xf]
      %v2688 = vld [vmem:[%s2673 + $0x38] sm:$0xf]
      %v2689 = vld [vmem:[%s2673 + $0x3c] sm:$0xf]
      %v2690 = vld [vmem:[%s3 + $0x9] sm:$0x1]
      %v2707 = vunpack.c.l.b16 %v2674
      %v2708 = vunpack.c.l.b16 %v2675
      %v2709 = vunpack.c.l.b16 %v2676
      %v2710 = vunpack.c.l.b16 %v2677
      %v2711 = vunpack.c.l.b16 %v2678
      %v2712 = vunpack.c.l.b16 %v2679
      %v2713 = vunpack.c.l.b16 %v2680
      %v2714 = vunpack.c.l.b16 %v2681
      %v2715 = vunpack.c.l.b16 %v2682
      %v2716 = vunpack.c.l.b16 %v2683
      %v2717 = vunpack.c.l.b16 %v2684
      %v2718 = vunpack.c.l.b16 %v2685
      %v2719 = vunpack.c.l.b16 %v2686
      %v2720 = vunpack.c.l.b16 %v2687
      %v2721 = vunpack.c.l.b16 %v2688
      %v2722 = vunpack.c.l.b16 %v2689
      %v2723 = vpack.c.b16 %v2708, %v2707
      %v2724 = vpack.c.b16 %v2710, %v2709
      %v2725 = vpack.c.b16 %v2712, %v2711
      %v2726 = vpack.c.b16 %v2714, %v2713
      %v2727 = vpack.c.b16 %v2716, %v2715
      %v2728 = vpack.c.b16 %v2718, %v2717
      %v2729 = vpack.c.b16 %v2720, %v2719
      %v2730 = vpack.c.b16 %v2722, %v2721
      %2739 = vmatpush.bf16.msra.mxu0 %v2730
      %2740 = vmatpush.bf16.msra.mxu0 %v2729
      %2741 = vmatpush.bf16.msra.mxu0 %v2728
      %2742 = vmatpush.bf16.msra.mxu0 %v2727
      %2743 = vmatpush.bf16.msra.mxu0 %v2726
      %2744 = vmatpush.bf16.msra.mxu0 %v2725
      %2745 = vmatpush.bf16.msra.mxu0 %v2724
      %2746 = vmatpush.bf16.msra.mxu0 %v2723
      %2747 = vmatmul.bf16.gmra.mxu0 %v2672
      %v2748 = vpop.f32.mrf.mxu0
      %v2749 = vadd.f32 %v2690, %v2748
      %v2750 = vpop.f32.mrf.mxu0
      %2751 = vdwg.mxu0
      %v2752 = vrcp.pop 6.0
      %v2753 = vmul.f32 6.0, %v2752
      %v2754 = vsub.f32 1.0, %v2753
      %v2755 = vmul.f32 %v2752, %v2754
      %v2756 = vadd.f32 %v2752, %v2755
      %vm2757 = vweird.f32 %v2752
      %v2758 = vsel %vm2757, %v2752, %v2756
      %v2759 = vmul.f32 %v2749, %v2758
      %v2760 = vadd.f32 %v2759, 0.5
      %v2761 = vmax.f32 %v2760, 0.0
      %v2762 = vmin.f32 %v2761, 1.0
      %v2763 = vperm.slane %v2762, 0
      %v2764 = vmul.f32 %v2574, %v2763
      %v2765 = vpack.c.bf16 %v2764, %v2764
      %s2766 = scalar_lea.vmem %s2, 384
      %v2767 = vld [vmem:[%s2766] sm:$0xf]
      %v2768 = vld [vmem:[%s2766 + $0x4] sm:$0xf]
      %v2769 = vld [vmem:[%s2766 + $0x8] sm:$0xf]
      %v2770 = vld [vmem:[%s2766 + $0xc] sm:$0xf]
      %v2771 = vld [vmem:[%s2766 + $0x10] sm:$0xf]
      %v2772 = vld [vmem:[%s2766 + $0x14] sm:$0xf]
      %v2773 = vld [vmem:[%s2766 + $0x18] sm:$0xf]
      %v2774 = vld [vmem:[%s2766 + $0x1c] sm:$0xf]
      %v2775 = vld [vmem:[%s2766 + $0x20] sm:$0xf]
      %v2776 = vld [vmem:[%s2766 + $0x24] sm:$0xf]
      %v2777 = vld [vmem:[%s2766 + $0x28] sm:$0xf]
      %v2778 = vld [vmem:[%s2766 + $0x2c] sm:$0xf]
      %v2779 = vld [vmem:[%s2766 + $0x30] sm:$0xf]
      %v2780 = vld [vmem:[%s2766 + $0x34] sm:$0xf]
      %v2781 = vld [vmem:[%s2766 + $0x38] sm:$0xf]
      %v2782 = vld [vmem:[%s2766 + $0x3c] sm:$0xf]
      %v2783 = vld [vmem:[%s3 + $0xa] sm:$0x1]
      %v2784 = vperm.slane %v2783, 0
      %v2801 = vunpack.c.l.b16 %v2767
      %v2802 = vunpack.c.l.b16 %v2768
      %v2803 = vunpack.c.l.b16 %v2769
      %v2804 = vunpack.c.l.b16 %v2770
      %v2805 = vunpack.c.l.b16 %v2771
      %v2806 = vunpack.c.l.b16 %v2772
      %v2807 = vunpack.c.l.b16 %v2773
      %v2808 = vunpack.c.l.b16 %v2774
      %v2809 = vunpack.c.l.b16 %v2775
      %v2810 = vunpack.c.l.b16 %v2776
      %v2811 = vunpack.c.l.b16 %v2777
      %v2812 = vunpack.c.l.b16 %v2778
      %v2813 = vunpack.c.l.b16 %v2779
      %v2814 = vunpack.c.l.b16 %v2780
      %v2815 = vunpack.c.l.b16 %v2781
      %v2816 = vunpack.c.l.b16 %v2782
      %v2817 = vpack.c.b16 %v2802, %v2801
      %v2818 = vpack.c.b16 %v2804, %v2803
      %v2819 = vpack.c.b16 %v2806, %v2805
      %v2820 = vpack.c.b16 %v2808, %v2807
      %v2821 = vpack.c.b16 %v2810, %v2809
      %v2822 = vpack.c.b16 %v2812, %v2811
      %v2823 = vpack.c.b16 %v2814, %v2813
      %v2824 = vpack.c.b16 %v2816, %v2815
      %2833 = vmatpush.bf16.msra.mxu0 %v2824
      %2834 = vmatpush.bf16.msra.mxu0 %v2823
      %2835 = vmatpush.bf16.msra.mxu0 %v2822
      %2836 = vmatpush.bf16.msra.mxu0 %v2821
      %2837 = vmatpush.bf16.msra.mxu0 %v2820
      %2838 = vmatpush.bf16.msra.mxu0 %v2819
      %2839 = vmatpush.bf16.msra.mxu0 %v2818
      %2840 = vmatpush.bf16.msra.mxu0 %v2817
      %2841 = vmatmul.bf16.gmra.mxu0 %v2765
      %v2842 = vpop.f32.mrf.mxu0
      %v2843 = vadd.f32 %v2784, %v2842
      %v2844 = vpop.f32.mrf.mxu0
      %2845 = vdwg.mxu0
      %2846 = vst [vmem:[%s421] sm:$0xf] %v2843
      %p2847 = scmp.lt.s32.totalorder %s23, 1
      %s2848 = scalar_select %p2847, %s23, 1
      %s2849 = smul.addr %s2848, 8
      %s2850 = smul.addr %s2849, 8
      %s2851 = scalar_lea.vmem %s8, %s2850
      %p2852 = scmp.lt.s32.totalorder %s23, 1
      %s2853 = scalar_select %p2852, %s23, 1
      %s2854 = smul.addr %s2853, 8
      %s2855 = smul.addr %s2854, 8
      %s2856 = scalar_lea.vmem %s9, %s2855
      %p2857 = scmp.lt.s32.totalorder %s23, 1
      %s2858 = scalar_select %p2857, %s23, 1
      %s2859 = smul.addr %s2858, 2
      %s2860 = smul.addr %s2859, 8
      %s2861 = scalar_lea.vmem %s10, %s2860
      %p2862 = scmp.lt.s32.totalorder %s23, 1
      %s2863 = scalar_select %p2862, %s23, 1
      %s2864 = smul.addr %s2863, 4
      %s2865 = scalar_lea.vmem %s11, %s2864
      // Predicated region
      $region53: #{mobilenetv3_features.1} parent=51 // pred_check
        %p2866 = pneg %p214
      $region54: #{mobilenetv3_features.1} parent=51 // pred_check_branch
        %2868 = sbr.rel (%p2866) target = $region56
      $region55: #{mobilenetv3_features.1} parent=51 // pred_region
        _
      $region56: #{mobilenetv3_features.1} parent=51 // pred_fallthru
        _
      // Predicated region
      $region57: #{mobilenetv3_features.1} parent=51 // pred_check
        %p2869 = pneg %p240
      $region58: #{mobilenetv3_features.1} parent=51 // pred_check_branch
        %2871 = sbr.rel (%p2869) target = $region60
      $region59: #{mobilenetv3_features.1} parent=51 // pred_region
        _
      $region60: #{mobilenetv3_features.1} parent=51 // pred_fallthru
        _
      // Predicated region
      $region61: #{mobilenetv3_features.1} parent=51 // pred_check
        %p2872 = pneg %p266
      $region62: #{mobilenetv3_features.1} parent=51 // pred_check_branch
        %2874 = sbr.rel (%p2872) target = $region64
      $region63: #{mobilenetv3_features.1} parent=51 // pred_region
        _
      $region64: #{mobilenetv3_features.1} parent=51 // pred_fallthru
        _
      // Predicated region
      $region65: #{mobilenetv3_features.1} parent=51 // pred_check
        %p2875 = pneg %p292
      $region66: #{mobilenetv3_features.1} parent=51 // pred_check_branch
        %2877 = sbr.rel (%p2875) target = $region68
      $region67: #{mobilenetv3_features.1} parent=51 // pred_region
        _
      $region68: #{mobilenetv3_features.1} parent=51 // pred_fallthru
        _
    $region52: #{mobilenetv3_features.1} parent=5 // pred_fallthru
      _
    %p2878 = scmp.le.s32.totalorder 2, %s18
    // Predicated region
    $region69: #{mobilenetv3_features.1} parent=5 // pred_check
      %p2879 = pneg %p2878
    $region70: #{mobilenetv3_features.1} parent=5 // pred_check_branch
      %2881 = sbr.rel (%p2879) target = $region72
    $region71: #{mobilenetv3_features.1} parent=5 // pred_region
      %s2882 = ssub.s32 %s18, 2
      // Predicated region
      $region73: #{mobilenetv3_features.1} parent=71 // pred_check
        %p2883 = pneg %p220
      $region74: #{mobilenetv3_features.1} parent=71 // pred_check_branch
        %2885 = sbr.rel (%p2883) target = $region76
      $region75: #{mobilenetv3_features.1} parent=71 // pred_region
        %p2886 = scmp.lt.s32.totalorder %s24, 1
        %s2887 = scalar_select %p2886, %s24, 1
        %s2888 = smul.addr %s2887, 8
        %s2889 = smul.addr %s2888, 8
        %s2890 = scalar_lea.vmem %s8, %s2889
      $region76: #{mobilenetv3_features.1} parent=71 // pred_fallthru
        _
      // Predicated region
      $region77: #{mobilenetv3_features.1} parent=71 // pred_check
        %p2891 = pneg %p246
      $region78: #{mobilenetv3_features.1} parent=71 // pred_check_branch
        %2893 = sbr.rel (%p2891) target = $region80
      $region79: #{mobilenetv3_features.1} parent=71 // pred_region
        %p2894 = scmp.lt.s32.totalorder %s24, 1
        %s2895 = scalar_select %p2894, %s24, 1
        %s2896 = smul.addr %s2895, 8
        %s2897 = smul.addr %s2896, 8
        %s2898 = scalar_lea.vmem %s9, %s2897
      $region80: #{mobilenetv3_features.1} parent=71 // pred_fallthru
        _
      // Predicated region
      $region81: #{mobilenetv3_features.1} parent=71 // pred_check
        %p2899 = pneg %p272
      $region82: #{mobilenetv3_features.1} parent=71 // pred_check_branch
        %2901 = sbr.rel (%p2899) target = $region84
      $region83: #{mobilenetv3_features.1} parent=71 // pred_region
        %p2902 = scmp.lt.s32.totalorder %s24, 1
        %s2903 = scalar_select %p2902, %s24, 1
        %s2904 = smul.addr %s2903, 2
        %s2905 = smul.addr %s2904, 8
        %s2906 = scalar_lea.vmem %s10, %s2905
      $region84: #{mobilenetv3_features.1} parent=71 // pred_fallthru
        _
      // Predicated region
      $region85: #{mobilenetv3_features.1} parent=71 // pred_check
        %p2907 = pneg %p298
      $region86: #{mobilenetv3_features.1} parent=71 // pred_check_branch
        %2909 = sbr.rel (%p2907) target = $region88
      $region87: #{mobilenetv3_features.1} parent=71 // pred_region
        %p2910 = scmp.lt.s32.totalorder %s24, 1
        %s2911 = scalar_select %p2910, %s24, 1
        %s2912 = smul.addr %s2911, 4
        %s2913 = scalar_lea.vmem %s11, %s2912
      $region88: #{mobilenetv3_features.1} parent=71 // pred_fallthru
        _
    $region72: #{mobilenetv3_features.1} parent=5 // pred_fallthru
      _
  $region6: #{mobilenetv3_features.1} parent=0 // loop_footer
    %s22 = sadd.s32 1, %s18
  $region7: #{mobilenetv3_features.1} parent=0 // loop_footer_branch
    %17 = sbr.rel target = $region3
  $region8: #{mobilenetv3_features.1} parent=0 // loop_exit
    _

</llo_original>
